<compile_context>
chip_gen: v7x
topology: tpu7x:2x2x1
jax: 0.10.0
libtpu: 0.0.40
codegen_flags: <defaults>
</compile_context>

<pallas_src>
import jax
import jax.numpy as jnp
from jax.experimental import pallas as pl
from jax.experimental.pallas import tpu as pltpu


# ----------------------------------------------------------------------------
# Fused Pallas kernel: embedding gather + 2-layer bidirectional GRU + fc + sigmoid
# ----------------------------------------------------------------------------
def fused_bigru_kernel(tok_ref,                       # SMEM (B*T,) int32, row-major [b, t]
                       emb_ref,                       # (VOCAB, E) f32 (VMEM; small vocab)
                       wih0_ref, whh0_ref,            # (E, 6H), (2H, 6H) block-diag
                       bgi0_ref, bhn0_ref,            # (1, 6H), (1, 2H)
                       wih1_ref, whh1_ref,            # (2H, 6H), (2H, 6H) block-diag
                       bgi1_ref, bhn1_ref,            # (1, 6H), (1, 2H)
                       h0_ref,                        # (4, Bp, H)  [l0_f, l0_r, l1_f, l1_r]
                       fcw_ref, fcb_ref,              # (1, 2H), (1, 1)
                       out_ref,                       # (Bp, 1)
                       hn_ref,                        # (4, Bp, H)
                       xbuf,                          # scratch (T*Bp, E)
                       gibuf,                         # scratch (T*Bp, 6H) (reused by both layers)
                       yf_buf, yr_buf):               # scratch (T*Bp, H) each
    Bp = h0_ref.shape[1]
    H = h0_ref.shape[2]
    T = yf_buf.shape[0] // Bp
    B = tok_ref.shape[0] // T
    H2, H3, H5 = 2 * H, 3 * H, 5 * H

    # ---- in-kernel embedding gather -> time-major, batch-padded input -------
    xbuf[...] = jnp.zeros_like(xbuf)
    for t in range(T):
        for b in range(B):
            tok = tok_ref[b * T + t]                             # scalar from SMEM
            row = emb_ref[pl.ds(tok, 1), :]                      # (1, E) dynamic row
            xbuf[pl.ds(t * Bp + b, 1), :] = row

    def run_layer(gi_ref, whh, bhn_f, bhn_r, hf0, hr0,
                  yf=None, yr=None, want_first_rev=False):
        """One bidirectional GRU layer. State packed [h_f | h_r]; one matmul/step."""
        h_f, h_r = hf0, hr0
        yr_first = None
        for i in range(T):                                       # fully unrolled (T static, small)
            t = i
            tr = T - 1 - i
            h = jnp.concatenate([h_f, h_r], axis=-1)             # (Bp, 2H)
            gh = jnp.dot(h, whh, preferred_element_type=jnp.float32)   # (Bp, 6H)
            gif = gi_ref[t * Bp:(t + 1) * Bp, :]                 # forward gates in cols [:3H]
            gir = gi_ref[tr * Bp:(tr + 1) * Bp, :]               # reverse gates in cols [3H:]
            # merged r/z sigmoid per direction (one 2H-lane activation each)
            rz_f = jax.nn.sigmoid(gif[:, :H2] + gh[:, :H2])
            rz_r = jax.nn.sigmoid(gir[:, H3:H5] + gh[:, H3:H5])
            n_f = jnp.tanh(gif[:, H2:H3] + rz_f[:, :H] * (gh[:, H2:H3] + bhn_f))
            n_r = jnp.tanh(gir[:, H5:] + rz_r[:, :H] * (gh[:, H5:] + bhn_r))
            z_f = rz_f[:, H:]
            z_r = rz_r[:, H:]
            h_f = (1.0 - z_f) * n_f + z_f * h_f
            h_r = (1.0 - z_r) * n_r + z_r * h_r
            if yf is not None:                                   # layer 0: stream outputs to VMEM
                yf[t * Bp:(t + 1) * Bp, :] = h_f
                yr[tr * Bp:(tr + 1) * Bp, :] = h_r
            if want_first_rev and i == 0:                        # layer 1: reverse output at t=T-1
                yr_first = h_r
        return h_f, h_r, yr_first

    # ---- layer 0 ------------------------------------------------------------
    gibuf[...] = (jnp.dot(xbuf[...], wih0_ref[...], preferred_element_type=jnp.float32)
                  + bgi0_ref[...])
    bhn0 = bhn0_ref[...]
    h0f, h0r, _ = run_layer(gibuf, whh0_ref[...], bhn0[:, :H], bhn0[:, H:],
                            h0_ref[0], h0_ref[1], yf_buf, yr_buf)
    hn_ref[0] = h0f
    hn_ref[1] = h0r

    # TODO(synk): inter-layer GRU dropout and output dropout (p=0.3) are train-only; eval => identity.

    # ---- layer 1 (input projection from split wih1: no [Yf|Yr] lane concat) --
    wih1 = wih1_ref[...]
    gibuf[...] = (jnp.dot(yf_buf[...], wih1[:H, :], preferred_element_type=jnp.float32)
                  + jnp.dot(yr_buf[...], wih1[H:, :], preferred_element_type=jnp.float32)
                  + bgi1_ref[...])
    bhn1 = bhn1_ref[...]
    h1f, h1r, y1r_last = run_layer(gibuf, whh1_ref[...], bhn1[:, :H], bhn1[:, H:],
                                   h0_ref[2], h0_ref[3], want_first_rev=True)
    hn_ref[2] = h1f
    hn_ref[3] = h1r

    # ---- fc + sigmoid on last time step only (VPU lane reduction; y1 never built)
    fcw = fcw_ref[...]
    logits = (jnp.sum(h1f * fcw[:, :H] + y1r_last * fcw[:, H:], axis=-1, keepdims=True)
              + fcb_ref[...])
    out_ref[...] = jax.nn.sigmoid(logits)


# ----------------------------------------------------------------------------
# Parameter preparation (done once, not per forward call)
# ----------------------------------------------------------------------------
def prepare_kernel_params(params, hidden_dim, n_layers=2):
    """Pack weights: wih (Din, 6H) [fwd|rev], whh block-diag (2H, 6H), combined biases."""
    H = hidden_dim
    kp = {
        'embedding': params['embedding'].astype(jnp.float32),
        'fc_w': params['fc_w'].reshape(1, 2 * H).astype(jnp.float32),
        'fc_b': params['fc_b'].reshape(1, 1).astype(jnp.float32),
    }
    for l in range(n_layers):
        wf = jnp.transpose(params[f'weight_ih_l{l}'])             # (Din, 3H)
        wr = jnp.transpose(params[f'weight_ih_l{l}_reverse'])     # (Din, 3H)
        kp[f'wih{l}'] = jnp.concatenate([wf, wr], axis=1).astype(jnp.float32)   # (Din, 6H)

        hf = jnp.transpose(params[f'weight_hh_l{l}'])             # (H, 3H)
        hr = jnp.transpose(params[f'weight_hh_l{l}_reverse'])     # (H, 3H)
        bd = jnp.zeros((2 * H, 6 * H), jnp.float32)
        bd = bd.at[:H, :3 * H].set(hf).at[H:, 3 * H:].set(hr)     # block-diagonal
        kp[f'whh{l}'] = bd                                        # (2H, 6H)

        def _bgi(sfx):
            bih = params[f'bias_ih_{sfx}']
            bhh = params[f'bias_hh_{sfx}']
            # r/z gate biases combined; n gate keeps b_ih_n here, b_hh_n applied inside r*()
            return jnp.concatenate([bih[:2 * H] + bhh[:2 * H], bih[2 * H:]])

        kp[f'bgi{l}'] = jnp.concatenate(
            [_bgi(f'l{l}'), _bgi(f'l{l}_reverse')])[None, :].astype(jnp.float32)        # (1, 6H)
        kp[f'bhn{l}'] = jnp.concatenate(
            [params[f'bias_hh_l{l}'][2 * H:],
             params[f'bias_hh_l{l}_reverse'][2 * H:]])[None, :].astype(jnp.float32)     # (1, 2H)
    return kp


# ----------------------------------------------------------------------------
# Forward wrapper (equivalent of MyNet_NoAttention.forward, eval mode)
# ----------------------------------------------------------------------------
def forward(x_tokens, hidden_tuple, kparams, n_layers=2):
    assert n_layers == 2, "kernel is specialized for the module's n_layers=2"
    B, T = x_tokens.shape
    H = kparams['whh0'].shape[0] // 2
    E = kparams['embedding'].shape[1]
    Bp = max(8, ((B + 7) // 8) * 8)            # pad batch to sublane size

    tok_flat = x_tokens.reshape(-1).astype(jnp.int32)            # (B*T,) -> SMEM

    # hidden = torch.cat((hidden[0], hidden[1]), dim=0) -> (2*n_layers, B, H)
    h0 = jnp.concatenate([hidden_tuple[0], hidden_tuple[1]], axis=0)
    if Bp != B:
        h0 = jnp.pad(h0, ((0, 0), (0, Bp - B), (0, 0)))          # (4, Bp, H)

    smem = pl.BlockSpec(memory_space=pltpu.MemorySpace.SMEM)
    vmem = pl.BlockSpec(memory_space=pltpu.MemorySpace.VMEM)

    # TODO(synk): for a production-size vocab keep the embedding table in pl.ANY/HBM
    # and DMA-gather rows (VMEM-resident table would not fit v7x's 64 MiB VMEM).
    # TODO(synk): for large batch on v7x, add a "parallel" grid axis over batch tiles
    # so both TensorCores are used; single-TC is optimal at B=2.
    out_p, hN_p = pl.pallas_call(
        fused_bigru_kernel,
        out_shape=(jax.ShapeDtypeStruct((Bp, 1), jnp.float32),
                   jax.ShapeDtypeStruct((2 * n_layers, Bp, H), jnp.float32)),
        in_specs=[smem] + [vmem] * 12,
        out_specs=(vmem, vmem),
        scratch_shapes=[pltpu.VMEM((T * Bp, E), jnp.float32),       # gathered embeddings
                        pltpu.VMEM((T * Bp, 6 * H), jnp.float32),   # hoisted gate pre-acts (reused)
                        pltpu.VMEM((T * Bp, H), jnp.float32),       # layer-0 forward outputs
                        pltpu.VMEM((T * Bp, H), jnp.float32)],      # layer-0 reverse outputs
        compiler_params=pltpu.CompilerParams(vmem_limit_bytes=4 * 1024 * 1024),
    )(tok_flat, kparams['embedding'],
      kparams['wih0'], kparams['whh0'], kparams['bgi0'], kparams['bhn0'],
      kparams['wih1'], kparams['whh1'], kparams['bgi1'], kparams['bhn1'],
      h0, kparams['fc_w'], kparams['fc_b'])

    return out_p[:B, 0], hN_p[:, :B, :]        # (B,), (2*n_layers, B, H)


# ----------------------------------------------------------------------------
# Pure-JAX reference (for correctness check)
# ----------------------------------------------------------------------------
def _gru_cell_ref(x, h, wih, whh, bih, bhh):
    H = h.shape[-1]
    gi = x @ wih.T + bih
    gh = h @ whh.T + bhh
    r = jax.nn.sigmoid(gi[:, :H] + gh[:, :H])
    z = jax.nn.sigmoid(gi[:, H:2 * H] + gh[:, H:2 * H])
    n = jnp.tanh(gi[:, 2 * H:] + r * gh[:, 2 * H:])
    return (1.0 - z) * n + z * h


def ref_forward(x_tokens, hidden_tuple, params, n_layers=2):
    emb = jnp.take(params['embedding'], x_tokens, axis=0)  # (B, T, E)
    h0 = jnp.concatenate([hidden_tuple[0], hidden_tuple[1]], axis=0)
    B, T, _ = emb.shape
    layer_in = emb
    hNs = []
    for l in range(n_layers):
        dir_outs = []
        for d, rev in enumerate([False, True]):
            sfx = f'l{l}' + ('_reverse' if rev else '')
            wih = params[f'weight_ih_{sfx}']
            whh = params[f'weight_hh_{sfx}']
            bih = params[f'bias_ih_{sfx}']
            bhh = params[f'bias_hh_{sfx}']
            h = h0[2 * l + d]
            ts = range(T - 1, -1, -1) if rev else range(T)
            ys = [None] * T
            for t in ts:
                h = _gru_cell_ref(layer_in[:, t, :], h, wih, whh, bih, bhh)
                ys[t] = h
            dir_outs.append(jnp.stack(ys, axis=1))
            hNs.append(h)
        layer_in = jnp.concatenate(dir_outs, axis=-1)
    logits = layer_in[:, -1, :] @ params['fc_w'].T + params['fc_b']
    return jax.nn.sigmoid(logits)[:, 0], jnp.stack(hNs, axis=0)


# ----------------------------------------------------------------------------
# Deterministic parameter init (module __init__ shapes, scaled down)
# ----------------------------------------------------------------------------
def init_params(key, vocab_size, embedding_dim, hidden_dim, n_layers=2):
    params = {}
    key, k_emb = jax.random.split(key)
    params['embedding'] = jax.random.normal(k_emb, (vocab_size, embedding_dim),
                                            jnp.float32)
    s = 1.0 / float(hidden_dim) ** 0.5
    for l in range(n_layers):
        din = embedding_dim if l == 0 else 2 * hidden_dim
        for sfx in (f'l{l}', f'l{l}_reverse'):
            key, k1, k2, k3, k4 = jax.random.split(key, 5)
            params[f'weight_ih_{sfx}'] = jax.random.uniform(
                k1, (3 * hidden_dim, din), jnp.float32, -s, s)
            params[f'weight_hh_{sfx}'] = jax.random.uniform(
                k2, (3 * hidden_dim, hidden_dim), jnp.float32, -s, s)
            params[f'bias_ih_{sfx}'] = jax.random.uniform(
                k3, (3 * hidden_dim,), jnp.float32, -s, s)
            params[f'bias_hh_{sfx}'] = jax.random.uniform(
                k4, (3 * hidden_dim,), jnp.float32, -s, s)
    key, kw, kb = jax.random.split(key, 3)
    sf = 1.0 / float(2 * hidden_dim) ** 0.5
    params['fc_w'] = jax.random.uniform(kw, (1, 2 * hidden_dim), jnp.float32, -sf, sf)
    params['fc_b'] = jax.random.uniform(kb, (1,), jnp.float32, -sf, sf)
    return params


# ----------------------------------------------------------------------------
if __name__ == "__main__":
    # Small shapes consistent with the module: x is (B, T) int tokens,
    # hidden is a tuple of two (n_layers, B, H) tensors.
    B, T = 2, 8
    VOCAB, EMB, HID, NLAYERS = 50, 48, 32, 2

    key = jax.random.PRNGKey(0)
    key, kp, kx, kh0, kh1 = jax.random.split(key, 5)

    params = init_params(kp, VOCAB, EMB, HID, NLAYERS)
    kparams = prepare_kernel_params(params, HID, NLAYERS)   # one-time weight prep

    x = jax.random.randint(kx, (B, T), 0, VOCAB, dtype=jnp.int32)
    hidden = (0.1 * jax.random.normal(kh0, (NLAYERS, B, HID), jnp.float32),
              0.1 * jax.random.normal(kh1, (NLAYERS, B, HID), jnp.float32))

    out, h_n = forward(x, hidden, kparams, NLAYERS)
    out, h_n = jax.block_until_ready((out, h_n))

    out_ref, h_n_ref = ref_forward(x, hidden, params, NLAYERS)
    assert out.shape == (B,) and h_n.shape == (2 * NLAYERS, B, HID)
    assert jnp.allclose(out, out_ref, rtol=1e-4, atol=1e-4)
    assert jnp.allclose(h_n, h_n_ref, rtol=1e-4, atol=1e-4)

    print("KERNEL_OK")
</pallas_src>

<mosaic_0001>
module attributes {stable_mosaic.version = 11 : i64} {
  func.func @fused_bigru_kernel(%arg0: memref<16xi32, #tpu.memory_space<smem>>, %arg1: memref<50x48xf32, #tpu.memory_space<vmem>>, %arg2: memref<48x192xf32, #tpu.memory_space<vmem>>, %arg3: memref<64x192xf32, #tpu.memory_space<vmem>>, %arg4: memref<1x192xf32, #tpu.memory_space<vmem>>, %arg5: memref<1x64xf32, #tpu.memory_space<vmem>>, %arg6: memref<64x192xf32, #tpu.memory_space<vmem>>, %arg7: memref<64x192xf32, #tpu.memory_space<vmem>>, %arg8: memref<1x192xf32, #tpu.memory_space<vmem>>, %arg9: memref<1x64xf32, #tpu.memory_space<vmem>>, %arg10: memref<4x8x32xf32, #tpu.memory_space<vmem>>, %arg11: memref<1x64xf32, #tpu.memory_space<vmem>>, %arg12: memref<1x1xf32, #tpu.memory_space<vmem>>, %arg13: memref<8x1xf32, #tpu.memory_space<vmem>>, %arg14: memref<4x8x32xf32, #tpu.memory_space<vmem>>, %arg15: memref<64x48xf32, #tpu.memory_space<vmem>>, %arg16: memref<64x192xf32, #tpu.memory_space<vmem>>, %arg17: memref<64x32xf32, #tpu.memory_space<vmem>>, %arg18: memref<64x32xf32, #tpu.memory_space<vmem>>) attributes {dimension_semantics = [], scalar_prefetch = 0 : i64, scratch_operands = 4 : i64, tpu.core_type = #tpu.core_type<tc>} {
    %cst = arith.constant 0.000000e+00 : f32
    %0 = vector.broadcast %cst : f32 to vector<64x48xf32>
    %c0 = arith.constant 0 : index
    %c0_0 = arith.constant 0 : index
    %1 = vector.load %arg15[%c0, %c0_0] : memref<64x48xf32, #tpu.memory_space<vmem>>, vector<64x48xf32>
    tpu.vector_store %arg15[%c0, %c0_0], %0 {strides = array<i32>} : memref<64x48xf32, #tpu.memory_space<vmem>>, vector<64x48xf32>,
    %c0_1 = arith.constant 0 : index
    %2 = memref.load %arg0[%c0_1] : memref<16xi32, #tpu.memory_space<smem>>
    %3 = arith.index_cast %2 : i32 to index
    %c0_2 = arith.constant 0 : index
    %4 = vector.load %arg1[%3, %c0_2] : memref<50x48xf32, #tpu.memory_space<vmem>>, vector<1x48xf32>
    %c0_3 = arith.constant 0 : index
    %c0_4 = arith.constant 0 : index
    %5 = vector.load %arg15[%c0_3, %c0_4] : memref<64x48xf32, #tpu.memory_space<vmem>>, vector<1x48xf32>
    tpu.vector_store %arg15[%c0_3, %c0_4], %4 {strides = array<i32>} : memref<64x48xf32, #tpu.memory_space<vmem>>, vector<1x48xf32>,
    %c8 = arith.constant 8 : index
    %6 = memref.load %arg0[%c8] : memref<16xi32, #tpu.memory_space<smem>>
    %7 = arith.index_cast %6 : i32 to index
    %c0_5 = arith.constant 0 : index
    %8 = vector.load %arg1[%7, %c0_5] : memref<50x48xf32, #tpu.memory_space<vmem>>, vector<1x48xf32>
    %c1 = arith.constant 1 : index
    %c0_6 = arith.constant 0 : index
    %9 = vector.load %arg15[%c1, %c0_6] : memref<64x48xf32, #tpu.memory_space<vmem>>, vector<1x48xf32>
    tpu.vector_store %arg15[%c1, %c0_6], %8 {strides = array<i32>} : memref<64x48xf32, #tpu.memory_space<vmem>>, vector<1x48xf32>,
    %c1_7 = arith.constant 1 : index
    %10 = memref.load %arg0[%c1_7] : memref<16xi32, #tpu.memory_space<smem>>
    %11 = arith.index_cast %10 : i32 to index
    %c0_8 = arith.constant 0 : index
    %12 = vector.load %arg1[%11, %c0_8] : memref<50x48xf32, #tpu.memory_space<vmem>>, vector<1x48xf32>
    %c8_9 = arith.constant 8 : index
    %c0_10 = arith.constant 0 : index
    %13 = vector.load %arg15[%c8_9, %c0_10] : memref<64x48xf32, #tpu.memory_space<vmem>>, vector<1x48xf32>
    tpu.vector_store %arg15[%c8_9, %c0_10], %12 {strides = array<i32>} : memref<64x48xf32, #tpu.memory_space<vmem>>, vector<1x48xf32>,
    %c9 = arith.constant 9 : index
    %14 = memref.load %arg0[%c9] : memref<16xi32, #tpu.memory_space<smem>>
    %15 = arith.index_cast %14 : i32 to index
    %c0_11 = arith.constant 0 : index
    %16 = vector.load %arg1[%15, %c0_11] : memref<50x48xf32, #tpu.memory_space<vmem>>, vector<1x48xf32>
    %c9_12 = arith.constant 9 : index
    %c0_13 = arith.constant 0 : index
    %17 = vector.load %arg15[%c9_12, %c0_13] : memref<64x48xf32, #tpu.memory_space<vmem>>, vector<1x48xf32>
    tpu.vector_store %arg15[%c9_12, %c0_13], %16 {strides = array<i32>} : memref<64x48xf32, #tpu.memory_space<vmem>>, vector<1x48xf32>,
    %c2 = arith.constant 2 : index
    %18 = memref.load %arg0[%c2] : memref<16xi32, #tpu.memory_space<smem>>
    %19 = arith.index_cast %18 : i32 to index
    %c0_14 = arith.constant 0 : index
    %20 = vector.load %arg1[%19, %c0_14] : memref<50x48xf32, #tpu.memory_space<vmem>>, vector<1x48xf32>
    %c16 = arith.constant 16 : index
    %c0_15 = arith.constant 0 : index
    %21 = vector.load %arg15[%c16, %c0_15] : memref<64x48xf32, #tpu.memory_space<vmem>>, vector<1x48xf32>
    tpu.vector_store %arg15[%c16, %c0_15], %20 {strides = array<i32>} : memref<64x48xf32, #tpu.memory_space<vmem>>, vector<1x48xf32>,
    %c10 = arith.constant 10 : index
    %22 = memref.load %arg0[%c10] : memref<16xi32, #tpu.memory_space<smem>>
    %23 = arith.index_cast %22 : i32 to index
    %c0_16 = arith.constant 0 : index
    %24 = vector.load %arg1[%23, %c0_16] : memref<50x48xf32, #tpu.memory_space<vmem>>, vector<1x48xf32>
    %c17 = arith.constant 17 : index
    %c0_17 = arith.constant 0 : index
    %25 = vector.load %arg15[%c17, %c0_17] : memref<64x48xf32, #tpu.memory_space<vmem>>, vector<1x48xf32>
    tpu.vector_store %arg15[%c17, %c0_17], %24 {strides = array<i32>} : memref<64x48xf32, #tpu.memory_space<vmem>>, vector<1x48xf32>,
    %c3 = arith.constant 3 : index
    %26 = memref.load %arg0[%c3] : memref<16xi32, #tpu.memory_space<smem>>
    %27 = arith.index_cast %26 : i32 to index
    %c0_18 = arith.constant 0 : index
    %28 = vector.load %arg1[%27, %c0_18] : memref<50x48xf32, #tpu.memory_space<vmem>>, vector<1x48xf32>
    %c24 = arith.constant 24 : index
    %c0_19 = arith.constant 0 : index
    %29 = vector.load %arg15[%c24, %c0_19] : memref<64x48xf32, #tpu.memory_space<vmem>>, vector<1x48xf32>
    tpu.vector_store %arg15[%c24, %c0_19], %28 {strides = array<i32>} : memref<64x48xf32, #tpu.memory_space<vmem>>, vector<1x48xf32>,
    %c11 = arith.constant 11 : index
    %30 = memref.load %arg0[%c11] : memref<16xi32, #tpu.memory_space<smem>>
    %31 = arith.index_cast %30 : i32 to index
    %c0_20 = arith.constant 0 : index
    %32 = vector.load %arg1[%31, %c0_20] : memref<50x48xf32, #tpu.memory_space<vmem>>, vector<1x48xf32>
    %c25 = arith.constant 25 : index
    %c0_21 = arith.constant 0 : index
    %33 = vector.load %arg15[%c25, %c0_21] : memref<64x48xf32, #tpu.memory_space<vmem>>, vector<1x48xf32>
    tpu.vector_store %arg15[%c25, %c0_21], %32 {strides = array<i32>} : memref<64x48xf32, #tpu.memory_space<vmem>>, vector<1x48xf32>,
    %c4 = arith.constant 4 : index
    %34 = memref.load %arg0[%c4] : memref<16xi32, #tpu.memory_space<smem>>
    %35 = arith.index_cast %34 : i32 to index
    %c0_22 = arith.constant 0 : index
    %36 = vector.load %arg1[%35, %c0_22] : memref<50x48xf32, #tpu.memory_space<vmem>>, vector<1x48xf32>
    %c32 = arith.constant 32 : index
    %c0_23 = arith.constant 0 : index
    %37 = vector.load %arg15[%c32, %c0_23] : memref<64x48xf32, #tpu.memory_space<vmem>>, vector<1x48xf32>
    tpu.vector_store %arg15[%c32, %c0_23], %36 {strides = array<i32>} : memref<64x48xf32, #tpu.memory_space<vmem>>, vector<1x48xf32>,
    %c12 = arith.constant 12 : index
    %38 = memref.load %arg0[%c12] : memref<16xi32, #tpu.memory_space<smem>>
    %39 = arith.index_cast %38 : i32 to index
    %c0_24 = arith.constant 0 : index
    %40 = vector.load %arg1[%39, %c0_24] : memref<50x48xf32, #tpu.memory_space<vmem>>, vector<1x48xf32>
    %c33 = arith.constant 33 : index
    %c0_25 = arith.constant 0 : index
    %41 = vector.load %arg15[%c33, %c0_25] : memref<64x48xf32, #tpu.memory_space<vmem>>, vector<1x48xf32>
    tpu.vector_store %arg15[%c33, %c0_25], %40 {strides = array<i32>} : memref<64x48xf32, #tpu.memory_space<vmem>>, vector<1x48xf32>,
    %c5 = arith.constant 5 : index
    %42 = memref.load %arg0[%c5] : memref<16xi32, #tpu.memory_space<smem>>
    %43 = arith.index_cast %42 : i32 to index
    %c0_26 = arith.constant 0 : index
    %44 = vector.load %arg1[%43, %c0_26] : memref<50x48xf32, #tpu.memory_space<vmem>>, vector<1x48xf32>
    %c40 = arith.constant 40 : index
    %c0_27 = arith.constant 0 : index
    %45 = vector.load %arg15[%c40, %c0_27] : memref<64x48xf32, #tpu.memory_space<vmem>>, vector<1x48xf32>
    tpu.vector_store %arg15[%c40, %c0_27], %44 {strides = array<i32>} : memref<64x48xf32, #tpu.memory_space<vmem>>, vector<1x48xf32>,
    %c13 = arith.constant 13 : index
    %46 = memref.load %arg0[%c13] : memref<16xi32, #tpu.memory_space<smem>>
    %47 = arith.index_cast %46 : i32 to index
    %c0_28 = arith.constant 0 : index
    %48 = vector.load %arg1[%47, %c0_28] : memref<50x48xf32, #tpu.memory_space<vmem>>, vector<1x48xf32>
    %c41 = arith.constant 41 : index
    %c0_29 = arith.constant 0 : index
    %49 = vector.load %arg15[%c41, %c0_29] : memref<64x48xf32, #tpu.memory_space<vmem>>, vector<1x48xf32>
    tpu.vector_store %arg15[%c41, %c0_29], %48 {strides = array<i32>} : memref<64x48xf32, #tpu.memory_space<vmem>>, vector<1x48xf32>,
    %c6 = arith.constant 6 : index
    %50 = memref.load %arg0[%c6] : memref<16xi32, #tpu.memory_space<smem>>
    %51 = arith.index_cast %50 : i32 to index
    %c0_30 = arith.constant 0 : index
    %52 = vector.load %arg1[%51, %c0_30] : memref<50x48xf32, #tpu.memory_space<vmem>>, vector<1x48xf32>
    %c48 = arith.constant 48 : index
    %c0_31 = arith.constant 0 : index
    %53 = vector.load %arg15[%c48, %c0_31] : memref<64x48xf32, #tpu.memory_space<vmem>>, vector<1x48xf32>
    tpu.vector_store %arg15[%c48, %c0_31], %52 {strides = array<i32>} : memref<64x48xf32, #tpu.memory_space<vmem>>, vector<1x48xf32>,
    %c14 = arith.constant 14 : index
    %54 = memref.load %arg0[%c14] : memref<16xi32, #tpu.memory_space<smem>>
    %55 = arith.index_cast %54 : i32 to index
    %c0_32 = arith.constant 0 : index
    %56 = vector.load %arg1[%55, %c0_32] : memref<50x48xf32, #tpu.memory_space<vmem>>, vector<1x48xf32>
    %c49 = arith.constant 49 : index
    %c0_33 = arith.constant 0 : index
    %57 = vector.load %arg15[%c49, %c0_33] : memref<64x48xf32, #tpu.memory_space<vmem>>, vector<1x48xf32>
    tpu.vector_store %arg15[%c49, %c0_33], %56 {strides = array<i32>} : memref<64x48xf32, #tpu.memory_space<vmem>>, vector<1x48xf32>,
    %c7 = arith.constant 7 : index
    %58 = memref.load %arg0[%c7] : memref<16xi32, #tpu.memory_space<smem>>
    %59 = arith.index_cast %58 : i32 to index
    %c0_34 = arith.constant 0 : index
    %60 = vector.load %arg1[%59, %c0_34] : memref<50x48xf32, #tpu.memory_space<vmem>>, vector<1x48xf32>
    %c56 = arith.constant 56 : index
    %c0_35 = arith.constant 0 : index
    %61 = vector.load %arg15[%c56, %c0_35] : memref<64x48xf32, #tpu.memory_space<vmem>>, vector<1x48xf32>
    tpu.vector_store %arg15[%c56, %c0_35], %60 {strides = array<i32>} : memref<64x48xf32, #tpu.memory_space<vmem>>, vector<1x48xf32>,
    %c15 = arith.constant 15 : index
    %62 = memref.load %arg0[%c15] : memref<16xi32, #tpu.memory_space<smem>>
    %63 = arith.index_cast %62 : i32 to index
    %c0_36 = arith.constant 0 : index
    %64 = vector.load %arg1[%63, %c0_36] : memref<50x48xf32, #tpu.memory_space<vmem>>, vector<1x48xf32>
    %c57 = arith.constant 57 : index
    %c0_37 = arith.constant 0 : index
    %65 = vector.load %arg15[%c57, %c0_37] : memref<64x48xf32, #tpu.memory_space<vmem>>, vector<1x48xf32>
    tpu.vector_store %arg15[%c57, %c0_37], %64 {strides = array<i32>} : memref<64x48xf32, #tpu.memory_space<vmem>>, vector<1x48xf32>,
    %c0_38 = arith.constant 0 : index
    %c0_39 = arith.constant 0 : index
    %66 = vector.load %arg15[%c0_38, %c0_39] : memref<64x48xf32, #tpu.memory_space<vmem>>, vector<64x48xf32>
    %c0_40 = arith.constant 0 : index
    %c0_41 = arith.constant 0 : index
    %67 = vector.load %arg2[%c0_40, %c0_41] : memref<48x192xf32, #tpu.memory_space<vmem>>, vector<48x192xf32>
    %cst_42 = arith.constant dense<0.000000e+00> : vector<64x192xf32>
    %68 = tpu.matmul %66, %67, %cst_42 {dimension_numbers = #tpu.dot_dimension_numbers<[1], [0], [0], [1], [0, 0, 1, 1], [], []>} : vector<64x48xf32>, vector<48x192xf32>, vector<64x192xf32> -> vector<64x192xf32>
    %c0_43 = arith.constant 0 : index
    %c0_44 = arith.constant 0 : index
    %69 = vector.load %arg4[%c0_43, %c0_44] : memref<1x192xf32, #tpu.memory_space<vmem>>, vector<1x192xf32>
    %70 = vector.broadcast %69 : vector<1x192xf32> to vector<64x192xf32>
    %71 = arith.addf %68, %70 : vector<64x192xf32>
    %c0_45 = arith.constant 0 : index
    %c0_46 = arith.constant 0 : index
    %72 = vector.load %arg16[%c0_45, %c0_46] : memref<64x192xf32, #tpu.memory_space<vmem>>, vector<64x192xf32>
    tpu.vector_store %arg16[%c0_45, %c0_46], %71 {strides = array<i32>} : memref<64x192xf32, #tpu.memory_space<vmem>>, vector<64x192xf32>,
    %c0_47 = arith.constant 0 : index
    %c0_48 = arith.constant 0 : index
    %73 = vector.load %arg5[%c0_47, %c0_48] : memref<1x64xf32, #tpu.memory_space<vmem>>, vector<1x64xf32>
    %c0_49 = arith.constant 0 : index
    %c0_50 = arith.constant 0 : index
    %74 = vector.load %arg3[%c0_49, %c0_50] : memref<64x192xf32, #tpu.memory_space<vmem>>, vector<64x192xf32>
    %75 = vector.extract_strided_slice %73 {offsets = [0, 0], sizes = [1, 32], strides = [1, 1]} : vector<1x64xf32> to vector<1x32xf32>
    %76 = vector.extract_strided_slice %73 {offsets = [0, 32], sizes = [1, 32], strides = [1, 1]} : vector<1x64xf32> to vector<1x32xf32>
    %c0_51 = arith.constant 0 : index
    %c0_52 = arith.constant 0 : index
    %c0_53 = arith.constant 0 : index
    %77 = vector.load %arg10[%c0_51, %c0_52, %c0_53] : memref<4x8x32xf32, #tpu.memory_space<vmem>>, vector<1x8x32xf32>
    %78 = vector.shape_cast %77 : vector<1x8x32xf32> to vector<8x32xf32>
    %c1_54 = arith.constant 1 : index
    %c0_55 = arith.constant 0 : index
    %c0_56 = arith.constant 0 : index
    %79 = vector.load %arg10[%c1_54, %c0_55, %c0_56] : memref<4x8x32xf32, #tpu.memory_space<vmem>>, vector<1x8x32xf32>
    %80 = vector.shape_cast %79 : vector<1x8x32xf32> to vector<8x32xf32>
    %81 = tpu.concatenate %78, %80 in 1 : vector<8x32xf32>, vector<8x32xf32> -> vector<8x64xf32>
    %cst_57 = arith.constant dense<0.000000e+00> : vector<8x192xf32>
    %82 = tpu.matmul %81, %74, %cst_57 {dimension_numbers = #tpu.dot_dimension_numbers<[1], [0], [0], [1], [0, 0, 1, 1], [], []>} : vector<8x64xf32>, vector<64x192xf32>, vector<8x192xf32> -> vector<8x192xf32>
    %c0_58 = arith.constant 0 : index
    %c0_59 = arith.constant 0 : index
    %83 = vector.load %arg16[%c0_58, %c0_59] : memref<64x192xf32, #tpu.memory_space<vmem>>, vector<8x192xf32>
    %c56_60 = arith.constant 56 : index
    %c0_61 = arith.constant 0 : index
    %84 = vector.load %arg16[%c56_60, %c0_61] : memref<64x192xf32, #tpu.memory_space<vmem>>, vector<8x192xf32>
    %85 = vector.extract_strided_slice %83 {offsets = [0, 0], sizes = [8, 64], strides = [1, 1]} : vector<8x192xf32> to vector<8x64xf32>
    %86 = vector.extract_strided_slice %82 {offsets = [0, 0], sizes = [8, 64], strides = [1, 1]} : vector<8x192xf32> to vector<8x64xf32>
    %87 = arith.addf %85, %86 : vector<8x64xf32>
    %88 = arith.negf %87 : vector<8x64xf32>
    %89 = math.exp %88 : vector<8x64xf32>
    %cst_62 = arith.constant 1.000000e+00 : f32
    %90 = vector.broadcast %cst_62 : f32 to vector<8x64xf32>
    %91 = arith.addf %90, %89 : vector<8x64xf32>
    %92 = arith.divf %90, %91 : vector<8x64xf32>
    %93 = vector.extract_strided_slice %84 {offsets = [0, 96], sizes = [8, 64], strides = [1, 1]} : vector<8x192xf32> to vector<8x64xf32>
    %94 = vector.extract_strided_slice %82 {offsets = [0, 96], sizes = [8, 64], strides = [1, 1]} : vector<8x192xf32> to vector<8x64xf32>
    %95 = arith.addf %93, %94 : vector<8x64xf32>
    %96 = arith.negf %95 : vector<8x64xf32>
    %97 = math.exp %96 : vector<8x64xf32>
    %cst_63 = arith.constant 1.000000e+00 : f32
    %98 = vector.broadcast %cst_63 : f32 to vector<8x64xf32>
    %99 = arith.addf %98, %97 : vector<8x64xf32>
    %100 = arith.divf %98, %99 : vector<8x64xf32>
    %101 = vector.extract_strided_slice %83 {offsets = [0, 64], sizes = [8, 32], strides = [1, 1]} : vector<8x192xf32> to vector<8x32xf32>
    %102 = vector.extract_strided_slice %92 {offsets = [0, 0], sizes = [8, 32], strides = [1, 1]} : vector<8x64xf32> to vector<8x32xf32>
    %103 = vector.extract_strided_slice %82 {offsets = [0, 64], sizes = [8, 32], strides = [1, 1]} : vector<8x192xf32> to vector<8x32xf32>
    %104 = vector.broadcast %75 : vector<1x32xf32> to vector<8x32xf32>
    %105 = arith.addf %103, %104 : vector<8x32xf32>
    %106 = arith.mulf %102, %105 : vector<8x32xf32>
    %107 = arith.addf %101, %106 : vector<8x32xf32>
    %108 = math.tanh %107 : vector<8x32xf32>
    %109 = vector.extract_strided_slice %84 {offsets = [0, 160], sizes = [8, 32], strides = [1, 1]} : vector<8x192xf32> to vector<8x32xf32>
    %110 = vector.extract_strided_slice %100 {offsets = [0, 0], sizes = [8, 32], strides = [1, 1]} : vector<8x64xf32> to vector<8x32xf32>
    %111 = vector.extract_strided_slice %82 {offsets = [0, 160], sizes = [8, 32], strides = [1, 1]} : vector<8x192xf32> to vector<8x32xf32>
    %112 = vector.broadcast %76 : vector<1x32xf32> to vector<8x32xf32>
    %113 = arith.addf %111, %112 : vector<8x32xf32>
    %114 = arith.mulf %110, %113 : vector<8x32xf32>
    %115 = arith.addf %109, %114 : vector<8x32xf32>
    %116 = math.tanh %115 : vector<8x32xf32>
    %117 = vector.extract_strided_slice %92 {offsets = [0, 32], sizes = [8, 32], strides = [1, 1]} : vector<8x64xf32> to vector<8x32xf32>
    %118 = vector.extract_strided_slice %100 {offsets = [0, 32], sizes = [8, 32], strides = [1, 1]} : vector<8x64xf32> to vector<8x32xf32>
    %cst_64 = arith.constant 1.000000e+00 : f32
    %119 = vector.broadcast %cst_64 : f32 to vector<8x32xf32>
    %120 = arith.subf %119, %117 : vector<8x32xf32>
    %121 = arith.mulf %120, %108 : vector<8x32xf32>
    %122 = arith.mulf %117, %78 : vector<8x32xf32>
    %123 = arith.addf %121, %122 : vector<8x32xf32>
    %cst_65 = arith.constant 1.000000e+00 : f32
    %124 = vector.broadcast %cst_65 : f32 to vector<8x32xf32>
    %125 = arith.subf %124, %118 : vector<8x32xf32>
    %126 = arith.mulf %125, %116 : vector<8x32xf32>
    %127 = arith.mulf %118, %80 : vector<8x32xf32>
    %128 = arith.addf %126, %127 : vector<8x32xf32>
    %c0_66 = arith.constant 0 : index
    %c0_67 = arith.constant 0 : index
    %129 = vector.load %arg17[%c0_66, %c0_67] : memref<64x32xf32, #tpu.memory_space<vmem>>, vector<8x32xf32>
    tpu.vector_store %arg17[%c0_66, %c0_67], %123 {strides = array<i32>} : memref<64x32xf32, #tpu.memory_space<vmem>>, vector<8x32xf32>,
    %c56_68 = arith.constant 56 : index
    %c0_69 = arith.constant 0 : index
    %130 = vector.load %arg18[%c56_68, %c0_69] : memref<64x32xf32, #tpu.memory_space<vmem>>, vector<8x32xf32>
    tpu.vector_store %arg18[%c56_68, %c0_69], %128 {strides = array<i32>} : memref<64x32xf32, #tpu.memory_space<vmem>>, vector<8x32xf32>,
    %131 = tpu.concatenate %123, %128 in 1 : vector<8x32xf32>, vector<8x32xf32> -> vector<8x64xf32>
    %cst_70 = arith.constant dense<0.000000e+00> : vector<8x192xf32>
    %132 = tpu.matmul %131, %74, %cst_70 {dimension_numbers = #tpu.dot_dimension_numbers<[1], [0], [0], [1], [0, 0, 1, 1], [], []>} : vector<8x64xf32>, vector<64x192xf32>, vector<8x192xf32> -> vector<8x192xf32>
    %c8_71 = arith.constant 8 : index
    %c0_72 = arith.constant 0 : index
    %133 = vector.load %arg16[%c8_71, %c0_72] : memref<64x192xf32, #tpu.memory_space<vmem>>, vector<8x192xf32>
    %c48_73 = arith.constant 48 : index
    %c0_74 = arith.constant 0 : index
    %134 = vector.load %arg16[%c48_73, %c0_74] : memref<64x192xf32, #tpu.memory_space<vmem>>, vector<8x192xf32>
    %135 = vector.extract_strided_slice %133 {offsets = [0, 0], sizes = [8, 64], strides = [1, 1]} : vector<8x192xf32> to vector<8x64xf32>
    %136 = vector.extract_strided_slice %132 {offsets = [0, 0], sizes = [8, 64], strides = [1, 1]} : vector<8x192xf32> to vector<8x64xf32>
    %137 = arith.addf %135, %136 : vector<8x64xf32>
    %138 = arith.negf %137 : vector<8x64xf32>
    %139 = math.exp %138 : vector<8x64xf32>
    %cst_75 = arith.constant 1.000000e+00 : f32
    %140 = vector.broadcast %cst_75 : f32 to vector<8x64xf32>
    %141 = arith.addf %140, %139 : vector<8x64xf32>
    %142 = arith.divf %140, %141 : vector<8x64xf32>
    %143 = vector.extract_strided_slice %134 {offsets = [0, 96], sizes = [8, 64], strides = [1, 1]} : vector<8x192xf32> to vector<8x64xf32>
    %144 = vector.extract_strided_slice %132 {offsets = [0, 96], sizes = [8, 64], strides = [1, 1]} : vector<8x192xf32> to vector<8x64xf32>
    %145 = arith.addf %143, %144 : vector<8x64xf32>
    %146 = arith.negf %145 : vector<8x64xf32>
    %147 = math.exp %146 : vector<8x64xf32>
    %cst_76 = arith.constant 1.000000e+00 : f32
    %148 = vector.broadcast %cst_76 : f32 to vector<8x64xf32>
    %149 = arith.addf %148, %147 : vector<8x64xf32>
    %150 = arith.divf %148, %149 : vector<8x64xf32>
    %151 = vector.extract_strided_slice %133 {offsets = [0, 64], sizes = [8, 32], strides = [1, 1]} : vector<8x192xf32> to vector<8x32xf32>
    %152 = vector.extract_strided_slice %142 {offsets = [0, 0], sizes = [8, 32], strides = [1, 1]} : vector<8x64xf32> to vector<8x32xf32>
    %153 = vector.extract_strided_slice %132 {offsets = [0, 64], sizes = [8, 32], strides = [1, 1]} : vector<8x192xf32> to vector<8x32xf32>
    %154 = vector.broadcast %75 : vector<1x32xf32> to vector<8x32xf32>
    %155 = arith.addf %153, %154 : vector<8x32xf32>
    %156 = arith.mulf %152, %155 : vector<8x32xf32>
    %157 = arith.addf %151, %156 : vector<8x32xf32>
    %158 = math.tanh %157 : vector<8x32xf32>
    %159 = vector.extract_strided_slice %134 {offsets = [0, 160], sizes = [8, 32], strides = [1, 1]} : vector<8x192xf32> to vector<8x32xf32>
    %160 = vector.extract_strided_slice %150 {offsets = [0, 0], sizes = [8, 32], strides = [1, 1]} : vector<8x64xf32> to vector<8x32xf32>
    %161 = vector.extract_strided_slice %132 {offsets = [0, 160], sizes = [8, 32], strides = [1, 1]} : vector<8x192xf32> to vector<8x32xf32>
    %162 = vector.broadcast %76 : vector<1x32xf32> to vector<8x32xf32>
    %163 = arith.addf %161, %162 : vector<8x32xf32>
    %164 = arith.mulf %160, %163 : vector<8x32xf32>
    %165 = arith.addf %159, %164 : vector<8x32xf32>
    %166 = math.tanh %165 : vector<8x32xf32>
    %167 = vector.extract_strided_slice %142 {offsets = [0, 32], sizes = [8, 32], strides = [1, 1]} : vector<8x64xf32> to vector<8x32xf32>
    %168 = vector.extract_strided_slice %150 {offsets = [0, 32], sizes = [8, 32], strides = [1, 1]} : vector<8x64xf32> to vector<8x32xf32>
    %cst_77 = arith.constant 1.000000e+00 : f32
    %169 = vector.broadcast %cst_77 : f32 to vector<8x32xf32>
    %170 = arith.subf %169, %167 : vector<8x32xf32>
    %171 = arith.mulf %170, %158 : vector<8x32xf32>
    %172 = arith.mulf %167, %123 : vector<8x32xf32>
    %173 = arith.addf %171, %172 : vector<8x32xf32>
    %cst_78 = arith.constant 1.000000e+00 : f32
    %174 = vector.broadcast %cst_78 : f32 to vector<8x32xf32>
    %175 = arith.subf %174, %168 : vector<8x32xf32>
    %176 = arith.mulf %175, %166 : vector<8x32xf32>
    %177 = arith.mulf %168, %128 : vector<8x32xf32>
    %178 = arith.addf %176, %177 : vector<8x32xf32>
    %c8_79 = arith.constant 8 : index
    %c0_80 = arith.constant 0 : index
    %179 = vector.load %arg17[%c8_79, %c0_80] : memref<64x32xf32, #tpu.memory_space<vmem>>, vector<8x32xf32>
    tpu.vector_store %arg17[%c8_79, %c0_80], %173 {strides = array<i32>} : memref<64x32xf32, #tpu.memory_space<vmem>>, vector<8x32xf32>,
    %c48_81 = arith.constant 48 : index
    %c0_82 = arith.constant 0 : index
    %180 = vector.load %arg18[%c48_81, %c0_82] : memref<64x32xf32, #tpu.memory_space<vmem>>, vector<8x32xf32>
    tpu.vector_store %arg18[%c48_81, %c0_82], %178 {strides = array<i32>} : memref<64x32xf32, #tpu.memory_space<vmem>>, vector<8x32xf32>,
    %181 = tpu.concatenate %173, %178 in 1 : vector<8x32xf32>, vector<8x32xf32> -> vector<8x64xf32>
    %cst_83 = arith.constant dense<0.000000e+00> : vector<8x192xf32>
    %182 = tpu.matmul %181, %74, %cst_83 {dimension_numbers = #tpu.dot_dimension_numbers<[1], [0], [0], [1], [0, 0, 1, 1], [], []>} : vector<8x64xf32>, vector<64x192xf32>, vector<8x192xf32> -> vector<8x192xf32>
    %c16_84 = arith.constant 16 : index
    %c0_85 = arith.constant 0 : index
    %183 = vector.load %arg16[%c16_84, %c0_85] : memref<64x192xf32, #tpu.memory_space<vmem>>, vector<8x192xf32>
    %c40_86 = arith.constant 40 : index
    %c0_87 = arith.constant 0 : index
    %184 = vector.load %arg16[%c40_86, %c0_87] : memref<64x192xf32, #tpu.memory_space<vmem>>, vector<8x192xf32>
    %185 = vector.extract_strided_slice %183 {offsets = [0, 0], sizes = [8, 64], strides = [1, 1]} : vector<8x192xf32> to vector<8x64xf32>
    %186 = vector.extract_strided_slice %182 {offsets = [0, 0], sizes = [8, 64], strides = [1, 1]} : vector<8x192xf32> to vector<8x64xf32>
    %187 = arith.addf %185, %186 : vector<8x64xf32>
    %188 = arith.negf %187 : vector<8x64xf32>
    %189 = math.exp %188 : vector<8x64xf32>
    %cst_88 = arith.constant 1.000000e+00 : f32
    %190 = vector.broadcast %cst_88 : f32 to vector<8x64xf32>
    %191 = arith.addf %190, %189 : vector<8x64xf32>
    %192 = arith.divf %190, %191 : vector<8x64xf32>
    %193 = vector.extract_strided_slice %184 {offsets = [0, 96], sizes = [8, 64], strides = [1, 1]} : vector<8x192xf32> to vector<8x64xf32>
    %194 = vector.extract_strided_slice %182 {offsets = [0, 96], sizes = [8, 64], strides = [1, 1]} : vector<8x192xf32> to vector<8x64xf32>
    %195 = arith.addf %193, %194 : vector<8x64xf32>
    %196 = arith.negf %195 : vector<8x64xf32>
    %197 = math.exp %196 : vector<8x64xf32>
    %cst_89 = arith.constant 1.000000e+00 : f32
    %198 = vector.broadcast %cst_89 : f32 to vector<8x64xf32>
    %199 = arith.addf %198, %197 : vector<8x64xf32>
    %200 = arith.divf %198, %199 : vector<8x64xf32>
    %201 = vector.extract_strided_slice %183 {offsets = [0, 64], sizes = [8, 32], strides = [1, 1]} : vector<8x192xf32> to vector<8x32xf32>
    %202 = vector.extract_strided_slice %192 {offsets = [0, 0], sizes = [8, 32], strides = [1, 1]} : vector<8x64xf32> to vector<8x32xf32>
    %203 = vector.extract_strided_slice %182 {offsets = [0, 64], sizes = [8, 32], strides = [1, 1]} : vector<8x192xf32> to vector<8x32xf32>
    %204 = vector.broadcast %75 : vector<1x32xf32> to vector<8x32xf32>
    %205 = arith.addf %203, %204 : vector<8x32xf32>
    %206 = arith.mulf %202, %205 : vector<8x32xf32>
    %207 = arith.addf %201, %206 : vector<8x32xf32>
    %208 = math.tanh %207 : vector<8x32xf32>
    %209 = vector.extract_strided_slice %184 {offsets = [0, 160], sizes = [8, 32], strides = [1, 1]} : vector<8x192xf32> to vector<8x32xf32>
    %210 = vector.extract_strided_slice %200 {offsets = [0, 0], sizes = [8, 32], strides = [1, 1]} : vector<8x64xf32> to vector<8x32xf32>
    %211 = vector.extract_strided_slice %182 {offsets = [0, 160], sizes = [8, 32], strides = [1, 1]} : vector<8x192xf32> to vector<8x32xf32>
    %212 = vector.broadcast %76 : vector<1x32xf32> to vector<8x32xf32>
    %213 = arith.addf %211, %212 : vector<8x32xf32>
    %214 = arith.mulf %210, %213 : vector<8x32xf32>
    %215 = arith.addf %209, %214 : vector<8x32xf32>
    %216 = math.tanh %215 : vector<8x32xf32>
    %217 = vector.extract_strided_slice %192 {offsets = [0, 32], sizes = [8, 32], strides = [1, 1]} : vector<8x64xf32> to vector<8x32xf32>
    %218 = vector.extract_strided_slice %200 {offsets = [0, 32], sizes = [8, 32], strides = [1, 1]} : vector<8x64xf32> to vector<8x32xf32>
    %cst_90 = arith.constant 1.000000e+00 : f32
    %219 = vector.broadcast %cst_90 : f32 to vector<8x32xf32>
    %220 = arith.subf %219, %217 : vector<8x32xf32>
    %221 = arith.mulf %220, %208 : vector<8x32xf32>
    %222 = arith.mulf %217, %173 : vector<8x32xf32>
    %223 = arith.addf %221, %222 : vector<8x32xf32>
    %cst_91 = arith.constant 1.000000e+00 : f32
    %224 = vector.broadcast %cst_91 : f32 to vector<8x32xf32>
    %225 = arith.subf %224, %218 : vector<8x32xf32>
    %226 = arith.mulf %225, %216 : vector<8x32xf32>
    %227 = arith.mulf %218, %178 : vector<8x32xf32>
    %228 = arith.addf %226, %227 : vector<8x32xf32>
    %c16_92 = arith.constant 16 : index
    %c0_93 = arith.constant 0 : index
    %229 = vector.load %arg17[%c16_92, %c0_93] : memref<64x32xf32, #tpu.memory_space<vmem>>, vector<8x32xf32>
    tpu.vector_store %arg17[%c16_92, %c0_93], %223 {strides = array<i32>} : memref<64x32xf32, #tpu.memory_space<vmem>>, vector<8x32xf32>,
    %c40_94 = arith.constant 40 : index
    %c0_95 = arith.constant 0 : index
    %230 = vector.load %arg18[%c40_94, %c0_95] : memref<64x32xf32, #tpu.memory_space<vmem>>, vector<8x32xf32>
    tpu.vector_store %arg18[%c40_94, %c0_95], %228 {strides = array<i32>} : memref<64x32xf32, #tpu.memory_space<vmem>>, vector<8x32xf32>,
    %231 = tpu.concatenate %223, %228 in 1 : vector<8x32xf32>, vector<8x32xf32> -> vector<8x64xf32>
    %cst_96 = arith.constant dense<0.000000e+00> : vector<8x192xf32>
    %232 = tpu.matmul %231, %74, %cst_96 {dimension_numbers = #tpu.dot_dimension_numbers<[1], [0], [0], [1], [0, 0, 1, 1], [], []>} : vector<8x64xf32>, vector<64x192xf32>, vector<8x192xf32> -> vector<8x192xf32>
    %c24_97 = arith.constant 24 : index
    %c0_98 = arith.constant 0 : index
    %233 = vector.load %arg16[%c24_97, %c0_98] : memref<64x192xf32, #tpu.memory_space<vmem>>, vector<8x192xf32>
    %c32_99 = arith.constant 32 : index
    %c0_100 = arith.constant 0 : index
    %234 = vector.load %arg16[%c32_99, %c0_100] : memref<64x192xf32, #tpu.memory_space<vmem>>, vector<8x192xf32>
    %235 = vector.extract_strided_slice %233 {offsets = [0, 0], sizes = [8, 64], strides = [1, 1]} : vector<8x192xf32> to vector<8x64xf32>
    %236 = vector.extract_strided_slice %232 {offsets = [0, 0], sizes = [8, 64], strides = [1, 1]} : vector<8x192xf32> to vector<8x64xf32>
    %237 = arith.addf %235, %236 : vector<8x64xf32>
    %238 = arith.negf %237 : vector<8x64xf32>
    %239 = math.exp %238 : vector<8x64xf32>
    %cst_101 = arith.constant 1.000000e+00 : f32
    %240 = vector.broadcast %cst_101 : f32 to vector<8x64xf32>
    %241 = arith.addf %240, %239 : vector<8x64xf32>
    %242 = arith.divf %240, %241 : vector<8x64xf32>
    %243 = vector.extract_strided_slice %234 {offsets = [0, 96], sizes = [8, 64], strides = [1, 1]} : vector<8x192xf32> to vector<8x64xf32>
    %244 = vector.extract_strided_slice %232 {offsets = [0, 96], sizes = [8, 64], strides = [1, 1]} : vector<8x192xf32> to vector<8x64xf32>
    %245 = arith.addf %243, %244 : vector<8x64xf32>
    %246 = arith.negf %245 : vector<8x64xf32>
    %247 = math.exp %246 : vector<8x64xf32>
    %cst_102 = arith.constant 1.000000e+00 : f32
    %248 = vector.broadcast %cst_102 : f32 to vector<8x64xf32>
    %249 = arith.addf %248, %247 : vector<8x64xf32>
    %250 = arith.divf %248, %249 : vector<8x64xf32>
    %251 = vector.extract_strided_slice %233 {offsets = [0, 64], sizes = [8, 32], strides = [1, 1]} : vector<8x192xf32> to vector<8x32xf32>
    %252 = vector.extract_strided_slice %242 {offsets = [0, 0], sizes = [8, 32], strides = [1, 1]} : vector<8x64xf32> to vector<8x32xf32>
    %253 = vector.extract_strided_slice %232 {offsets = [0, 64], sizes = [8, 32], strides = [1, 1]} : vector<8x192xf32> to vector<8x32xf32>
    %254 = vector.broadcast %75 : vector<1x32xf32> to vector<8x32xf32>
    %255 = arith.addf %253, %254 : vector<8x32xf32>
    %256 = arith.mulf %252, %255 : vector<8x32xf32>
    %257 = arith.addf %251, %256 : vector<8x32xf32>
    %258 = math.tanh %257 : vector<8x32xf32>
    %259 = vector.extract_strided_slice %234 {offsets = [0, 160], sizes = [8, 32], strides = [1, 1]} : vector<8x192xf32> to vector<8x32xf32>
    %260 = vector.extract_strided_slice %250 {offsets = [0, 0], sizes = [8, 32], strides = [1, 1]} : vector<8x64xf32> to vector<8x32xf32>
    %261 = vector.extract_strided_slice %232 {offsets = [0, 160], sizes = [8, 32], strides = [1, 1]} : vector<8x192xf32> to vector<8x32xf32>
    %262 = vector.broadcast %76 : vector<1x32xf32> to vector<8x32xf32>
    %263 = arith.addf %261, %262 : vector<8x32xf32>
    %264 = arith.mulf %260, %263 : vector<8x32xf32>
    %265 = arith.addf %259, %264 : vector<8x32xf32>
    %266 = math.tanh %265 : vector<8x32xf32>
    %267 = vector.extract_strided_slice %242 {offsets = [0, 32], sizes = [8, 32], strides = [1, 1]} : vector<8x64xf32> to vector<8x32xf32>
    %268 = vector.extract_strided_slice %250 {offsets = [0, 32], sizes = [8, 32], strides = [1, 1]} : vector<8x64xf32> to vector<8x32xf32>
    %cst_103 = arith.constant 1.000000e+00 : f32
    %269 = vector.broadcast %cst_103 : f32 to vector<8x32xf32>
    %270 = arith.subf %269, %267 : vector<8x32xf32>
    %271 = arith.mulf %270, %258 : vector<8x32xf32>
    %272 = arith.mulf %267, %223 : vector<8x32xf32>
    %273 = arith.addf %271, %272 : vector<8x32xf32>
    %cst_104 = arith.constant 1.000000e+00 : f32
    %274 = vector.broadcast %cst_104 : f32 to vector<8x32xf32>
    %275 = arith.subf %274, %268 : vector<8x32xf32>
    %276 = arith.mulf %275, %266 : vector<8x32xf32>
    %277 = arith.mulf %268, %228 : vector<8x32xf32>
    %278 = arith.addf %276, %277 : vector<8x32xf32>
    %c24_105 = arith.constant 24 : index
    %c0_106 = arith.constant 0 : index
    %279 = vector.load %arg17[%c24_105, %c0_106] : memref<64x32xf32, #tpu.memory_space<vmem>>, vector<8x32xf32>
    tpu.vector_store %arg17[%c24_105, %c0_106], %273 {strides = array<i32>} : memref<64x32xf32, #tpu.memory_space<vmem>>, vector<8x32xf32>,
    %c32_107 = arith.constant 32 : index
    %c0_108 = arith.constant 0 : index
    %280 = vector.load %arg18[%c32_107, %c0_108] : memref<64x32xf32, #tpu.memory_space<vmem>>, vector<8x32xf32>
    tpu.vector_store %arg18[%c32_107, %c0_108], %278 {strides = array<i32>} : memref<64x32xf32, #tpu.memory_space<vmem>>, vector<8x32xf32>,
    %281 = tpu.concatenate %273, %278 in 1 : vector<8x32xf32>, vector<8x32xf32> -> vector<8x64xf32>
    %cst_109 = arith.constant dense<0.000000e+00> : vector<8x192xf32>
    %282 = tpu.matmul %281, %74, %cst_109 {dimension_numbers = #tpu.dot_dimension_numbers<[1], [0], [0], [1], [0, 0, 1, 1], [], []>} : vector<8x64xf32>, vector<64x192xf32>, vector<8x192xf32> -> vector<8x192xf32>
    %c32_110 = arith.constant 32 : index
    %c0_111 = arith.constant 0 : index
    %283 = vector.load %arg16[%c32_110, %c0_111] : memref<64x192xf32, #tpu.memory_space<vmem>>, vector<8x192xf32>
    %c24_112 = arith.constant 24 : index
    %c0_113 = arith.constant 0 : index
    %284 = vector.load %arg16[%c24_112, %c0_113] : memref<64x192xf32, #tpu.memory_space<vmem>>, vector<8x192xf32>
    %285 = vector.extract_strided_slice %283 {offsets = [0, 0], sizes = [8, 64], strides = [1, 1]} : vector<8x192xf32> to vector<8x64xf32>
    %286 = vector.extract_strided_slice %282 {offsets = [0, 0], sizes = [8, 64], strides = [1, 1]} : vector<8x192xf32> to vector<8x64xf32>
    %287 = arith.addf %285, %286 : vector<8x64xf32>
    %288 = arith.negf %287 : vector<8x64xf32>
    %289 = math.exp %288 : vector<8x64xf32>
    %cst_114 = arith.constant 1.000000e+00 : f32
    %290 = vector.broadcast %cst_114 : f32 to vector<8x64xf32>
    %291 = arith.addf %290, %289 : vector<8x64xf32>
    %292 = arith.divf %290, %291 : vector<8x64xf32>
    %293 = vector.extract_strided_slice %284 {offsets = [0, 96], sizes = [8, 64], strides = [1, 1]} : vector<8x192xf32> to vector<8x64xf32>
    %294 = vector.extract_strided_slice %282 {offsets = [0, 96], sizes = [8, 64], strides = [1, 1]} : vector<8x192xf32> to vector<8x64xf32>
    %295 = arith.addf %293, %294 : vector<8x64xf32>
    %296 = arith.negf %295 : vector<8x64xf32>
    %297 = math.exp %296 : vector<8x64xf32>
    %cst_115 = arith.constant 1.000000e+00 : f32
    %298 = vector.broadcast %cst_115 : f32 to vector<8x64xf32>
    %299 = arith.addf %298, %297 : vector<8x64xf32>
    %300 = arith.divf %298, %299 : vector<8x64xf32>
    %301 = vector.extract_strided_slice %283 {offsets = [0, 64], sizes = [8, 32], strides = [1, 1]} : vector<8x192xf32> to vector<8x32xf32>
    %302 = vector.extract_strided_slice %292 {offsets = [0, 0], sizes = [8, 32], strides = [1, 1]} : vector<8x64xf32> to vector<8x32xf32>
    %303 = vector.extract_strided_slice %282 {offsets = [0, 64], sizes = [8, 32], strides = [1, 1]} : vector<8x192xf32> to vector<8x32xf32>
    %304 = vector.broadcast %75 : vector<1x32xf32> to vector<8x32xf32>
    %305 = arith.addf %303, %304 : vector<8x32xf32>
    %306 = arith.mulf %302, %305 : vector<8x32xf32>
    %307 = arith.addf %301, %306 : vector<8x32xf32>
    %308 = math.tanh %307 : vector<8x32xf32>
    %309 = vector.extract_strided_slice %284 {offsets = [0, 160], sizes = [8, 32], strides = [1, 1]} : vector<8x192xf32> to vector<8x32xf32>
    %310 = vector.extract_strided_slice %300 {offsets = [0, 0], sizes = [8, 32], strides = [1, 1]} : vector<8x64xf32> to vector<8x32xf32>
    %311 = vector.extract_strided_slice %282 {offsets = [0, 160], sizes = [8, 32], strides = [1, 1]} : vector<8x192xf32> to vector<8x32xf32>
    %312 = vector.broadcast %76 : vector<1x32xf32> to vector<8x32xf32>
    %313 = arith.addf %311, %312 : vector<8x32xf32>
    %314 = arith.mulf %310, %313 : vector<8x32xf32>
    %315 = arith.addf %309, %314 : vector<8x32xf32>
    %316 = math.tanh %315 : vector<8x32xf32>
    %317 = vector.extract_strided_slice %292 {offsets = [0, 32], sizes = [8, 32], strides = [1, 1]} : vector<8x64xf32> to vector<8x32xf32>
    %318 = vector.extract_strided_slice %300 {offsets = [0, 32], sizes = [8, 32], strides = [1, 1]} : vector<8x64xf32> to vector<8x32xf32>
    %cst_116 = arith.constant 1.000000e+00 : f32
    %319 = vector.broadcast %cst_116 : f32 to vector<8x32xf32>
    %320 = arith.subf %319, %317 : vector<8x32xf32>
    %321 = arith.mulf %320, %308 : vector<8x32xf32>
    %322 = arith.mulf %317, %273 : vector<8x32xf32>
    %323 = arith.addf %321, %322 : vector<8x32xf32>
    %cst_117 = arith.constant 1.000000e+00 : f32
    %324 = vector.broadcast %cst_117 : f32 to vector<8x32xf32>
    %325 = arith.subf %324, %318 : vector<8x32xf32>
    %326 = arith.mulf %325, %316 : vector<8x32xf32>
    %327 = arith.mulf %318, %278 : vector<8x32xf32>
    %328 = arith.addf %326, %327 : vector<8x32xf32>
    %c32_118 = arith.constant 32 : index
    %c0_119 = arith.constant 0 : index
    %329 = vector.load %arg17[%c32_118, %c0_119] : memref<64x32xf32, #tpu.memory_space<vmem>>, vector<8x32xf32>
    tpu.vector_store %arg17[%c32_118, %c0_119], %323 {strides = array<i32>} : memref<64x32xf32, #tpu.memory_space<vmem>>, vector<8x32xf32>,
    %c24_120 = arith.constant 24 : index
    %c0_121 = arith.constant 0 : index
    %330 = vector.load %arg18[%c24_120, %c0_121] : memref<64x32xf32, #tpu.memory_space<vmem>>, vector<8x32xf32>
    tpu.vector_store %arg18[%c24_120, %c0_121], %328 {strides = array<i32>} : memref<64x32xf32, #tpu.memory_space<vmem>>, vector<8x32xf32>,
    %331 = tpu.concatenate %323, %328 in 1 : vector<8x32xf32>, vector<8x32xf32> -> vector<8x64xf32>
    %cst_122 = arith.constant dense<0.000000e+00> : vector<8x192xf32>
    %332 = tpu.matmul %331, %74, %cst_122 {dimension_numbers = #tpu.dot_dimension_numbers<[1], [0], [0], [1], [0, 0, 1, 1], [], []>} : vector<8x64xf32>, vector<64x192xf32>, vector<8x192xf32> -> vector<8x192xf32>
    %c40_123 = arith.constant 40 : index
    %c0_124 = arith.constant 0 : index
    %333 = vector.load %arg16[%c40_123, %c0_124] : memref<64x192xf32, #tpu.memory_space<vmem>>, vector<8x192xf32>
    %c16_125 = arith.constant 16 : index
    %c0_126 = arith.constant 0 : index
    %334 = vector.load %arg16[%c16_125, %c0_126] : memref<64x192xf32, #tpu.memory_space<vmem>>, vector<8x192xf32>
    %335 = vector.extract_strided_slice %333 {offsets = [0, 0], sizes = [8, 64], strides = [1, 1]} : vector<8x192xf32> to vector<8x64xf32>
    %336 = vector.extract_strided_slice %332 {offsets = [0, 0], sizes = [8, 64], strides = [1, 1]} : vector<8x192xf32> to vector<8x64xf32>
    %337 = arith.addf %335, %336 : vector<8x64xf32>
    %338 = arith.negf %337 : vector<8x64xf32>
    %339 = math.exp %338 : vector<8x64xf32>
    %cst_127 = arith.constant 1.000000e+00 : f32
    %340 = vector.broadcast %cst_127 : f32 to vector<8x64xf32>
    %341 = arith.addf %340, %339 : vector<8x64xf32>
    %342 = arith.divf %340, %341 : vector<8x64xf32>
    %343 = vector.extract_strided_slice %334 {offsets = [0, 96], sizes = [8, 64], strides = [1, 1]} : vector<8x192xf32> to vector<8x64xf32>
    %344 = vector.extract_strided_slice %332 {offsets = [0, 96], sizes = [8, 64], strides = [1, 1]} : vector<8x192xf32> to vector<8x64xf32>
    %345 = arith.addf %343, %344 : vector<8x64xf32>
    %346 = arith.negf %345 : vector<8x64xf32>
    %347 = math.exp %346 : vector<8x64xf32>
    %cst_128 = arith.constant 1.000000e+00 : f32
    %348 = vector.broadcast %cst_128 : f32 to vector<8x64xf32>
    %349 = arith.addf %348, %347 : vector<8x64xf32>
    %350 = arith.divf %348, %349 : vector<8x64xf32>
    %351 = vector.extract_strided_slice %333 {offsets = [0, 64], sizes = [8, 32], strides = [1, 1]} : vector<8x192xf32> to vector<8x32xf32>
    %352 = vector.extract_strided_slice %342 {offsets = [0, 0], sizes = [8, 32], strides = [1, 1]} : vector<8x64xf32> to vector<8x32xf32>
    %353 = vector.extract_strided_slice %332 {offsets = [0, 64], sizes = [8, 32], strides = [1, 1]} : vector<8x192xf32> to vector<8x32xf32>
    %354 = vector.broadcast %75 : vector<1x32xf32> to vector<8x32xf32>
    %355 = arith.addf %353, %354 : vector<8x32xf32>
    %356 = arith.mulf %352, %355 : vector<8x32xf32>
    %357 = arith.addf %351, %356 : vector<8x32xf32>
    %358 = math.tanh %357 : vector<8x32xf32>
    %359 = vector.extract_strided_slice %334 {offsets = [0, 160], sizes = [8, 32], strides = [1, 1]} : vector<8x192xf32> to vector<8x32xf32>
    %360 = vector.extract_strided_slice %350 {offsets = [0, 0], sizes = [8, 32], strides = [1, 1]} : vector<8x64xf32> to vector<8x32xf32>
    %361 = vector.extract_strided_slice %332 {offsets = [0, 160], sizes = [8, 32], strides = [1, 1]} : vector<8x192xf32> to vector<8x32xf32>
    %362 = vector.broadcast %76 : vector<1x32xf32> to vector<8x32xf32>
    %363 = arith.addf %361, %362 : vector<8x32xf32>
    %364 = arith.mulf %360, %363 : vector<8x32xf32>
    %365 = arith.addf %359, %364 : vector<8x32xf32>
    %366 = math.tanh %365 : vector<8x32xf32>
    %367 = vector.extract_strided_slice %342 {offsets = [0, 32], sizes = [8, 32], strides = [1, 1]} : vector<8x64xf32> to vector<8x32xf32>
    %368 = vector.extract_strided_slice %350 {offsets = [0, 32], sizes = [8, 32], strides = [1, 1]} : vector<8x64xf32> to vector<8x32xf32>
    %cst_129 = arith.constant 1.000000e+00 : f32
    %369 = vector.broadcast %cst_129 : f32 to vector<8x32xf32>
    %370 = arith.subf %369, %367 : vector<8x32xf32>
    %371 = arith.mulf %370, %358 : vector<8x32xf32>
    %372 = arith.mulf %367, %323 : vector<8x32xf32>
    %373 = arith.addf %371, %372 : vector<8x32xf32>
    %cst_130 = arith.constant 1.000000e+00 : f32
    %374 = vector.broadcast %cst_130 : f32 to vector<8x32xf32>
    %375 = arith.subf %374, %368 : vector<8x32xf32>
    %376 = arith.mulf %375, %366 : vector<8x32xf32>
    %377 = arith.mulf %368, %328 : vector<8x32xf32>
    %378 = arith.addf %376, %377 : vector<8x32xf32>
    %c40_131 = arith.constant 40 : index
    %c0_132 = arith.constant 0 : index
    %379 = vector.load %arg17[%c40_131, %c0_132] : memref<64x32xf32, #tpu.memory_space<vmem>>, vector<8x32xf32>
    tpu.vector_store %arg17[%c40_131, %c0_132], %373 {strides = array<i32>} : memref<64x32xf32, #tpu.memory_space<vmem>>, vector<8x32xf32>,
    %c16_133 = arith.constant 16 : index
    %c0_134 = arith.constant 0 : index
    %380 = vector.load %arg18[%c16_133, %c0_134] : memref<64x32xf32, #tpu.memory_space<vmem>>, vector<8x32xf32>
    tpu.vector_store %arg18[%c16_133, %c0_134], %378 {strides = array<i32>} : memref<64x32xf32, #tpu.memory_space<vmem>>, vector<8x32xf32>,
    %381 = tpu.concatenate %373, %378 in 1 : vector<8x32xf32>, vector<8x32xf32> -> vector<8x64xf32>
    %cst_135 = arith.constant dense<0.000000e+00> : vector<8x192xf32>
    %382 = tpu.matmul %381, %74, %cst_135 {dimension_numbers = #tpu.dot_dimension_numbers<[1], [0], [0], [1], [0, 0, 1, 1], [], []>} : vector<8x64xf32>, vector<64x192xf32>, vector<8x192xf32> -> vector<8x192xf32>
    %c48_136 = arith.constant 48 : index
    %c0_137 = arith.constant 0 : index
    %383 = vector.load %arg16[%c48_136, %c0_137] : memref<64x192xf32, #tpu.memory_space<vmem>>, vector<8x192xf32>
    %c8_138 = arith.constant 8 : index
    %c0_139 = arith.constant 0 : index
    %384 = vector.load %arg16[%c8_138, %c0_139] : memref<64x192xf32, #tpu.memory_space<vmem>>, vector<8x192xf32>
    %385 = vector.extract_strided_slice %383 {offsets = [0, 0], sizes = [8, 64], strides = [1, 1]} : vector<8x192xf32> to vector<8x64xf32>
    %386 = vector.extract_strided_slice %382 {offsets = [0, 0], sizes = [8, 64], strides = [1, 1]} : vector<8x192xf32> to vector<8x64xf32>
    %387 = arith.addf %385, %386 : vector<8x64xf32>
    %388 = arith.negf %387 : vector<8x64xf32>
    %389 = math.exp %388 : vector<8x64xf32>
    %cst_140 = arith.constant 1.000000e+00 : f32
    %390 = vector.broadcast %cst_140 : f32 to vector<8x64xf32>
    %391 = arith.addf %390, %389 : vector<8x64xf32>
    %392 = arith.divf %390, %391 : vector<8x64xf32>
    %393 = vector.extract_strided_slice %384 {offsets = [0, 96], sizes = [8, 64], strides = [1, 1]} : vector<8x192xf32> to vector<8x64xf32>
    %394 = vector.extract_strided_slice %382 {offsets = [0, 96], sizes = [8, 64], strides = [1, 1]} : vector<8x192xf32> to vector<8x64xf32>
    %395 = arith.addf %393, %394 : vector<8x64xf32>
    %396 = arith.negf %395 : vector<8x64xf32>
    %397 = math.exp %396 : vector<8x64xf32>
    %cst_141 = arith.constant 1.000000e+00 : f32
    %398 = vector.broadcast %cst_141 : f32 to vector<8x64xf32>
    %399 = arith.addf %398, %397 : vector<8x64xf32>
    %400 = arith.divf %398, %399 : vector<8x64xf32>
    %401 = vector.extract_strided_slice %383 {offsets = [0, 64], sizes = [8, 32], strides = [1, 1]} : vector<8x192xf32> to vector<8x32xf32>
    %402 = vector.extract_strided_slice %392 {offsets = [0, 0], sizes = [8, 32], strides = [1, 1]} : vector<8x64xf32> to vector<8x32xf32>
    %403 = vector.extract_strided_slice %382 {offsets = [0, 64], sizes = [8, 32], strides = [1, 1]} : vector<8x192xf32> to vector<8x32xf32>
    %404 = vector.broadcast %75 : vector<1x32xf32> to vector<8x32xf32>
    %405 = arith.addf %403, %404 : vector<8x32xf32>
    %406 = arith.mulf %402, %405 : vector<8x32xf32>
    %407 = arith.addf %401, %406 : vector<8x32xf32>
    %408 = math.tanh %407 : vector<8x32xf32>
    %409 = vector.extract_strided_slice %384 {offsets = [0, 160], sizes = [8, 32], strides = [1, 1]} : vector<8x192xf32> to vector<8x32xf32>
    %410 = vector.extract_strided_slice %400 {offsets = [0, 0], sizes = [8, 32], strides = [1, 1]} : vector<8x64xf32> to vector<8x32xf32>
    %411 = vector.extract_strided_slice %382 {offsets = [0, 160], sizes = [8, 32], strides = [1, 1]} : vector<8x192xf32> to vector<8x32xf32>
    %412 = vector.broadcast %76 : vector<1x32xf32> to vector<8x32xf32>
    %413 = arith.addf %411, %412 : vector<8x32xf32>
    %414 = arith.mulf %410, %413 : vector<8x32xf32>
    %415 = arith.addf %409, %414 : vector<8x32xf32>
    %416 = math.tanh %415 : vector<8x32xf32>
    %417 = vector.extract_strided_slice %392 {offsets = [0, 32], sizes = [8, 32], strides = [1, 1]} : vector<8x64xf32> to vector<8x32xf32>
    %418 = vector.extract_strided_slice %400 {offsets = [0, 32], sizes = [8, 32], strides = [1, 1]} : vector<8x64xf32> to vector<8x32xf32>
    %cst_142 = arith.constant 1.000000e+00 : f32
    %419 = vector.broadcast %cst_142 : f32 to vector<8x32xf32>
    %420 = arith.subf %419, %417 : vector<8x32xf32>
    %421 = arith.mulf %420, %408 : vector<8x32xf32>
    %422 = arith.mulf %417, %373 : vector<8x32xf32>
    %423 = arith.addf %421, %422 : vector<8x32xf32>
    %cst_143 = arith.constant 1.000000e+00 : f32
    %424 = vector.broadcast %cst_143 : f32 to vector<8x32xf32>
    %425 = arith.subf %424, %418 : vector<8x32xf32>
    %426 = arith.mulf %425, %416 : vector<8x32xf32>
    %427 = arith.mulf %418, %378 : vector<8x32xf32>
    %428 = arith.addf %426, %427 : vector<8x32xf32>
    %c48_144 = arith.constant 48 : index
    %c0_145 = arith.constant 0 : index
    %429 = vector.load %arg17[%c48_144, %c0_145] : memref<64x32xf32, #tpu.memory_space<vmem>>, vector<8x32xf32>
    tpu.vector_store %arg17[%c48_144, %c0_145], %423 {strides = array<i32>} : memref<64x32xf32, #tpu.memory_space<vmem>>, vector<8x32xf32>,
    %c8_146 = arith.constant 8 : index
    %c0_147 = arith.constant 0 : index
    %430 = vector.load %arg18[%c8_146, %c0_147] : memref<64x32xf32, #tpu.memory_space<vmem>>, vector<8x32xf32>
    tpu.vector_store %arg18[%c8_146, %c0_147], %428 {strides = array<i32>} : memref<64x32xf32, #tpu.memory_space<vmem>>, vector<8x32xf32>,
    %431 = tpu.concatenate %423, %428 in 1 : vector<8x32xf32>, vector<8x32xf32> -> vector<8x64xf32>
    %cst_148 = arith.constant dense<0.000000e+00> : vector<8x192xf32>
    %432 = tpu.matmul %431, %74, %cst_148 {dimension_numbers = #tpu.dot_dimension_numbers<[1], [0], [0], [1], [0, 0, 1, 1], [], []>} : vector<8x64xf32>, vector<64x192xf32>, vector<8x192xf32> -> vector<8x192xf32>
    %c56_149 = arith.constant 56 : index
    %c0_150 = arith.constant 0 : index
    %433 = vector.load %arg16[%c56_149, %c0_150] : memref<64x192xf32, #tpu.memory_space<vmem>>, vector<8x192xf32>
    %c0_151 = arith.constant 0 : index
    %c0_152 = arith.constant 0 : index
    %434 = vector.load %arg16[%c0_151, %c0_152] : memref<64x192xf32, #tpu.memory_space<vmem>>, vector<8x192xf32>
    %435 = vector.extract_strided_slice %433 {offsets = [0, 0], sizes = [8, 64], strides = [1, 1]} : vector<8x192xf32> to vector<8x64xf32>
    %436 = vector.extract_strided_slice %432 {offsets = [0, 0], sizes = [8, 64], strides = [1, 1]} : vector<8x192xf32> to vector<8x64xf32>
    %437 = arith.addf %435, %436 : vector<8x64xf32>
    %438 = arith.negf %437 : vector<8x64xf32>
    %439 = math.exp %438 : vector<8x64xf32>
    %cst_153 = arith.constant 1.000000e+00 : f32
    %440 = vector.broadcast %cst_153 : f32 to vector<8x64xf32>
    %441 = arith.addf %440, %439 : vector<8x64xf32>
    %442 = arith.divf %440, %441 : vector<8x64xf32>
    %443 = vector.extract_strided_slice %434 {offsets = [0, 96], sizes = [8, 64], strides = [1, 1]} : vector<8x192xf32> to vector<8x64xf32>
    %444 = vector.extract_strided_slice %432 {offsets = [0, 96], sizes = [8, 64], strides = [1, 1]} : vector<8x192xf32> to vector<8x64xf32>
    %445 = arith.addf %443, %444 : vector<8x64xf32>
    %446 = arith.negf %445 : vector<8x64xf32>
    %447 = math.exp %446 : vector<8x64xf32>
    %cst_154 = arith.constant 1.000000e+00 : f32
    %448 = vector.broadcast %cst_154 : f32 to vector<8x64xf32>
    %449 = arith.addf %448, %447 : vector<8x64xf32>
    %450 = arith.divf %448, %449 : vector<8x64xf32>
    %451 = vector.extract_strided_slice %433 {offsets = [0, 64], sizes = [8, 32], strides = [1, 1]} : vector<8x192xf32> to vector<8x32xf32>
    %452 = vector.extract_strided_slice %442 {offsets = [0, 0], sizes = [8, 32], strides = [1, 1]} : vector<8x64xf32> to vector<8x32xf32>
    %453 = vector.extract_strided_slice %432 {offsets = [0, 64], sizes = [8, 32], strides = [1, 1]} : vector<8x192xf32> to vector<8x32xf32>
    %454 = vector.broadcast %75 : vector<1x32xf32> to vector<8x32xf32>
    %455 = arith.addf %453, %454 : vector<8x32xf32>
    %456 = arith.mulf %452, %455 : vector<8x32xf32>
    %457 = arith.addf %451, %456 : vector<8x32xf32>
    %458 = math.tanh %457 : vector<8x32xf32>
    %459 = vector.extract_strided_slice %434 {offsets = [0, 160], sizes = [8, 32], strides = [1, 1]} : vector<8x192xf32> to vector<8x32xf32>
    %460 = vector.extract_strided_slice %450 {offsets = [0, 0], sizes = [8, 32], strides = [1, 1]} : vector<8x64xf32> to vector<8x32xf32>
    %461 = vector.extract_strided_slice %432 {offsets = [0, 160], sizes = [8, 32], strides = [1, 1]} : vector<8x192xf32> to vector<8x32xf32>
    %462 = vector.broadcast %76 : vector<1x32xf32> to vector<8x32xf32>
    %463 = arith.addf %461, %462 : vector<8x32xf32>
    %464 = arith.mulf %460, %463 : vector<8x32xf32>
    %465 = arith.addf %459, %464 : vector<8x32xf32>
    %466 = math.tanh %465 : vector<8x32xf32>
    %467 = vector.extract_strided_slice %442 {offsets = [0, 32], sizes = [8, 32], strides = [1, 1]} : vector<8x64xf32> to vector<8x32xf32>
    %468 = vector.extract_strided_slice %450 {offsets = [0, 32], sizes = [8, 32], strides = [1, 1]} : vector<8x64xf32> to vector<8x32xf32>
    %cst_155 = arith.constant 1.000000e+00 : f32
    %469 = vector.broadcast %cst_155 : f32 to vector<8x32xf32>
    %470 = arith.subf %469, %467 : vector<8x32xf32>
    %471 = arith.mulf %470, %458 : vector<8x32xf32>
    %472 = arith.mulf %467, %423 : vector<8x32xf32>
    %473 = arith.addf %471, %472 : vector<8x32xf32>
    %cst_156 = arith.constant 1.000000e+00 : f32
    %474 = vector.broadcast %cst_156 : f32 to vector<8x32xf32>
    %475 = arith.subf %474, %468 : vector<8x32xf32>
    %476 = arith.mulf %475, %466 : vector<8x32xf32>
    %477 = arith.mulf %468, %428 : vector<8x32xf32>
    %478 = arith.addf %476, %477 : vector<8x32xf32>
    %c56_157 = arith.constant 56 : index
    %c0_158 = arith.constant 0 : index
    %479 = vector.load %arg17[%c56_157, %c0_158] : memref<64x32xf32, #tpu.memory_space<vmem>>, vector<8x32xf32>
    tpu.vector_store %arg17[%c56_157, %c0_158], %473 {strides = array<i32>} : memref<64x32xf32, #tpu.memory_space<vmem>>, vector<8x32xf32>,
    %c0_159 = arith.constant 0 : index
    %c0_160 = arith.constant 0 : index
    %480 = vector.load %arg18[%c0_159, %c0_160] : memref<64x32xf32, #tpu.memory_space<vmem>>, vector<8x32xf32>
    tpu.vector_store %arg18[%c0_159, %c0_160], %478 {strides = array<i32>} : memref<64x32xf32, #tpu.memory_space<vmem>>, vector<8x32xf32>,
    %c0_161 = arith.constant 0 : index
    %c0_162 = arith.constant 0 : index
    %c0_163 = arith.constant 0 : index
    %481 = vector.load %arg14[%c0_161, %c0_162, %c0_163] : memref<4x8x32xf32, #tpu.memory_space<vmem>>, vector<1x8x32xf32>
    %482 = vector.shape_cast %481 : vector<1x8x32xf32> to vector<8x32xf32>
    %483 = vector.shape_cast %473 : vector<8x32xf32> to vector<1x8x32xf32>
    tpu.vector_store %arg14[%c0_161, %c0_162, %c0_163], %483 {strides = array<i32>} : memref<4x8x32xf32, #tpu.memory_space<vmem>>, vector<1x8x32xf32>,
    %c1_164 = arith.constant 1 : index
    %c0_165 = arith.constant 0 : index
    %c0_166 = arith.constant 0 : index
    %484 = vector.load %arg14[%c1_164, %c0_165, %c0_166] : memref<4x8x32xf32, #tpu.memory_space<vmem>>, vector<1x8x32xf32>
    %485 = vector.shape_cast %484 : vector<1x8x32xf32> to vector<8x32xf32>
    %486 = vector.shape_cast %478 : vector<8x32xf32> to vector<1x8x32xf32>
    tpu.vector_store %arg14[%c1_164, %c0_165, %c0_166], %486 {strides = array<i32>} : memref<4x8x32xf32, #tpu.memory_space<vmem>>, vector<1x8x32xf32>,
    %c0_167 = arith.constant 0 : index
    %c0_168 = arith.constant 0 : index
    %487 = vector.load %arg6[%c0_167, %c0_168] : memref<64x192xf32, #tpu.memory_space<vmem>>, vector<64x192xf32>
    %c0_169 = arith.constant 0 : index
    %c0_170 = arith.constant 0 : index
    %488 = vector.load %arg17[%c0_169, %c0_170] : memref<64x32xf32, #tpu.memory_space<vmem>>, vector<64x32xf32>
    %489 = vector.extract_strided_slice %487 {offsets = [0, 0], sizes = [32, 192], strides = [1, 1]} : vector<64x192xf32> to vector<32x192xf32>
    %cst_171 = arith.constant dense<0.000000e+00> : vector<64x192xf32>
    %490 = tpu.matmul %488, %489, %cst_171 {dimension_numbers = #tpu.dot_dimension_numbers<[1], [0], [0], [1], [0, 0, 1, 1], [], []>} : vector<64x32xf32>, vector<32x192xf32>, vector<64x192xf32> -> vector<64x192xf32>
    %c0_172 = arith.constant 0 : index
    %c0_173 = arith.constant 0 : index
    %491 = vector.load %arg18[%c0_172, %c0_173] : memref<64x32xf32, #tpu.memory_space<vmem>>, vector<64x32xf32>
    %492 = vector.extract_strided_slice %487 {offsets = [32, 0], sizes = [32, 192], strides = [1, 1]} : vector<64x192xf32> to vector<32x192xf32>
    %cst_174 = arith.constant dense<0.000000e+00> : vector<64x192xf32>
    %493 = tpu.matmul %491, %492, %cst_174 {dimension_numbers = #tpu.dot_dimension_numbers<[1], [0], [0], [1], [0, 0, 1, 1], [], []>} : vector<64x32xf32>, vector<32x192xf32>, vector<64x192xf32> -> vector<64x192xf32>
    %494 = arith.addf %490, %493 : vector<64x192xf32>
    %c0_175 = arith.constant 0 : index
    %c0_176 = arith.constant 0 : index
    %495 = vector.load %arg8[%c0_175, %c0_176] : memref<1x192xf32, #tpu.memory_space<vmem>>, vector<1x192xf32>
    %496 = vector.broadcast %495 : vector<1x192xf32> to vector<64x192xf32>
    %497 = arith.addf %494, %496 : vector<64x192xf32>
    %c0_177 = arith.constant 0 : index
    %c0_178 = arith.constant 0 : index
    %498 = vector.load %arg16[%c0_177, %c0_178] : memref<64x192xf32, #tpu.memory_space<vmem>>, vector<64x192xf32>
    tpu.vector_store %arg16[%c0_177, %c0_178], %497 {strides = array<i32>} : memref<64x192xf32, #tpu.memory_space<vmem>>, vector<64x192xf32>,
    %c0_179 = arith.constant 0 : index
    %c0_180 = arith.constant 0 : index
    %499 = vector.load %arg9[%c0_179, %c0_180] : memref<1x64xf32, #tpu.memory_space<vmem>>, vector<1x64xf32>
    %c0_181 = arith.constant 0 : index
    %c0_182 = arith.constant 0 : index
    %500 = vector.load %arg7[%c0_181, %c0_182] : memref<64x192xf32, #tpu.memory_space<vmem>>, vector<64x192xf32>
    %501 = vector.extract_strided_slice %499 {offsets = [0, 0], sizes = [1, 32], strides = [1, 1]} : vector<1x64xf32> to vector<1x32xf32>
    %502 = vector.extract_strided_slice %499 {offsets = [0, 32], sizes = [1, 32], strides = [1, 1]} : vector<1x64xf32> to vector<1x32xf32>
    %c2_183 = arith.constant 2 : index
    %c0_184 = arith.constant 0 : index
    %c0_185 = arith.constant 0 : index
    %503 = vector.load %arg10[%c2_183, %c0_184, %c0_185] : memref<4x8x32xf32, #tpu.memory_space<vmem>>, vector<1x8x32xf32>
    %504 = vector.shape_cast %503 : vector<1x8x32xf32> to vector<8x32xf32>
    %c3_186 = arith.constant 3 : index
    %c0_187 = arith.constant 0 : index
    %c0_188 = arith.constant 0 : index
    %505 = vector.load %arg10[%c3_186, %c0_187, %c0_188] : memref<4x8x32xf32, #tpu.memory_space<vmem>>, vector<1x8x32xf32>
    %506 = vector.shape_cast %505 : vector<1x8x32xf32> to vector<8x32xf32>
    %507 = tpu.concatenate %504, %506 in 1 : vector<8x32xf32>, vector<8x32xf32> -> vector<8x64xf32>
    %cst_189 = arith.constant dense<0.000000e+00> : vector<8x192xf32>
    %508 = tpu.matmul %507, %500, %cst_189 {dimension_numbers = #tpu.dot_dimension_numbers<[1], [0], [0], [1], [0, 0, 1, 1], [], []>} : vector<8x64xf32>, vector<64x192xf32>, vector<8x192xf32> -> vector<8x192xf32>
    %c0_190 = arith.constant 0 : index
    %c0_191 = arith.constant 0 : index
    %509 = vector.load %arg16[%c0_190, %c0_191] : memref<64x192xf32, #tpu.memory_space<vmem>>, vector<8x192xf32>
    %c56_192 = arith.constant 56 : index
    %c0_193 = arith.constant 0 : index
    %510 = vector.load %arg16[%c56_192, %c0_193] : memref<64x192xf32, #tpu.memory_space<vmem>>, vector<8x192xf32>
    %511 = vector.extract_strided_slice %509 {offsets = [0, 0], sizes = [8, 64], strides = [1, 1]} : vector<8x192xf32> to vector<8x64xf32>
    %512 = vector.extract_strided_slice %508 {offsets = [0, 0], sizes = [8, 64], strides = [1, 1]} : vector<8x192xf32> to vector<8x64xf32>
    %513 = arith.addf %511, %512 : vector<8x64xf32>
    %514 = arith.negf %513 : vector<8x64xf32>
    %515 = math.exp %514 : vector<8x64xf32>
    %cst_194 = arith.constant 1.000000e+00 : f32
    %516 = vector.broadcast %cst_194 : f32 to vector<8x64xf32>
    %517 = arith.addf %516, %515 : vector<8x64xf32>
    %518 = arith.divf %516, %517 : vector<8x64xf32>
    %519 = vector.extract_strided_slice %510 {offsets = [0, 96], sizes = [8, 64], strides = [1, 1]} : vector<8x192xf32> to vector<8x64xf32>
    %520 = vector.extract_strided_slice %508 {offsets = [0, 96], sizes = [8, 64], strides = [1, 1]} : vector<8x192xf32> to vector<8x64xf32>
    %521 = arith.addf %519, %520 : vector<8x64xf32>
    %522 = arith.negf %521 : vector<8x64xf32>
    %523 = math.exp %522 : vector<8x64xf32>
    %cst_195 = arith.constant 1.000000e+00 : f32
    %524 = vector.broadcast %cst_195 : f32 to vector<8x64xf32>
    %525 = arith.addf %524, %523 : vector<8x64xf32>
    %526 = arith.divf %524, %525 : vector<8x64xf32>
    %527 = vector.extract_strided_slice %509 {offsets = [0, 64], sizes = [8, 32], strides = [1, 1]} : vector<8x192xf32> to vector<8x32xf32>
    %528 = vector.extract_strided_slice %518 {offsets = [0, 0], sizes = [8, 32], strides = [1, 1]} : vector<8x64xf32> to vector<8x32xf32>
    %529 = vector.extract_strided_slice %508 {offsets = [0, 64], sizes = [8, 32], strides = [1, 1]} : vector<8x192xf32> to vector<8x32xf32>
    %530 = vector.broadcast %501 : vector<1x32xf32> to vector<8x32xf32>
    %531 = arith.addf %529, %530 : vector<8x32xf32>
    %532 = arith.mulf %528, %531 : vector<8x32xf32>
    %533 = arith.addf %527, %532 : vector<8x32xf32>
    %534 = math.tanh %533 : vector<8x32xf32>
    %535 = vector.extract_strided_slice %510 {offsets = [0, 160], sizes = [8, 32], strides = [1, 1]} : vector<8x192xf32> to vector<8x32xf32>
    %536 = vector.extract_strided_slice %526 {offsets = [0, 0], sizes = [8, 32], strides = [1, 1]} : vector<8x64xf32> to vector<8x32xf32>
    %537 = vector.extract_strided_slice %508 {offsets = [0, 160], sizes = [8, 32], strides = [1, 1]} : vector<8x192xf32> to vector<8x32xf32>
    %538 = vector.broadcast %502 : vector<1x32xf32> to vector<8x32xf32>
    %539 = arith.addf %537, %538 : vector<8x32xf32>
    %540 = arith.mulf %536, %539 : vector<8x32xf32>
    %541 = arith.addf %535, %540 : vector<8x32xf32>
    %542 = math.tanh %541 : vector<8x32xf32>
    %543 = vector.extract_strided_slice %518 {offsets = [0, 32], sizes = [8, 32], strides = [1, 1]} : vector<8x64xf32> to vector<8x32xf32>
    %544 = vector.extract_strided_slice %526 {offsets = [0, 32], sizes = [8, 32], strides = [1, 1]} : vector<8x64xf32> to vector<8x32xf32>
    %cst_196 = arith.constant 1.000000e+00 : f32
    %545 = vector.broadcast %cst_196 : f32 to vector<8x32xf32>
    %546 = arith.subf %545, %543 : vector<8x32xf32>
    %547 = arith.mulf %546, %534 : vector<8x32xf32>
    %548 = arith.mulf %543, %504 : vector<8x32xf32>
    %549 = arith.addf %547, %548 : vector<8x32xf32>
    %cst_197 = arith.constant 1.000000e+00 : f32
    %550 = vector.broadcast %cst_197 : f32 to vector<8x32xf32>
    %551 = arith.subf %550, %544 : vector<8x32xf32>
    %552 = arith.mulf %551, %542 : vector<8x32xf32>
    %553 = arith.mulf %544, %506 : vector<8x32xf32>
    %554 = arith.addf %552, %553 : vector<8x32xf32>
    %555 = tpu.concatenate %549, %554 in 1 : vector<8x32xf32>, vector<8x32xf32> -> vector<8x64xf32>
    %cst_198 = arith.constant dense<0.000000e+00> : vector<8x192xf32>
    %556 = tpu.matmul %555, %500, %cst_198 {dimension_numbers = #tpu.dot_dimension_numbers<[1], [0], [0], [1], [0, 0, 1, 1], [], []>} : vector<8x64xf32>, vector<64x192xf32>, vector<8x192xf32> -> vector<8x192xf32>
    %c8_199 = arith.constant 8 : index
    %c0_200 = arith.constant 0 : index
    %557 = vector.load %arg16[%c8_199, %c0_200] : memref<64x192xf32, #tpu.memory_space<vmem>>, vector<8x192xf32>
    %c48_201 = arith.constant 48 : index
    %c0_202 = arith.constant 0 : index
    %558 = vector.load %arg16[%c48_201, %c0_202] : memref<64x192xf32, #tpu.memory_space<vmem>>, vector<8x192xf32>
    %559 = vector.extract_strided_slice %557 {offsets = [0, 0], sizes = [8, 64], strides = [1, 1]} : vector<8x192xf32> to vector<8x64xf32>
    %560 = vector.extract_strided_slice %556 {offsets = [0, 0], sizes = [8, 64], strides = [1, 1]} : vector<8x192xf32> to vector<8x64xf32>
    %561 = arith.addf %559, %560 : vector<8x64xf32>
    %562 = arith.negf %561 : vector<8x64xf32>
    %563 = math.exp %562 : vector<8x64xf32>
    %cst_203 = arith.constant 1.000000e+00 : f32
    %564 = vector.broadcast %cst_203 : f32 to vector<8x64xf32>
    %565 = arith.addf %564, %563 : vector<8x64xf32>
    %566 = arith.divf %564, %565 : vector<8x64xf32>
    %567 = vector.extract_strided_slice %558 {offsets = [0, 96], sizes = [8, 64], strides = [1, 1]} : vector<8x192xf32> to vector<8x64xf32>
    %568 = vector.extract_strided_slice %556 {offsets = [0, 96], sizes = [8, 64], strides = [1, 1]} : vector<8x192xf32> to vector<8x64xf32>
    %569 = arith.addf %567, %568 : vector<8x64xf32>
    %570 = arith.negf %569 : vector<8x64xf32>
    %571 = math.exp %570 : vector<8x64xf32>
    %cst_204 = arith.constant 1.000000e+00 : f32
    %572 = vector.broadcast %cst_204 : f32 to vector<8x64xf32>
    %573 = arith.addf %572, %571 : vector<8x64xf32>
    %574 = arith.divf %572, %573 : vector<8x64xf32>
    %575 = vector.extract_strided_slice %557 {offsets = [0, 64], sizes = [8, 32], strides = [1, 1]} : vector<8x192xf32> to vector<8x32xf32>
    %576 = vector.extract_strided_slice %566 {offsets = [0, 0], sizes = [8, 32], strides = [1, 1]} : vector<8x64xf32> to vector<8x32xf32>
    %577 = vector.extract_strided_slice %556 {offsets = [0, 64], sizes = [8, 32], strides = [1, 1]} : vector<8x192xf32> to vector<8x32xf32>
    %578 = vector.broadcast %501 : vector<1x32xf32> to vector<8x32xf32>
    %579 = arith.addf %577, %578 : vector<8x32xf32>
    %580 = arith.mulf %576, %579 : vector<8x32xf32>
    %581 = arith.addf %575, %580 : vector<8x32xf32>
    %582 = math.tanh %581 : vector<8x32xf32>
    %583 = vector.extract_strided_slice %558 {offsets = [0, 160], sizes = [8, 32], strides = [1, 1]} : vector<8x192xf32> to vector<8x32xf32>
    %584 = vector.extract_strided_slice %574 {offsets = [0, 0], sizes = [8, 32], strides = [1, 1]} : vector<8x64xf32> to vector<8x32xf32>
    %585 = vector.extract_strided_slice %556 {offsets = [0, 160], sizes = [8, 32], strides = [1, 1]} : vector<8x192xf32> to vector<8x32xf32>
    %586 = vector.broadcast %502 : vector<1x32xf32> to vector<8x32xf32>
    %587 = arith.addf %585, %586 : vector<8x32xf32>
    %588 = arith.mulf %584, %587 : vector<8x32xf32>
    %589 = arith.addf %583, %588 : vector<8x32xf32>
    %590 = math.tanh %589 : vector<8x32xf32>
    %591 = vector.extract_strided_slice %566 {offsets = [0, 32], sizes = [8, 32], strides = [1, 1]} : vector<8x64xf32> to vector<8x32xf32>
    %592 = vector.extract_strided_slice %574 {offsets = [0, 32], sizes = [8, 32], strides = [1, 1]} : vector<8x64xf32> to vector<8x32xf32>
    %cst_205 = arith.constant 1.000000e+00 : f32
    %593 = vector.broadcast %cst_205 : f32 to vector<8x32xf32>
    %594 = arith.subf %593, %591 : vector<8x32xf32>
    %595 = arith.mulf %594, %582 : vector<8x32xf32>
    %596 = arith.mulf %591, %549 : vector<8x32xf32>
    %597 = arith.addf %595, %596 : vector<8x32xf32>
    %cst_206 = arith.constant 1.000000e+00 : f32
    %598 = vector.broadcast %cst_206 : f32 to vector<8x32xf32>
    %599 = arith.subf %598, %592 : vector<8x32xf32>
    %600 = arith.mulf %599, %590 : vector<8x32xf32>
    %601 = arith.mulf %592, %554 : vector<8x32xf32>
    %602 = arith.addf %600, %601 : vector<8x32xf32>
    %603 = tpu.concatenate %597, %602 in 1 : vector<8x32xf32>, vector<8x32xf32> -> vector<8x64xf32>
    %cst_207 = arith.constant dense<0.000000e+00> : vector<8x192xf32>
    %604 = tpu.matmul %603, %500, %cst_207 {dimension_numbers = #tpu.dot_dimension_numbers<[1], [0], [0], [1], [0, 0, 1, 1], [], []>} : vector<8x64xf32>, vector<64x192xf32>, vector<8x192xf32> -> vector<8x192xf32>
    %c16_208 = arith.constant 16 : index
    %c0_209 = arith.constant 0 : index
    %605 = vector.load %arg16[%c16_208, %c0_209] : memref<64x192xf32, #tpu.memory_space<vmem>>, vector<8x192xf32>
    %c40_210 = arith.constant 40 : index
    %c0_211 = arith.constant 0 : index
    %606 = vector.load %arg16[%c40_210, %c0_211] : memref<64x192xf32, #tpu.memory_space<vmem>>, vector<8x192xf32>
    %607 = vector.extract_strided_slice %605 {offsets = [0, 0], sizes = [8, 64], strides = [1, 1]} : vector<8x192xf32> to vector<8x64xf32>
    %608 = vector.extract_strided_slice %604 {offsets = [0, 0], sizes = [8, 64], strides = [1, 1]} : vector<8x192xf32> to vector<8x64xf32>
    %609 = arith.addf %607, %608 : vector<8x64xf32>
    %610 = arith.negf %609 : vector<8x64xf32>
    %611 = math.exp %610 : vector<8x64xf32>
    %cst_212 = arith.constant 1.000000e+00 : f32
    %612 = vector.broadcast %cst_212 : f32 to vector<8x64xf32>
    %613 = arith.addf %612, %611 : vector<8x64xf32>
    %614 = arith.divf %612, %613 : vector<8x64xf32>
    %615 = vector.extract_strided_slice %606 {offsets = [0, 96], sizes = [8, 64], strides = [1, 1]} : vector<8x192xf32> to vector<8x64xf32>
    %616 = vector.extract_strided_slice %604 {offsets = [0, 96], sizes = [8, 64], strides = [1, 1]} : vector<8x192xf32> to vector<8x64xf32>
    %617 = arith.addf %615, %616 : vector<8x64xf32>
    %618 = arith.negf %617 : vector<8x64xf32>
    %619 = math.exp %618 : vector<8x64xf32>
    %cst_213 = arith.constant 1.000000e+00 : f32
    %620 = vector.broadcast %cst_213 : f32 to vector<8x64xf32>
    %621 = arith.addf %620, %619 : vector<8x64xf32>
    %622 = arith.divf %620, %621 : vector<8x64xf32>
    %623 = vector.extract_strided_slice %605 {offsets = [0, 64], sizes = [8, 32], strides = [1, 1]} : vector<8x192xf32> to vector<8x32xf32>
    %624 = vector.extract_strided_slice %614 {offsets = [0, 0], sizes = [8, 32], strides = [1, 1]} : vector<8x64xf32> to vector<8x32xf32>
    %625 = vector.extract_strided_slice %604 {offsets = [0, 64], sizes = [8, 32], strides = [1, 1]} : vector<8x192xf32> to vector<8x32xf32>
    %626 = vector.broadcast %501 : vector<1x32xf32> to vector<8x32xf32>
    %627 = arith.addf %625, %626 : vector<8x32xf32>
    %628 = arith.mulf %624, %627 : vector<8x32xf32>
    %629 = arith.addf %623, %628 : vector<8x32xf32>
    %630 = math.tanh %629 : vector<8x32xf32>
    %631 = vector.extract_strided_slice %606 {offsets = [0, 160], sizes = [8, 32], strides = [1, 1]} : vector<8x192xf32> to vector<8x32xf32>
    %632 = vector.extract_strided_slice %622 {offsets = [0, 0], sizes = [8, 32], strides = [1, 1]} : vector<8x64xf32> to vector<8x32xf32>
    %633 = vector.extract_strided_slice %604 {offsets = [0, 160], sizes = [8, 32], strides = [1, 1]} : vector<8x192xf32> to vector<8x32xf32>
    %634 = vector.broadcast %502 : vector<1x32xf32> to vector<8x32xf32>
    %635 = arith.addf %633, %634 : vector<8x32xf32>
    %636 = arith.mulf %632, %635 : vector<8x32xf32>
    %637 = arith.addf %631, %636 : vector<8x32xf32>
    %638 = math.tanh %637 : vector<8x32xf32>
    %639 = vector.extract_strided_slice %614 {offsets = [0, 32], sizes = [8, 32], strides = [1, 1]} : vector<8x64xf32> to vector<8x32xf32>
    %640 = vector.extract_strided_slice %622 {offsets = [0, 32], sizes = [8, 32], strides = [1, 1]} : vector<8x64xf32> to vector<8x32xf32>
    %cst_214 = arith.constant 1.000000e+00 : f32
    %641 = vector.broadcast %cst_214 : f32 to vector<8x32xf32>
    %642 = arith.subf %641, %639 : vector<8x32xf32>
    %643 = arith.mulf %642, %630 : vector<8x32xf32>
    %644 = arith.mulf %639, %597 : vector<8x32xf32>
    %645 = arith.addf %643, %644 : vector<8x32xf32>
    %cst_215 = arith.constant 1.000000e+00 : f32
    %646 = vector.broadcast %cst_215 : f32 to vector<8x32xf32>
    %647 = arith.subf %646, %640 : vector<8x32xf32>
    %648 = arith.mulf %647, %638 : vector<8x32xf32>
    %649 = arith.mulf %640, %602 : vector<8x32xf32>
    %650 = arith.addf %648, %649 : vector<8x32xf32>
    %651 = tpu.concatenate %645, %650 in 1 : vector<8x32xf32>, vector<8x32xf32> -> vector<8x64xf32>
    %cst_216 = arith.constant dense<0.000000e+00> : vector<8x192xf32>
    %652 = tpu.matmul %651, %500, %cst_216 {dimension_numbers = #tpu.dot_dimension_numbers<[1], [0], [0], [1], [0, 0, 1, 1], [], []>} : vector<8x64xf32>, vector<64x192xf32>, vector<8x192xf32> -> vector<8x192xf32>
    %c24_217 = arith.constant 24 : index
    %c0_218 = arith.constant 0 : index
    %653 = vector.load %arg16[%c24_217, %c0_218] : memref<64x192xf32, #tpu.memory_space<vmem>>, vector<8x192xf32>
    %c32_219 = arith.constant 32 : index
    %c0_220 = arith.constant 0 : index
    %654 = vector.load %arg16[%c32_219, %c0_220] : memref<64x192xf32, #tpu.memory_space<vmem>>, vector<8x192xf32>
    %655 = vector.extract_strided_slice %653 {offsets = [0, 0], sizes = [8, 64], strides = [1, 1]} : vector<8x192xf32> to vector<8x64xf32>
    %656 = vector.extract_strided_slice %652 {offsets = [0, 0], sizes = [8, 64], strides = [1, 1]} : vector<8x192xf32> to vector<8x64xf32>
    %657 = arith.addf %655, %656 : vector<8x64xf32>
    %658 = arith.negf %657 : vector<8x64xf32>
    %659 = math.exp %658 : vector<8x64xf32>
    %cst_221 = arith.constant 1.000000e+00 : f32
    %660 = vector.broadcast %cst_221 : f32 to vector<8x64xf32>
    %661 = arith.addf %660, %659 : vector<8x64xf32>
    %662 = arith.divf %660, %661 : vector<8x64xf32>
    %663 = vector.extract_strided_slice %654 {offsets = [0, 96], sizes = [8, 64], strides = [1, 1]} : vector<8x192xf32> to vector<8x64xf32>
    %664 = vector.extract_strided_slice %652 {offsets = [0, 96], sizes = [8, 64], strides = [1, 1]} : vector<8x192xf32> to vector<8x64xf32>
    %665 = arith.addf %663, %664 : vector<8x64xf32>
    %666 = arith.negf %665 : vector<8x64xf32>
    %667 = math.exp %666 : vector<8x64xf32>
    %cst_222 = arith.constant 1.000000e+00 : f32
    %668 = vector.broadcast %cst_222 : f32 to vector<8x64xf32>
    %669 = arith.addf %668, %667 : vector<8x64xf32>
    %670 = arith.divf %668, %669 : vector<8x64xf32>
    %671 = vector.extract_strided_slice %653 {offsets = [0, 64], sizes = [8, 32], strides = [1, 1]} : vector<8x192xf32> to vector<8x32xf32>
    %672 = vector.extract_strided_slice %662 {offsets = [0, 0], sizes = [8, 32], strides = [1, 1]} : vector<8x64xf32> to vector<8x32xf32>
    %673 = vector.extract_strided_slice %652 {offsets = [0, 64], sizes = [8, 32], strides = [1, 1]} : vector<8x192xf32> to vector<8x32xf32>
    %674 = vector.broadcast %501 : vector<1x32xf32> to vector<8x32xf32>
    %675 = arith.addf %673, %674 : vector<8x32xf32>
    %676 = arith.mulf %672, %675 : vector<8x32xf32>
    %677 = arith.addf %671, %676 : vector<8x32xf32>
    %678 = math.tanh %677 : vector<8x32xf32>
    %679 = vector.extract_strided_slice %654 {offsets = [0, 160], sizes = [8, 32], strides = [1, 1]} : vector<8x192xf32> to vector<8x32xf32>
    %680 = vector.extract_strided_slice %670 {offsets = [0, 0], sizes = [8, 32], strides = [1, 1]} : vector<8x64xf32> to vector<8x32xf32>
    %681 = vector.extract_strided_slice %652 {offsets = [0, 160], sizes = [8, 32], strides = [1, 1]} : vector<8x192xf32> to vector<8x32xf32>
    %682 = vector.broadcast %502 : vector<1x32xf32> to vector<8x32xf32>
    %683 = arith.addf %681, %682 : vector<8x32xf32>
    %684 = arith.mulf %680, %683 : vector<8x32xf32>
    %685 = arith.addf %679, %684 : vector<8x32xf32>
    %686 = math.tanh %685 : vector<8x32xf32>
    %687 = vector.extract_strided_slice %662 {offsets = [0, 32], sizes = [8, 32], strides = [1, 1]} : vector<8x64xf32> to vector<8x32xf32>
    %688 = vector.extract_strided_slice %670 {offsets = [0, 32], sizes = [8, 32], strides = [1, 1]} : vector<8x64xf32> to vector<8x32xf32>
    %cst_223 = arith.constant 1.000000e+00 : f32
    %689 = vector.broadcast %cst_223 : f32 to vector<8x32xf32>
    %690 = arith.subf %689, %687 : vector<8x32xf32>
    %691 = arith.mulf %690, %678 : vector<8x32xf32>
    %692 = arith.mulf %687, %645 : vector<8x32xf32>
    %693 = arith.addf %691, %692 : vector<8x32xf32>
    %cst_224 = arith.constant 1.000000e+00 : f32
    %694 = vector.broadcast %cst_224 : f32 to vector<8x32xf32>
    %695 = arith.subf %694, %688 : vector<8x32xf32>
    %696 = arith.mulf %695, %686 : vector<8x32xf32>
    %697 = arith.mulf %688, %650 : vector<8x32xf32>
    %698 = arith.addf %696, %697 : vector<8x32xf32>
    %699 = tpu.concatenate %693, %698 in 1 : vector<8x32xf32>, vector<8x32xf32> -> vector<8x64xf32>
    %cst_225 = arith.constant dense<0.000000e+00> : vector<8x192xf32>
    %700 = tpu.matmul %699, %500, %cst_225 {dimension_numbers = #tpu.dot_dimension_numbers<[1], [0], [0], [1], [0, 0, 1, 1], [], []>} : vector<8x64xf32>, vector<64x192xf32>, vector<8x192xf32> -> vector<8x192xf32>
    %c32_226 = arith.constant 32 : index
    %c0_227 = arith.constant 0 : index
    %701 = vector.load %arg16[%c32_226, %c0_227] : memref<64x192xf32, #tpu.memory_space<vmem>>, vector<8x192xf32>
    %c24_228 = arith.constant 24 : index
    %c0_229 = arith.constant 0 : index
    %702 = vector.load %arg16[%c24_228, %c0_229] : memref<64x192xf32, #tpu.memory_space<vmem>>, vector<8x192xf32>
    %703 = vector.extract_strided_slice %701 {offsets = [0, 0], sizes = [8, 64], strides = [1, 1]} : vector<8x192xf32> to vector<8x64xf32>
    %704 = vector.extract_strided_slice %700 {offsets = [0, 0], sizes = [8, 64], strides = [1, 1]} : vector<8x192xf32> to vector<8x64xf32>
    %705 = arith.addf %703, %704 : vector<8x64xf32>
    %706 = arith.negf %705 : vector<8x64xf32>
    %707 = math.exp %706 : vector<8x64xf32>
    %cst_230 = arith.constant 1.000000e+00 : f32
    %708 = vector.broadcast %cst_230 : f32 to vector<8x64xf32>
    %709 = arith.addf %708, %707 : vector<8x64xf32>
    %710 = arith.divf %708, %709 : vector<8x64xf32>
    %711 = vector.extract_strided_slice %702 {offsets = [0, 96], sizes = [8, 64], strides = [1, 1]} : vector<8x192xf32> to vector<8x64xf32>
    %712 = vector.extract_strided_slice %700 {offsets = [0, 96], sizes = [8, 64], strides = [1, 1]} : vector<8x192xf32> to vector<8x64xf32>
    %713 = arith.addf %711, %712 : vector<8x64xf32>
    %714 = arith.negf %713 : vector<8x64xf32>
    %715 = math.exp %714 : vector<8x64xf32>
    %cst_231 = arith.constant 1.000000e+00 : f32
    %716 = vector.broadcast %cst_231 : f32 to vector<8x64xf32>
    %717 = arith.addf %716, %715 : vector<8x64xf32>
    %718 = arith.divf %716, %717 : vector<8x64xf32>
    %719 = vector.extract_strided_slice %701 {offsets = [0, 64], sizes = [8, 32], strides = [1, 1]} : vector<8x192xf32> to vector<8x32xf32>
    %720 = vector.extract_strided_slice %710 {offsets = [0, 0], sizes = [8, 32], strides = [1, 1]} : vector<8x64xf32> to vector<8x32xf32>
    %721 = vector.extract_strided_slice %700 {offsets = [0, 64], sizes = [8, 32], strides = [1, 1]} : vector<8x192xf32> to vector<8x32xf32>
    %722 = vector.broadcast %501 : vector<1x32xf32> to vector<8x32xf32>
    %723 = arith.addf %721, %722 : vector<8x32xf32>
    %724 = arith.mulf %720, %723 : vector<8x32xf32>
    %725 = arith.addf %719, %724 : vector<8x32xf32>
    %726 = math.tanh %725 : vector<8x32xf32>
    %727 = vector.extract_strided_slice %702 {offsets = [0, 160], sizes = [8, 32], strides = [1, 1]} : vector<8x192xf32> to vector<8x32xf32>
    %728 = vector.extract_strided_slice %718 {offsets = [0, 0], sizes = [8, 32], strides = [1, 1]} : vector<8x64xf32> to vector<8x32xf32>
    %729 = vector.extract_strided_slice %700 {offsets = [0, 160], sizes = [8, 32], strides = [1, 1]} : vector<8x192xf32> to vector<8x32xf32>
    %730 = vector.broadcast %502 : vector<1x32xf32> to vector<8x32xf32>
    %731 = arith.addf %729, %730 : vector<8x32xf32>
    %732 = arith.mulf %728, %731 : vector<8x32xf32>
    %733 = arith.addf %727, %732 : vector<8x32xf32>
    %734 = math.tanh %733 : vector<8x32xf32>
    %735 = vector.extract_strided_slice %710 {offsets = [0, 32], sizes = [8, 32], strides = [1, 1]} : vector<8x64xf32> to vector<8x32xf32>
    %736 = vector.extract_strided_slice %718 {offsets = [0, 32], sizes = [8, 32], strides = [1, 1]} : vector<8x64xf32> to vector<8x32xf32>
    %cst_232 = arith.constant 1.000000e+00 : f32
    %737 = vector.broadcast %cst_232 : f32 to vector<8x32xf32>
    %738 = arith.subf %737, %735 : vector<8x32xf32>
    %739 = arith.mulf %738, %726 : vector<8x32xf32>
    %740 = arith.mulf %735, %693 : vector<8x32xf32>
    %741 = arith.addf %739, %740 : vector<8x32xf32>
    %cst_233 = arith.constant 1.000000e+00 : f32
    %742 = vector.broadcast %cst_233 : f32 to vector<8x32xf32>
    %743 = arith.subf %742, %736 : vector<8x32xf32>
    %744 = arith.mulf %743, %734 : vector<8x32xf32>
    %745 = arith.mulf %736, %698 : vector<8x32xf32>
    %746 = arith.addf %744, %745 : vector<8x32xf32>
    %747 = tpu.concatenate %741, %746 in 1 : vector<8x32xf32>, vector<8x32xf32> -> vector<8x64xf32>
    %cst_234 = arith.constant dense<0.000000e+00> : vector<8x192xf32>
    %748 = tpu.matmul %747, %500, %cst_234 {dimension_numbers = #tpu.dot_dimension_numbers<[1], [0], [0], [1], [0, 0, 1, 1], [], []>} : vector<8x64xf32>, vector<64x192xf32>, vector<8x192xf32> -> vector<8x192xf32>
    %c40_235 = arith.constant 40 : index
    %c0_236 = arith.constant 0 : index
    %749 = vector.load %arg16[%c40_235, %c0_236] : memref<64x192xf32, #tpu.memory_space<vmem>>, vector<8x192xf32>
    %c16_237 = arith.constant 16 : index
    %c0_238 = arith.constant 0 : index
    %750 = vector.load %arg16[%c16_237, %c0_238] : memref<64x192xf32, #tpu.memory_space<vmem>>, vector<8x192xf32>
    %751 = vector.extract_strided_slice %749 {offsets = [0, 0], sizes = [8, 64], strides = [1, 1]} : vector<8x192xf32> to vector<8x64xf32>
    %752 = vector.extract_strided_slice %748 {offsets = [0, 0], sizes = [8, 64], strides = [1, 1]} : vector<8x192xf32> to vector<8x64xf32>
    %753 = arith.addf %751, %752 : vector<8x64xf32>
    %754 = arith.negf %753 : vector<8x64xf32>
    %755 = math.exp %754 : vector<8x64xf32>
    %cst_239 = arith.constant 1.000000e+00 : f32
    %756 = vector.broadcast %cst_239 : f32 to vector<8x64xf32>
    %757 = arith.addf %756, %755 : vector<8x64xf32>
    %758 = arith.divf %756, %757 : vector<8x64xf32>
    %759 = vector.extract_strided_slice %750 {offsets = [0, 96], sizes = [8, 64], strides = [1, 1]} : vector<8x192xf32> to vector<8x64xf32>
    %760 = vector.extract_strided_slice %748 {offsets = [0, 96], sizes = [8, 64], strides = [1, 1]} : vector<8x192xf32> to vector<8x64xf32>
    %761 = arith.addf %759, %760 : vector<8x64xf32>
    %762 = arith.negf %761 : vector<8x64xf32>
    %763 = math.exp %762 : vector<8x64xf32>
    %cst_240 = arith.constant 1.000000e+00 : f32
    %764 = vector.broadcast %cst_240 : f32 to vector<8x64xf32>
    %765 = arith.addf %764, %763 : vector<8x64xf32>
    %766 = arith.divf %764, %765 : vector<8x64xf32>
    %767 = vector.extract_strided_slice %749 {offsets = [0, 64], sizes = [8, 32], strides = [1, 1]} : vector<8x192xf32> to vector<8x32xf32>
    %768 = vector.extract_strided_slice %758 {offsets = [0, 0], sizes = [8, 32], strides = [1, 1]} : vector<8x64xf32> to vector<8x32xf32>
    %769 = vector.extract_strided_slice %748 {offsets = [0, 64], sizes = [8, 32], strides = [1, 1]} : vector<8x192xf32> to vector<8x32xf32>
    %770 = vector.broadcast %501 : vector<1x32xf32> to vector<8x32xf32>
    %771 = arith.addf %769, %770 : vector<8x32xf32>
    %772 = arith.mulf %768, %771 : vector<8x32xf32>
    %773 = arith.addf %767, %772 : vector<8x32xf32>
    %774 = math.tanh %773 : vector<8x32xf32>
    %775 = vector.extract_strided_slice %750 {offsets = [0, 160], sizes = [8, 32], strides = [1, 1]} : vector<8x192xf32> to vector<8x32xf32>
    %776 = vector.extract_strided_slice %766 {offsets = [0, 0], sizes = [8, 32], strides = [1, 1]} : vector<8x64xf32> to vector<8x32xf32>
    %777 = vector.extract_strided_slice %748 {offsets = [0, 160], sizes = [8, 32], strides = [1, 1]} : vector<8x192xf32> to vector<8x32xf32>
    %778 = vector.broadcast %502 : vector<1x32xf32> to vector<8x32xf32>
    %779 = arith.addf %777, %778 : vector<8x32xf32>
    %780 = arith.mulf %776, %779 : vector<8x32xf32>
    %781 = arith.addf %775, %780 : vector<8x32xf32>
    %782 = math.tanh %781 : vector<8x32xf32>
    %783 = vector.extract_strided_slice %758 {offsets = [0, 32], sizes = [8, 32], strides = [1, 1]} : vector<8x64xf32> to vector<8x32xf32>
    %784 = vector.extract_strided_slice %766 {offsets = [0, 32], sizes = [8, 32], strides = [1, 1]} : vector<8x64xf32> to vector<8x32xf32>
    %cst_241 = arith.constant 1.000000e+00 : f32
    %785 = vector.broadcast %cst_241 : f32 to vector<8x32xf32>
    %786 = arith.subf %785, %783 : vector<8x32xf32>
    %787 = arith.mulf %786, %774 : vector<8x32xf32>
    %788 = arith.mulf %783, %741 : vector<8x32xf32>
    %789 = arith.addf %787, %788 : vector<8x32xf32>
    %cst_242 = arith.constant 1.000000e+00 : f32
    %790 = vector.broadcast %cst_242 : f32 to vector<8x32xf32>
    %791 = arith.subf %790, %784 : vector<8x32xf32>
    %792 = arith.mulf %791, %782 : vector<8x32xf32>
    %793 = arith.mulf %784, %746 : vector<8x32xf32>
    %794 = arith.addf %792, %793 : vector<8x32xf32>
    %795 = tpu.concatenate %789, %794 in 1 : vector<8x32xf32>, vector<8x32xf32> -> vector<8x64xf32>
    %cst_243 = arith.constant dense<0.000000e+00> : vector<8x192xf32>
    %796 = tpu.matmul %795, %500, %cst_243 {dimension_numbers = #tpu.dot_dimension_numbers<[1], [0], [0], [1], [0, 0, 1, 1], [], []>} : vector<8x64xf32>, vector<64x192xf32>, vector<8x192xf32> -> vector<8x192xf32>
    %c48_244 = arith.constant 48 : index
    %c0_245 = arith.constant 0 : index
    %797 = vector.load %arg16[%c48_244, %c0_245] : memref<64x192xf32, #tpu.memory_space<vmem>>, vector<8x192xf32>
    %c8_246 = arith.constant 8 : index
    %c0_247 = arith.constant 0 : index
    %798 = vector.load %arg16[%c8_246, %c0_247] : memref<64x192xf32, #tpu.memory_space<vmem>>, vector<8x192xf32>
    %799 = vector.extract_strided_slice %797 {offsets = [0, 0], sizes = [8, 64], strides = [1, 1]} : vector<8x192xf32> to vector<8x64xf32>
    %800 = vector.extract_strided_slice %796 {offsets = [0, 0], sizes = [8, 64], strides = [1, 1]} : vector<8x192xf32> to vector<8x64xf32>
    %801 = arith.addf %799, %800 : vector<8x64xf32>
    %802 = arith.negf %801 : vector<8x64xf32>
    %803 = math.exp %802 : vector<8x64xf32>
    %cst_248 = arith.constant 1.000000e+00 : f32
    %804 = vector.broadcast %cst_248 : f32 to vector<8x64xf32>
    %805 = arith.addf %804, %803 : vector<8x64xf32>
    %806 = arith.divf %804, %805 : vector<8x64xf32>
    %807 = vector.extract_strided_slice %798 {offsets = [0, 96], sizes = [8, 64], strides = [1, 1]} : vector<8x192xf32> to vector<8x64xf32>
    %808 = vector.extract_strided_slice %796 {offsets = [0, 96], sizes = [8, 64], strides = [1, 1]} : vector<8x192xf32> to vector<8x64xf32>
    %809 = arith.addf %807, %808 : vector<8x64xf32>
    %810 = arith.negf %809 : vector<8x64xf32>
    %811 = math.exp %810 : vector<8x64xf32>
    %cst_249 = arith.constant 1.000000e+00 : f32
    %812 = vector.broadcast %cst_249 : f32 to vector<8x64xf32>
    %813 = arith.addf %812, %811 : vector<8x64xf32>
    %814 = arith.divf %812, %813 : vector<8x64xf32>
    %815 = vector.extract_strided_slice %797 {offsets = [0, 64], sizes = [8, 32], strides = [1, 1]} : vector<8x192xf32> to vector<8x32xf32>
    %816 = vector.extract_strided_slice %806 {offsets = [0, 0], sizes = [8, 32], strides = [1, 1]} : vector<8x64xf32> to vector<8x32xf32>
    %817 = vector.extract_strided_slice %796 {offsets = [0, 64], sizes = [8, 32], strides = [1, 1]} : vector<8x192xf32> to vector<8x32xf32>
    %818 = vector.broadcast %501 : vector<1x32xf32> to vector<8x32xf32>
    %819 = arith.addf %817, %818 : vector<8x32xf32>
    %820 = arith.mulf %816, %819 : vector<8x32xf32>
    %821 = arith.addf %815, %820 : vector<8x32xf32>
    %822 = math.tanh %821 : vector<8x32xf32>
    %823 = vector.extract_strided_slice %798 {offsets = [0, 160], sizes = [8, 32], strides = [1, 1]} : vector<8x192xf32> to vector<8x32xf32>
    %824 = vector.extract_strided_slice %814 {offsets = [0, 0], sizes = [8, 32], strides = [1, 1]} : vector<8x64xf32> to vector<8x32xf32>
    %825 = vector.extract_strided_slice %796 {offsets = [0, 160], sizes = [8, 32], strides = [1, 1]} : vector<8x192xf32> to vector<8x32xf32>
    %826 = vector.broadcast %502 : vector<1x32xf32> to vector<8x32xf32>
    %827 = arith.addf %825, %826 : vector<8x32xf32>
    %828 = arith.mulf %824, %827 : vector<8x32xf32>
    %829 = arith.addf %823, %828 : vector<8x32xf32>
    %830 = math.tanh %829 : vector<8x32xf32>
    %831 = vector.extract_strided_slice %806 {offsets = [0, 32], sizes = [8, 32], strides = [1, 1]} : vector<8x64xf32> to vector<8x32xf32>
    %832 = vector.extract_strided_slice %814 {offsets = [0, 32], sizes = [8, 32], strides = [1, 1]} : vector<8x64xf32> to vector<8x32xf32>
    %cst_250 = arith.constant 1.000000e+00 : f32
    %833 = vector.broadcast %cst_250 : f32 to vector<8x32xf32>
    %834 = arith.subf %833, %831 : vector<8x32xf32>
    %835 = arith.mulf %834, %822 : vector<8x32xf32>
    %836 = arith.mulf %831, %789 : vector<8x32xf32>
    %837 = arith.addf %835, %836 : vector<8x32xf32>
    %cst_251 = arith.constant 1.000000e+00 : f32
    %838 = vector.broadcast %cst_251 : f32 to vector<8x32xf32>
    %839 = arith.subf %838, %832 : vector<8x32xf32>
    %840 = arith.mulf %839, %830 : vector<8x32xf32>
    %841 = arith.mulf %832, %794 : vector<8x32xf32>
    %842 = arith.addf %840, %841 : vector<8x32xf32>
    %843 = tpu.concatenate %837, %842 in 1 : vector<8x32xf32>, vector<8x32xf32> -> vector<8x64xf32>
    %cst_252 = arith.constant dense<0.000000e+00> : vector<8x192xf32>
    %844 = tpu.matmul %843, %500, %cst_252 {dimension_numbers = #tpu.dot_dimension_numbers<[1], [0], [0], [1], [0, 0, 1, 1], [], []>} : vector<8x64xf32>, vector<64x192xf32>, vector<8x192xf32> -> vector<8x192xf32>
    %c56_253 = arith.constant 56 : index
    %c0_254 = arith.constant 0 : index
    %845 = vector.load %arg16[%c56_253, %c0_254] : memref<64x192xf32, #tpu.memory_space<vmem>>, vector<8x192xf32>
    %c0_255 = arith.constant 0 : index
    %c0_256 = arith.constant 0 : index
    %846 = vector.load %arg16[%c0_255, %c0_256] : memref<64x192xf32, #tpu.memory_space<vmem>>, vector<8x192xf32>
    %847 = vector.extract_strided_slice %845 {offsets = [0, 0], sizes = [8, 64], strides = [1, 1]} : vector<8x192xf32> to vector<8x64xf32>
    %848 = vector.extract_strided_slice %844 {offsets = [0, 0], sizes = [8, 64], strides = [1, 1]} : vector<8x192xf32> to vector<8x64xf32>
    %849 = arith.addf %847, %848 : vector<8x64xf32>
    %850 = arith.negf %849 : vector<8x64xf32>
    %851 = math.exp %850 : vector<8x64xf32>
    %cst_257 = arith.constant 1.000000e+00 : f32
    %852 = vector.broadcast %cst_257 : f32 to vector<8x64xf32>
    %853 = arith.addf %852, %851 : vector<8x64xf32>
    %854 = arith.divf %852, %853 : vector<8x64xf32>
    %855 = vector.extract_strided_slice %846 {offsets = [0, 96], sizes = [8, 64], strides = [1, 1]} : vector<8x192xf32> to vector<8x64xf32>
    %856 = vector.extract_strided_slice %844 {offsets = [0, 96], sizes = [8, 64], strides = [1, 1]} : vector<8x192xf32> to vector<8x64xf32>
    %857 = arith.addf %855, %856 : vector<8x64xf32>
    %858 = arith.negf %857 : vector<8x64xf32>
    %859 = math.exp %858 : vector<8x64xf32>
    %cst_258 = arith.constant 1.000000e+00 : f32
    %860 = vector.broadcast %cst_258 : f32 to vector<8x64xf32>
    %861 = arith.addf %860, %859 : vector<8x64xf32>
    %862 = arith.divf %860, %861 : vector<8x64xf32>
    %863 = vector.extract_strided_slice %845 {offsets = [0, 64], sizes = [8, 32], strides = [1, 1]} : vector<8x192xf32> to vector<8x32xf32>
    %864 = vector.extract_strided_slice %854 {offsets = [0, 0], sizes = [8, 32], strides = [1, 1]} : vector<8x64xf32> to vector<8x32xf32>
    %865 = vector.extract_strided_slice %844 {offsets = [0, 64], sizes = [8, 32], strides = [1, 1]} : vector<8x192xf32> to vector<8x32xf32>
    %866 = vector.broadcast %501 : vector<1x32xf32> to vector<8x32xf32>
    %867 = arith.addf %865, %866 : vector<8x32xf32>
    %868 = arith.mulf %864, %867 : vector<8x32xf32>
    %869 = arith.addf %863, %868 : vector<8x32xf32>
    %870 = math.tanh %869 : vector<8x32xf32>
    %871 = vector.extract_strided_slice %846 {offsets = [0, 160], sizes = [8, 32], strides = [1, 1]} : vector<8x192xf32> to vector<8x32xf32>
    %872 = vector.extract_strided_slice %862 {offsets = [0, 0], sizes = [8, 32], strides = [1, 1]} : vector<8x64xf32> to vector<8x32xf32>
    %873 = vector.extract_strided_slice %844 {offsets = [0, 160], sizes = [8, 32], strides = [1, 1]} : vector<8x192xf32> to vector<8x32xf32>
    %874 = vector.broadcast %502 : vector<1x32xf32> to vector<8x32xf32>
    %875 = arith.addf %873, %874 : vector<8x32xf32>
    %876 = arith.mulf %872, %875 : vector<8x32xf32>
    %877 = arith.addf %871, %876 : vector<8x32xf32>
    %878 = math.tanh %877 : vector<8x32xf32>
    %879 = vector.extract_strided_slice %854 {offsets = [0, 32], sizes = [8, 32], strides = [1, 1]} : vector<8x64xf32> to vector<8x32xf32>
    %880 = vector.extract_strided_slice %862 {offsets = [0, 32], sizes = [8, 32], strides = [1, 1]} : vector<8x64xf32> to vector<8x32xf32>
    %cst_259 = arith.constant 1.000000e+00 : f32
    %881 = vector.broadcast %cst_259 : f32 to vector<8x32xf32>
    %882 = arith.subf %881, %879 : vector<8x32xf32>
    %883 = arith.mulf %882, %870 : vector<8x32xf32>
    %884 = arith.mulf %879, %837 : vector<8x32xf32>
    %885 = arith.addf %883, %884 : vector<8x32xf32>
    %cst_260 = arith.constant 1.000000e+00 : f32
    %886 = vector.broadcast %cst_260 : f32 to vector<8x32xf32>
    %887 = arith.subf %886, %880 : vector<8x32xf32>
    %888 = arith.mulf %887, %878 : vector<8x32xf32>
    %889 = arith.mulf %880, %842 : vector<8x32xf32>
    %890 = arith.addf %888, %889 : vector<8x32xf32>
    %c2_261 = arith.constant 2 : index
    %c0_262 = arith.constant 0 : index
    %c0_263 = arith.constant 0 : index
    %891 = vector.load %arg14[%c2_261, %c0_262, %c0_263] : memref<4x8x32xf32, #tpu.memory_space<vmem>>, vector<1x8x32xf32>
    %892 = vector.shape_cast %891 : vector<1x8x32xf32> to vector<8x32xf32>
    %893 = vector.shape_cast %885 : vector<8x32xf32> to vector<1x8x32xf32>
    tpu.vector_store %arg14[%c2_261, %c0_262, %c0_263], %893 {strides = array<i32>} : memref<4x8x32xf32, #tpu.memory_space<vmem>>, vector<1x8x32xf32>,
    %c3_264 = arith.constant 3 : index
    %c0_265 = arith.constant 0 : index
    %c0_266 = arith.constant 0 : index
    %894 = vector.load %arg14[%c3_264, %c0_265, %c0_266] : memref<4x8x32xf32, #tpu.memory_space<vmem>>, vector<1x8x32xf32>
    %895 = vector.shape_cast %894 : vector<1x8x32xf32> to vector<8x32xf32>
    %896 = vector.shape_cast %890 : vector<8x32xf32> to vector<1x8x32xf32>
    tpu.vector_store %arg14[%c3_264, %c0_265, %c0_266], %896 {strides = array<i32>} : memref<4x8x32xf32, #tpu.memory_space<vmem>>, vector<1x8x32xf32>,
    %c0_267 = arith.constant 0 : index
    %c0_268 = arith.constant 0 : index
    %897 = vector.load %arg11[%c0_267, %c0_268] : memref<1x64xf32, #tpu.memory_space<vmem>>, vector<1x64xf32>
    %898 = vector.extract_strided_slice %897 {offsets = [0, 0], sizes = [1, 32], strides = [1, 1]} : vector<1x64xf32> to vector<1x32xf32>
    %899 = vector.broadcast %898 : vector<1x32xf32> to vector<8x32xf32>
    %900 = arith.mulf %885, %899 : vector<8x32xf32>
    %901 = vector.extract_strided_slice %897 {offsets = [0, 32], sizes = [1, 32], strides = [1, 1]} : vector<1x64xf32> to vector<1x32xf32>
    %902 = vector.broadcast %901 : vector<1x32xf32> to vector<8x32xf32>
    %903 = arith.mulf %554, %902 : vector<8x32xf32>
    %904 = arith.addf %900, %903 : vector<8x32xf32>
    %cst_269 = arith.constant dense<0.000000e+00> : vector<8xf32>
    %905 = vector.multi_reduction <add>, %904, %cst_269 [1] : vector<8x32xf32> to vector<8xf32>
    %906 = vector.shape_cast %905 : vector<8xf32> to vector<8x1xf32>
    %c0_270 = arith.constant 0 : index
    %c0_271 = arith.constant 0 : index
    %907 = vector.load %arg12[%c0_270, %c0_271] : memref<1x1xf32, #tpu.memory_space<vmem>>, vector<1x1xf32>
    %908 = vector.broadcast %907 : vector<1x1xf32> to vector<8x1xf32>
    %909 = arith.addf %906, %908 : vector<8x1xf32>
    %910 = arith.negf %909 : vector<8x1xf32>
    %911 = math.exp %910 : vector<8x1xf32>
    %cst_272 = arith.constant 1.000000e+00 : f32
    %912 = vector.broadcast %cst_272 : f32 to vector<8x1xf32>
    %913 = arith.addf %912, %911 : vector<8x1xf32>
    %914 = arith.divf %912, %913 : vector<8x1xf32>
    %c0_273 = arith.constant 0 : index
    %c0_274 = arith.constant 0 : index
    %915 = vector.load %arg13[%c0_273, %c0_274] : memref<8x1xf32, #tpu.memory_space<vmem>>, vector<8x1xf32>
    tpu.vector_store %arg13[%c0_273, %c0_274], %914 {strides = array<i32>} : memref<8x1xf32, #tpu.memory_space<vmem>>, vector<8x1xf32>,
    return
  }
}

</mosaic_0001>

<llo_original>
// kernel: tpu_custom_call.1
$region0: #{tpu_custom_call.1}
  #allocation0 [shape = 'u32[]', space=smem, size = 0x4, offset = 0x4, fixed_abs, tag = 'smem constant byte address 0x4 - core index']
  #allocation1 [shape = 'u32[144,128]{1,0:T(1,128)}', space=vmem, size = 0x12000, scoped, tag = 'internal scratch']
  #allocation2 [shape = 'f32[64,48]{1,0:T(8,128)}', space=vmem, size = 0x8000, scoped, tag = 'scratch operand']
  #allocation3 [shape = 'f32[64,192]{1,0:T(8,128)}', space=vmem, size = 0x10000, scoped, tag = 'scratch operand']
  #allocation4 [shape = 'f32[64,32]{1,0:T(8,128)}', space=vmem, size = 0x8000, scoped, tag = 'scratch operand']
  #allocation5 [shape = 'f32[64,32]{1,0:T(8,128)}', space=vmem, size = 0x8000, scoped, tag = 'scratch operand']
  #allocation6 [shape = 'f32[1,1]{1,0:T(1,128)S(1)}', space=vmem, size = 0x200, scoped, tag = 'scoped memory for tpu_custom_call.1']
  %s0 = inlined_call_operand.hbm [shape: s32[16], index: 0, kind: input, shape index: {}]
  %s1 = inlined_call_operand.vmem [shape: f32[50,48], index: 1, kind: input, shape index: {}]
  %s2 = inlined_call_operand.hbm [shape: f32[48,192], index: 2, kind: input, shape index: {}]
  %s3 = inlined_call_operand.hbm [shape: f32[64,192], index: 3, kind: input, shape index: {}]
  %s4 = inlined_call_operand.vmem [shape: f32[1,192], index: 4, kind: input, shape index: {}]
  %s5 = inlined_call_operand.hbm [shape: f32[1,64], index: 5, kind: input, shape index: {}]
  %s6 = inlined_call_operand.vmem [shape: f32[64,192], index: 6, kind: input, shape index: {}]
  %s7 = inlined_call_operand.hbm [shape: f32[64,192], index: 7, kind: input, shape index: {}]
  %s8 = inlined_call_operand.vmem [shape: f32[1,192], index: 8, kind: input, shape index: {}]
  %s9 = inlined_call_operand.vmem [shape: f32[1,64], index: 9, kind: input, shape index: {}]
  %s10 = inlined_call_operand.hbm [shape: f32[4,8,32], index: 10, kind: input, shape index: {}]
  %s11 = inlined_call_operand.vmem [shape: f32[1,64], index: 11, kind: input, shape index: {}]
  %s12 = inlined_call_operand.<no memory space> [shape: f32[1,1], index: 12, kind: input, shape index: {}]
  %s13 = inlined_call_operand.vmem [shape: f32[8,1], index: 13, kind: output, shape index: {0}]
  %s14 = inlined_call_operand.hbm [shape: f32[4,8,32], index: 14, kind: output, shape index: {1}]
  %15 = xla_tuple %s13, %s14
  %s16 = sld [smem:[#allocation0]]
  $region94: #{tpu_custom_call.1} parent=0
    _
  %s18 = ssub.s32 1, %s16
  %s19 = scalar_select 0, %s18, %s16
  %v20 = vstv %s12
  %21 = vst [vmem:[#allocation6] sm:$0x1] %v20
  $region1: #{tpu_custom_call.1} parent=0
    #allocation7 [shape = 'u8[512]{0}', space=smem, size = 0x200, scoped, tag = 'input window, operand 0, single buffered']
    #allocation8 [shape = 's32[1]{0}', space=sflag, size = 0x4, scoped, tag = 'scoped memory for tpu_custom_call.1']
    #allocation9 [shape = 's32[1]{0}', space=sflag, size = 0x4, scoped, tag = 'scoped memory for tpu_custom_call.1']
    #allocation10 [shape = 's32[1]{0}', space=sflag, size = 0x4, scoped, tag = 'scoped memory for tpu_custom_call.1']
    #allocation11 [shape = 'u8[49152]{0}', space=vmem, size = 0xc000, scoped, tag = 'input window, operand 2, single buffered']
    #allocation12 [shape = 'u8[65536]{0}', space=vmem, size = 0x10000, scoped, tag = 'input window, operand 3, single buffered']
    #allocation13 [shape = 's32[1]{0}', space=sflag, size = 0x4, scoped, tag = 'scoped memory for tpu_custom_call.1']
    #allocation14 [shape = 'u8[512]{0}', space=vmem, size = 0x400, scoped, tag = 'input window, operand 5, single buffered']
    #allocation15 [shape = 'u8[65536]{0}', space=vmem, size = 0x10000, scoped, tag = 'input window, operand 7, single buffered']
    #allocation16 [shape = 's32[1]{0}', space=sflag, size = 0x4, scoped, tag = 'scoped memory for tpu_custom_call.1']
    #allocation17 [shape = 'u8[16384]{0}', space=vmem, size = 0x4000, scoped, tag = 'input window, operand 10, single buffered']
    #allocation18 [shape = 'u8[16384]{0}', space=vmem, size = 0x4000, scoped, tag = 'output window, operand 1, single buffered']
    %22 = vsyncpa [#allocation10], 0
    %23 = vsyncpa [#allocation8], 0
    %24 = vsyncpa [#allocation13], 0
    %25 = vsyncpa [#allocation16], 0
    %26 = vsyncpa [#allocation9], 0
    // Predicated region
    $region2: #{tpu_custom_call.1} parent=1 // pred_check
      _
    $region3: #{tpu_custom_call.1} parent=1 // pred_check_branch
      %28 = sbr.rel (0) target = $region5
    $region4: #{tpu_custom_call.1} parent=1 // pred_region
      %s30 = ssub.s32 16, 16
      %31 = vsyncadd [#allocation10], %s30
      %34 = dma.hbm_to_smem %s0, 16, [#allocation7], [#allocation10]
    $region5: #{tpu_custom_call.1} parent=1 // pred_fallthru
      _
    // Predicated region
    $region6: #{tpu_custom_call.1} parent=1 // pred_check
      _
    $region7: #{tpu_custom_call.1} parent=1 // pred_check_branch
      %36 = sbr.rel (0) target = $region9
    $region8: #{tpu_custom_call.1} parent=1 // pred_region
      _
    $region9: #{tpu_custom_call.1} parent=1 // pred_fallthru
      _
    // Predicated region
    $region10: #{tpu_custom_call.1} parent=1 // pred_check
      _
    $region11: #{tpu_custom_call.1} parent=1 // pred_check_branch
      %38 = sbr.rel (0) target = $region13
    $region12: #{tpu_custom_call.1} parent=1 // pred_region
      %s40 = ssub.s32 1536, 1536
      %41 = vsyncadd [#allocation8], %s40
      %s42 = sshll.u32 [#allocation11], 4
      %s43 = int_to_ptr.vmem [resolvable:$true] %s42
      %48 = dma.hbm_to_vmem [thread:$0]  %s2, 1536, %s43, [#allocation8], 256, 256, 16
    $region13: #{tpu_custom_call.1} parent=1 // pred_fallthru
      _
    // Predicated region
    $region14: #{tpu_custom_call.1} parent=1 // pred_check
      _
    $region15: #{tpu_custom_call.1} parent=1 // pred_check_branch
      %50 = sbr.rel (0) target = $region17
    $region16: #{tpu_custom_call.1} parent=1 // pred_region
      %s52 = ssub.s32 2048, 2048
      %53 = vsyncadd [#allocation13], %s52
      %s54 = sshll.u32 [#allocation12], 4
      %s55 = int_to_ptr.vmem [resolvable:$true] %s54
      %60 = dma.hbm_to_vmem [thread:$0]  %s3, 2048, %s55, [#allocation13], 256, 256, 16
    $region17: #{tpu_custom_call.1} parent=1 // pred_fallthru
      _
    // Predicated region
    $region18: #{tpu_custom_call.1} parent=1 // pred_check
      _
    $region19: #{tpu_custom_call.1} parent=1 // pred_check_branch
      %62 = sbr.rel (0) target = $region21
    $region20: #{tpu_custom_call.1} parent=1 // pred_region
      _
    $region21: #{tpu_custom_call.1} parent=1 // pred_fallthru
      _
    // Predicated region
    $region22: #{tpu_custom_call.1} parent=1 // pred_check
      _
    $region23: #{tpu_custom_call.1} parent=1 // pred_check_branch
      %64 = sbr.rel (0) target = $region25
    $region24: #{tpu_custom_call.1} parent=1 // pred_region
      %s66 = ssub.s32 16, 16
      %67 = vsyncadd [#allocation13], %s66
      %s69 = sshll.u32 [#allocation14], 4
      %s70 = int_to_ptr.vmem [resolvable:$true] %s69
      %72 = dma.hbm_to_vmem [thread:$0]  %s5, 16, %s70, [#allocation13]
    $region25: #{tpu_custom_call.1} parent=1 // pred_fallthru
      _
    // Predicated region
    $region26: #{tpu_custom_call.1} parent=1 // pred_check
      _
    $region27: #{tpu_custom_call.1} parent=1 // pred_check_branch
      %74 = sbr.rel (0) target = $region29
    $region28: #{tpu_custom_call.1} parent=1 // pred_region
      _
    $region29: #{tpu_custom_call.1} parent=1 // pred_fallthru
      _
    // Predicated region
    $region30: #{tpu_custom_call.1} parent=1 // pred_check
      _
    $region31: #{tpu_custom_call.1} parent=1 // pred_check_branch
      %76 = sbr.rel (0) target = $region33
    $region32: #{tpu_custom_call.1} parent=1 // pred_region
      %s78 = ssub.s32 2048, 2048
      %79 = vsyncadd [#allocation16], %s78
      %s80 = sshll.u32 [#allocation15], 4
      %s81 = int_to_ptr.vmem [resolvable:$true] %s80
      %86 = dma.hbm_to_vmem [thread:$0]  %s7, 2048, %s81, [#allocation16], 256, 256, 16
    $region33: #{tpu_custom_call.1} parent=1 // pred_fallthru
      _
    // Predicated region
    $region34: #{tpu_custom_call.1} parent=1 // pred_check
      _
    $region35: #{tpu_custom_call.1} parent=1 // pred_check_branch
      %88 = sbr.rel (0) target = $region37
    $region36: #{tpu_custom_call.1} parent=1 // pred_region
      _
    $region37: #{tpu_custom_call.1} parent=1 // pred_fallthru
      _
    // Predicated region
    $region38: #{tpu_custom_call.1} parent=1 // pred_check
      _
    $region39: #{tpu_custom_call.1} parent=1 // pred_check_branch
      %90 = sbr.rel (0) target = $region41
    $region40: #{tpu_custom_call.1} parent=1 // pred_region
      _
    $region41: #{tpu_custom_call.1} parent=1 // pred_fallthru
      _
    // Predicated region
    $region42: #{tpu_custom_call.1} parent=1 // pred_check
      _
    $region43: #{tpu_custom_call.1} parent=1 // pred_check_branch
      %92 = sbr.rel (0) target = $region45
    $region44: #{tpu_custom_call.1} parent=1 // pred_region
      %s94 = ssub.s32 512, 512
      %95 = vsyncadd [#allocation16], %s94
      %s96 = sshll.u32 [#allocation17], 4
      %s97 = int_to_ptr.vmem [resolvable:$true] %s96
      %102 = dma.hbm_to_vmem [thread:$0]  %s10, 512, %s97, [#allocation16], 128, 128, 8
    $region45: #{tpu_custom_call.1} parent=1 // pred_fallthru
      _
    // Predicated region
    $region46: #{tpu_custom_call.1} parent=1 // pred_check
      _
    $region47: #{tpu_custom_call.1} parent=1 // pred_check_branch
      %104 = sbr.rel (0) target = $region49
    $region48: #{tpu_custom_call.1} parent=1 // pred_region
      _
    $region49: #{tpu_custom_call.1} parent=1 // pred_fallthru
      _
    // Predicated region
    $region50: #{tpu_custom_call.1} parent=1 // pred_check
      _
    $region51: #{tpu_custom_call.1} parent=1 // pred_check_branch
      %106 = sbr.rel (0) target = $region53
    $region52: #{tpu_custom_call.1} parent=1 // pred_region
      _
    $region53: #{tpu_custom_call.1} parent=1 // pred_fallthru
      _
    // Predicated region
    $region54: #{tpu_custom_call.1} parent=1 // pred_check
      _
    $region55: #{tpu_custom_call.1} parent=1 // pred_check_branch
      %108 = sbr.rel (0) target = $region57
    $region56: #{tpu_custom_call.1} parent=1 // pred_region
      %109 = dma.done [#allocation10], 16
    $region57: #{tpu_custom_call.1} parent=1 // pred_fallthru
      _
    // Predicated region
    $region58: #{tpu_custom_call.1} parent=1 // pred_check
      _
    $region59: #{tpu_custom_call.1} parent=1 // pred_check_branch
      %111 = sbr.rel (0) target = $region61
    $region60: #{tpu_custom_call.1} parent=1 // pred_region
      %112 = dma.done [#allocation8], 1536
    $region61: #{tpu_custom_call.1} parent=1 // pred_fallthru
      _
    // Predicated region
    $region62: #{tpu_custom_call.1} parent=1 // pred_check
      _
    $region63: #{tpu_custom_call.1} parent=1 // pred_check_branch
      %114 = sbr.rel (0) target = $region65
    $region64: #{tpu_custom_call.1} parent=1 // pred_region
      %115 = dma.done [#allocation13], 2048
    $region65: #{tpu_custom_call.1} parent=1 // pred_fallthru
      _
    // Predicated region
    $region66: #{tpu_custom_call.1} parent=1 // pred_check
      _
    $region67: #{tpu_custom_call.1} parent=1 // pred_check_branch
      %117 = sbr.rel (0) target = $region69
    $region68: #{tpu_custom_call.1} parent=1 // pred_region
      %118 = dma.done [#allocation13], 16
    $region69: #{tpu_custom_call.1} parent=1 // pred_fallthru
      _
    // Predicated region
    $region70: #{tpu_custom_call.1} parent=1 // pred_check
      _
    $region71: #{tpu_custom_call.1} parent=1 // pred_check_branch
      %120 = sbr.rel (0) target = $region73
    $region72: #{tpu_custom_call.1} parent=1 // pred_region
      %121 = dma.done [#allocation16], 2048
    $region73: #{tpu_custom_call.1} parent=1 // pred_fallthru
      _
    // Predicated region
    $region74: #{tpu_custom_call.1} parent=1 // pred_check
      _
    $region75: #{tpu_custom_call.1} parent=1 // pred_check_branch
      %123 = sbr.rel (0) target = $region77
    $region76: #{tpu_custom_call.1} parent=1 // pred_region
      %124 = dma.done [#allocation16], 512
    $region77: #{tpu_custom_call.1} parent=1 // pred_fallthru
      _
    %125 = sfence
    %vm126 = vcmask 392192
    %127 = vst.msk [vmem:[#allocation2] sm:$0xff] %vm126, 0.0
    %128 = vst.msk [vmem:[#allocation2 + $0x8] sm:$0xff] %vm126, 0.0
    %129 = vst.msk [vmem:[#allocation2 + $0x10] sm:$0xff] %vm126, 0.0
    %130 = vst.msk [vmem:[#allocation2 + $0x18] sm:$0xff] %vm126, 0.0
    %131 = vst.msk [vmem:[#allocation2 + $0x20] sm:$0xff] %vm126, 0.0
    %132 = vst.msk [vmem:[#allocation2 + $0x28] sm:$0xff] %vm126, 0.0
    %133 = vst.msk [vmem:[#allocation2 + $0x30] sm:$0xff] %vm126, 0.0
    %134 = vst.msk [vmem:[#allocation2 + $0x38] sm:$0xff] %vm126, 0.0
    %s135 = sld [smem:[#allocation7]]
    %s136 = scalar_lea.vmem %s1, %s135
    %v137 = vld [vmem:[%s136] sm:$0x1]
    %vm138 = vcmask 385024
    %139 = vst.msk [vmem:[#allocation2] sm:$0x1] %vm138, %v137
    %s140 = sld [smem:[#allocation7 + $0x8]]
    %s141 = scalar_lea.vmem %s1, %s140
    %v142 = vld [vmem:[%s141] sm:$0x1]
    %143 = vst.msk [vmem:[#allocation2 + $0x1] sm:$0x1] %vm138, %v142
    %s144 = sld [smem:[#allocation7 + $0x1]]
    %s145 = scalar_lea.vmem %s1, %s144
    %v146 = vld [vmem:[%s145] sm:$0x1]
    %147 = vst.msk [vmem:[#allocation2 + $0x8] sm:$0x1] %vm138, %v146
    %s148 = sld [smem:[#allocation7 + $0x9]]
    %s149 = scalar_lea.vmem %s1, %s148
    %v150 = vld [vmem:[%s149] sm:$0x1]
    %151 = vst.msk [vmem:[#allocation2 + $0x9] sm:$0x1] %vm138, %v150
    %s152 = sld [smem:[#allocation7 + $0x2]]
    %s153 = scalar_lea.vmem %s1, %s152
    %v154 = vld [vmem:[%s153] sm:$0x1]
    %155 = vst.msk [vmem:[#allocation2 + $0x10] sm:$0x1] %vm138, %v154
    %s156 = sld [smem:[#allocation7 + $0xa]]
    %s157 = scalar_lea.vmem %s1, %s156
    %v158 = vld [vmem:[%s157] sm:$0x1]
    %159 = vst.msk [vmem:[#allocation2 + $0x11] sm:$0x1] %vm138, %v158
    %s160 = sld [smem:[#allocation7 + $0x3]]
    %s161 = scalar_lea.vmem %s1, %s160
    %v162 = vld [vmem:[%s161] sm:$0x1]
    %163 = vst.msk [vmem:[#allocation2 + $0x18] sm:$0x1] %vm138, %v162
    %s164 = sld [smem:[#allocation7 + $0xb]]
    %s165 = scalar_lea.vmem %s1, %s164
    %v166 = vld [vmem:[%s165] sm:$0x1]
    %167 = vst.msk [vmem:[#allocation2 + $0x19] sm:$0x1] %vm138, %v166
    %s168 = sld [smem:[#allocation7 + $0x4]]
    %s169 = scalar_lea.vmem %s1, %s168
    %v170 = vld [vmem:[%s169] sm:$0x1]
    %171 = vst.msk [vmem:[#allocation2 + $0x20] sm:$0x1] %vm138, %v170
    %s172 = sld [smem:[#allocation7 + $0xc]]
    %s173 = scalar_lea.vmem %s1, %s172
    %v174 = vld [vmem:[%s173] sm:$0x1]
    %175 = vst.msk [vmem:[#allocation2 + $0x21] sm:$0x1] %vm138, %v174
    %s176 = sld [smem:[#allocation7 + $0x5]]
    %s177 = scalar_lea.vmem %s1, %s176
    %v178 = vld [vmem:[%s177] sm:$0x1]
    %179 = vst.msk [vmem:[#allocation2 + $0x28] sm:$0x1] %vm138, %v178
    %s180 = sld [smem:[#allocation7 + $0xd]]
    %s181 = scalar_lea.vmem %s1, %s180
    %v182 = vld [vmem:[%s181] sm:$0x1]
    %183 = vst.msk [vmem:[#allocation2 + $0x29] sm:$0x1] %vm138, %v182
    %s184 = sld [smem:[#allocation7 + $0x6]]
    %s185 = scalar_lea.vmem %s1, %s184
    %v186 = vld [vmem:[%s185] sm:$0x1]
    %187 = vst.msk [vmem:[#allocation2 + $0x30] sm:$0x1] %vm138, %v186
    %s188 = sld [smem:[#allocation7 + $0xe]]
    %s189 = scalar_lea.vmem %s1, %s188
    %v190 = vld [vmem:[%s189] sm:$0x1]
    %191 = vst.msk [vmem:[#allocation2 + $0x31] sm:$0x1] %vm138, %v190
    %s192 = sld [smem:[#allocation7 + $0x7]]
    %s193 = scalar_lea.vmem %s1, %s192
    %v194 = vld [vmem:[%s193] sm:$0x1]
    %195 = vst.msk [vmem:[#allocation2 + $0x38] sm:$0x1] %vm138, %v194
    %s196 = sld [smem:[#allocation7 + $0xf]]
    %s197 = scalar_lea.vmem %s1, %s196
    %v198 = vld [vmem:[%s197] sm:$0x1]
    %199 = vst.msk [vmem:[#allocation2 + $0x39] sm:$0x1] %vm138, %v198
    %v200 = vld [vmem:[#allocation2] sm:$0xff]
    %v201 = vld [vmem:[#allocation2 + $0x8] sm:$0xff]
    %v202 = vld [vmem:[#allocation2 + $0x10] sm:$0xff]
    %v203 = vld [vmem:[#allocation2 + $0x18] sm:$0xff]
    %v204 = vld [vmem:[#allocation2 + $0x20] sm:$0xff]
    %v205 = vld [vmem:[#allocation2 + $0x28] sm:$0xff]
    %v206 = vld [vmem:[#allocation2 + $0x30] sm:$0xff]
    %v207 = vld [vmem:[#allocation2 + $0x38] sm:$0xff]
    %v208 = vld [vmem:[#allocation11] sm:$0xff]
    %v209 = vld [vmem:[#allocation11 + $0x8] sm:$0xff]
    %v210 = vld [vmem:[#allocation11 + $0x10] sm:$0xff]
    %v211 = vld [vmem:[#allocation11 + $0x18] sm:$0xff]
    %v212 = vld [vmem:[#allocation11 + $0x20] sm:$0xff]
    %v213 = vld [vmem:[#allocation11 + $0x28] sm:$0xff]
    %v214 = vld [vmem:[#allocation11 + $0x30] sm:$0xff]
    %v215 = vld [vmem:[#allocation11 + $0x38] sm:$0xff]
    %v216 = vld [vmem:[#allocation11 + $0x40] sm:$0xff]
    %v217 = vld [vmem:[#allocation11 + $0x48] sm:$0xff]
    %v218 = vld [vmem:[#allocation11 + $0x50] sm:$0xff]
    %v219 = vld [vmem:[#allocation11 + $0x58] sm:$0xff]
    %v220 = vld [vmem:[%s4] sm:$0x3]
    %v222 = vlaneseq
    %v223 = vshrl.u32 %v222, 7
    %v224 = vsub.s32 0, %v223
    %v225 = vrot.slane %v220, %v224
    %v226 = vlaneseq
    %v227 = vshrl.u32 %v226, 7
    %v228 = vsub.s32 1, %v227
    %v229 = vrot.slane %v220, %v228
    %v233 = vsel %vm126, %v200, 0
    %v236 = vsel %vm126, %v201, 0
    %v239 = vsel %vm126, %v202, 0
    %v242 = vsel %vm126, %v203, 0
    %v245 = vsel %vm126, %v204, 0
    %v248 = vsel %vm126, %v205, 0
    %v251 = vsel %vm126, %v206, 0
    %v254 = vsel %vm126, %v207, 0
    %256 = vmatprep.subr.mxu0 %v209
    %257 = vmatpush1.msra.mxu0 %v208
    %258 = vmatprep.subr.mxu0 %v211
    %259 = vmatpush1.msra.mxu0 %v210
    %260 = vmatprep.subr.mxu0 %v213
    %261 = vmatpush1.msra.mxu0 %v212
    %262 = vmatprep.subr.mxu0 %v215
    %263 = vmatpush1.msra.mxu0 %v214
    %264 = vmatprep.subr.mxu0 %v217
    %265 = vmatpush1.msra.mxu0 %v216
    %266 = vmatprep.subr.mxu0 %v219
    %267 = vmatpush1.msra.mxu0 %v218
    %268 = vmatprep.subr.mxu0 0.0
    %269 = vmatpush1.msra.mxu0 0.0
    %270 = vmatprep.subr.mxu0 0.0
    %271 = vmatpush1.msra.mxu0 0.0
    %272 = vmatprep.subr.mxu0 0.0
    %273 = vmatpush1.msra.mxu0 0.0
    %274 = vmatprep.subr.mxu0 0.0
    %275 = vmatpush1.msra.mxu0 0.0
    %276 = vmatprep.subr.mxu0 0.0
    %277 = vmatpush1.msra.mxu0 0.0
    %278 = vmatprep.subr.mxu0 0.0
    %279 = vmatpush1.msra.mxu0 0.0
    %280 = vmatprep.subr.mxu0 0.0
    %281 = vmatpush1.msra.mxu0 0.0
    %282 = vmatprep.subr.mxu0 0.0
    %283 = vmatpush1.msra.mxu0 0.0
    %284 = vmatprep.subr.mxu0 0.0
    %285 = vmatpush1.msra.mxu0 0.0
    %286 = vmatprep.subr.mxu0 0.0
    %287 = vmatpush1.msra.mxu0 0.0
    %288 = vmatprep.subr.mxu0 0.0
    %289 = vmatpush1.msra.mxu0 0.0
    %290 = vmatprep.subr.mxu0 0.0
    %291 = vmatpush1.msra.mxu0 0.0
    %292 = vmatprep.subr.mxu0 0.0
    %293 = vmatpush1.msra.mxu0 0.0
    %294 = vmatprep.subr.mxu0 0.0
    %295 = vmatpush1.msra.mxu0 0.0
    %296 = vmatprep.subr.mxu0 0.0
    %297 = vmatpush1.msra.mxu0 0.0
    %298 = vmatprep.subr.mxu0 0.0
    %299 = vmatpush1.msra.mxu0 0.0
    %300 = vmatprep.subr.mxu0 0.0
    %301 = vmatpush1.msra.mxu0 0.0
    %302 = vmatprep.subr.mxu0 0.0
    %303 = vmatpush1.msra.mxu0 0.0
    %304 = vmatprep.subr.mxu0 0.0
    %305 = vmatpush1.msra.mxu0 0.0
    %306 = vmatprep.subr.mxu0 0.0
    %307 = vmatpush1.msra.mxu0 0.0
    %308 = vmatprep.subr.mxu0 0.0
    %309 = vmatpush1.msra.mxu0 0.0
    %310 = vmatprep.subr.mxu0 0.0
    %311 = vmatpush1.msra.mxu0 0.0
    %312 = vmatprep.subr.mxu0 0.0
    %313 = vmatpush1.msra.mxu0 0.0
    %314 = vmatprep.subr.mxu0 0.0
    %315 = vmatpush1.msra.mxu0 0.0
    %316 = vmatprep.subr.mxu0 0.0
    %317 = vmatpush1.msra.mxu0 0.0
    %318 = vmatprep.subr.mxu0 0.0
    %319 = vmatpush1.msra.mxu0 0.0
    %320 = vmatprep.mubr.f32.mxu0 0.0
    %321 = vmatmul.mubr.f32.gmra.mrb[0].mxu0 %v233
    %v322 = vpop.f32.mrb[0].mxu0
    %v323 = vadd.f32 %v225, %v322
    %v324 = vpop.f32.mrb[0].mxu0
    %v325 = vadd.f32 %v229, %v324
    %326 = vmatprep.mubr.f32.mxu0 0.0
    %327 = vmatmul.mubr.f32.gmra.mrb[0].mxu0 %v236
    %v328 = vpop.f32.mrb[0].mxu0
    %v329 = vadd.f32 %v225, %v328
    %v330 = vpop.f32.mrb[0].mxu0
    %v331 = vadd.f32 %v229, %v330
    %332 = vmatprep.mubr.f32.mxu0 0.0
    %333 = vmatmul.mubr.f32.gmra.mrb[0].mxu0 %v239
    %v334 = vpop.f32.mrb[0].mxu0
    %v335 = vadd.f32 %v225, %v334
    %v336 = vpop.f32.mrb[0].mxu0
    %v337 = vadd.f32 %v229, %v336
    %338 = vmatprep.mubr.f32.mxu0 0.0
    %339 = vmatmul.mubr.f32.gmra.mrb[0].mxu0 %v242
    %v340 = vpop.f32.mrb[0].mxu0
    %v341 = vadd.f32 %v225, %v340
    %v342 = vpop.f32.mrb[0].mxu0
    %v343 = vadd.f32 %v229, %v342
    %344 = vmatprep.mubr.f32.mxu0 0.0
    %345 = vmatmul.mubr.f32.gmra.mrb[0].mxu0 %v245
    %v346 = vpop.f32.mrb[0].mxu0
    %v347 = vadd.f32 %v225, %v346
    %v348 = vpop.f32.mrb[0].mxu0
    %v349 = vadd.f32 %v229, %v348
    %350 = vmatprep.mubr.f32.mxu0 0.0
    %351 = vmatmul.mubr.f32.gmra.mrb[0].mxu0 %v248
    %v352 = vpop.f32.mrb[0].mxu0
    %v353 = vadd.f32 %v225, %v352
    %v354 = vpop.f32.mrb[0].mxu0
    %v355 = vadd.f32 %v229, %v354
    %356 = vmatprep.mubr.f32.mxu0 0.0
    %357 = vmatmul.mubr.f32.gmra.mrb[0].mxu0 %v251
    %v358 = vpop.f32.mrb[0].mxu0
    %v359 = vadd.f32 %v225, %v358
    %v360 = vpop.f32.mrb[0].mxu0
    %v361 = vadd.f32 %v229, %v360
    %362 = vmatprep.mubr.f32.mxu0 0.0
    %363 = vmatmul.mubr.f32.gmra.mrb[0].mxu0 %v254
    %v364 = vpop.f32.mrb[0].mxu0
    %v365 = vadd.f32 %v225, %v364
    %v366 = vpop.f32.mrb[0].mxu0
    %v367 = vadd.f32 %v229, %v366
    %368 = vdwg.mxu0
    %369 = vst [vmem:[#allocation3] sm:$0xff] %v323
    %vm370 = vcmask 523264
    %371 = vst.msk [vmem:[#allocation3 + $0x8] sm:$0xff] %vm370, %v325
    %372 = vst [vmem:[#allocation3 + $0x10] sm:$0xff] %v329
    %373 = vst.msk [vmem:[#allocation3 + $0x18] sm:$0xff] %vm370, %v331
    %374 = vst [vmem:[#allocation3 + $0x20] sm:$0xff] %v335
    %375 = vst.msk [vmem:[#allocation3 + $0x28] sm:$0xff] %vm370, %v337
    %376 = vst [vmem:[#allocation3 + $0x30] sm:$0xff] %v341
    %377 = vst.msk [vmem:[#allocation3 + $0x38] sm:$0xff] %vm370, %v343
    %378 = vst [vmem:[#allocation3 + $0x40] sm:$0xff] %v347
    %379 = vst.msk [vmem:[#allocation3 + $0x48] sm:$0xff] %vm370, %v349
    %380 = vst [vmem:[#allocation3 + $0x50] sm:$0xff] %v353
    %381 = vst.msk [vmem:[#allocation3 + $0x58] sm:$0xff] %vm370, %v355
    %382 = vst [vmem:[#allocation3 + $0x60] sm:$0xff] %v359
    %383 = vst.msk [vmem:[#allocation3 + $0x68] sm:$0xff] %vm370, %v361
    %384 = vst [vmem:[#allocation3 + $0x70] sm:$0xff] %v365
    %385 = vst.msk [vmem:[#allocation3 + $0x78] sm:$0xff] %vm370, %v367
    %v386 = vld [vmem:[#allocation14] sm:$0x1]
    %v387 = vld [vmem:[#allocation12] sm:$0xff]
    %v388 = vld [vmem:[#allocation12 + $0x8] sm:$0xff]
    %v389 = vld [vmem:[#allocation12 + $0x10] sm:$0xff]
    %v390 = vld [vmem:[#allocation12 + $0x18] sm:$0xff]
    %v391 = vld [vmem:[#allocation12 + $0x20] sm:$0xff]
    %v392 = vld [vmem:[#allocation12 + $0x28] sm:$0xff]
    %v393 = vld [vmem:[#allocation12 + $0x30] sm:$0xff]
    %v394 = vld [vmem:[#allocation12 + $0x38] sm:$0xff]
    %v395 = vld [vmem:[#allocation12 + $0x40] sm:$0xff]
    %v396 = vld [vmem:[#allocation12 + $0x48] sm:$0xff]
    %v397 = vld [vmem:[#allocation12 + $0x50] sm:$0xff]
    %v398 = vld [vmem:[#allocation12 + $0x58] sm:$0xff]
    %v399 = vld [vmem:[#allocation12 + $0x60] sm:$0xff]
    %v400 = vld [vmem:[#allocation12 + $0x68] sm:$0xff]
    %v401 = vld [vmem:[#allocation12 + $0x70] sm:$0xff]
    %v402 = vld [vmem:[#allocation12 + $0x78] sm:$0xff]
    %v403 = vld [vmem:[#allocation17] sm:$0xff]
    %s404 = scalar_lea.vmem [#allocation17], 8
    %v405 = vld [vmem:[%s404] sm:$0xff]
    %407 = vrot.lane.b32.xlu0 %v405, 32
    %v408 = vpop.permute.xlu0 %407
    %vm410 = vcmask 261120
    %v411 = vsel %vm410, %v403, %v408
    %v413 = vsel %vm370, %v411, 0
    %415 = vmatprep.subr.mxu0 %v388
    %416 = vmatpush1.msra.mxu0 %v387
    %417 = vmatprep.subr.mxu0 %v390
    %418 = vmatpush1.msra.mxu0 %v389
    %419 = vmatprep.subr.mxu0 %v392
    %420 = vmatpush1.msra.mxu0 %v391
    %421 = vmatprep.subr.mxu0 %v394
    %422 = vmatpush1.msra.mxu0 %v393
    %423 = vmatprep.subr.mxu0 %v396
    %424 = vmatpush1.msra.mxu0 %v395
    %425 = vmatprep.subr.mxu0 %v398
    %426 = vmatpush1.msra.mxu0 %v397
    %427 = vmatprep.subr.mxu0 %v400
    %428 = vmatpush1.msra.mxu0 %v399
    %429 = vmatprep.subr.mxu0 %v402
    %430 = vmatpush1.msra.mxu0 %v401
    %431 = vmatprep.subr.mxu0 0.0
    %432 = vmatpush1.msra.mxu0 0.0
    %433 = vmatprep.subr.mxu0 0.0
    %434 = vmatpush1.msra.mxu0 0.0
    %435 = vmatprep.subr.mxu0 0.0
    %436 = vmatpush1.msra.mxu0 0.0
    %437 = vmatprep.subr.mxu0 0.0
    %438 = vmatpush1.msra.mxu0 0.0
    %439 = vmatprep.subr.mxu0 0.0
    %440 = vmatpush1.msra.mxu0 0.0
    %441 = vmatprep.subr.mxu0 0.0
    %442 = vmatpush1.msra.mxu0 0.0
    %443 = vmatprep.subr.mxu0 0.0
    %444 = vmatpush1.msra.mxu0 0.0
    %445 = vmatprep.subr.mxu0 0.0
    %446 = vmatpush1.msra.mxu0 0.0
    %447 = vmatprep.subr.mxu0 0.0
    %448 = vmatpush1.msra.mxu0 0.0
    %449 = vmatprep.subr.mxu0 0.0
    %450 = vmatpush1.msra.mxu0 0.0
    %451 = vmatprep.subr.mxu0 0.0
    %452 = vmatpush1.msra.mxu0 0.0
    %453 = vmatprep.subr.mxu0 0.0
    %454 = vmatpush1.msra.mxu0 0.0
    %455 = vmatprep.subr.mxu0 0.0
    %456 = vmatpush1.msra.mxu0 0.0
    %457 = vmatprep.subr.mxu0 0.0
    %458 = vmatpush1.msra.mxu0 0.0
    %459 = vmatprep.subr.mxu0 0.0
    %460 = vmatpush1.msra.mxu0 0.0
    %461 = vmatprep.subr.mxu0 0.0
    %462 = vmatpush1.msra.mxu0 0.0
    %463 = vmatprep.subr.mxu0 0.0
    %464 = vmatpush1.msra.mxu0 0.0
    %465 = vmatprep.subr.mxu0 0.0
    %466 = vmatpush1.msra.mxu0 0.0
    %467 = vmatprep.subr.mxu0 0.0
    %468 = vmatpush1.msra.mxu0 0.0
    %469 = vmatprep.subr.mxu0 0.0
    %470 = vmatpush1.msra.mxu0 0.0
    %471 = vmatprep.subr.mxu0 0.0
    %472 = vmatpush1.msra.mxu0 0.0
    %473 = vmatprep.subr.mxu0 0.0
    %474 = vmatpush1.msra.mxu0 0.0
    %475 = vmatprep.subr.mxu0 0.0
    %476 = vmatpush1.msra.mxu0 0.0
    %477 = vmatprep.subr.mxu0 0.0
    %478 = vmatpush1.msra.mxu0 0.0
    %479 = vmatprep.mubr.f32.mxu0 0.0
    %480 = vmatmul.mubr.f32.gmra.mrb[0].mxu0 %v413
    %v481 = vpop.f32.mrb[0].mxu0
    %v482 = vadd.f32 0.0, %v481
    %v483 = vpop.f32.mrb[0].mxu0
    %v484 = vadd.f32 0.0, %v483
    %485 = vdwg.mxu0
    %v486 = vld [vmem:[#allocation3] sm:$0xff]
    %v487 = vld [vmem:[#allocation3 + $0x70] sm:$0xff]
    %v488 = vld [vmem:[#allocation3 + $0x78] sm:$0xff]
    %v489 = vadd.f32 %v486, %v482
    %v490 = vxor.u32 %v489, 2147483648
    %v491 = vmul.f32 %v490, 1.442695
    %v492 = vpow.pop %v491
    %v493 = vadd.f32 %v492, 1.0
    %v494 = vrcp.pop %v493
    %v495 = vmul.f32 1.0, %v494
    %v496 = vadd.f32 %v487, %v482
    %v497 = vadd.f32 %v488, %v484
    %v498 = vxor.u32 %v496, 2147483648
    %v499 = vxor.u32 %v497, 2147483648
    %v500 = vmul.f32 %v498, 1.442695
    %v501 = vpow.pop %v500
    %v502 = vmul.f32 %v499, 1.442695
    %v503 = vpow.pop %v502
    %v504 = vadd.f32 %v501, 1.0
    %v505 = vadd.f32 %v503, 1.0
    %v506 = vrcp.pop %v504
    %v507 = vmul.f32 1.0, %v506
    %v508 = vrcp.pop %v505
    %v509 = vmul.f32 1.0, %v508
    %v511 = vlaneseq
    %v512 = vshrl.u32 %v511, 7
    %v513 = vsub.s32 0, %v512
    %v514 = vrot.slane %v386, %v513
    %515 = vrot.lane.b32.xlu0 %v514, 64
    %v516 = vpop.permute.xlu0 %515
    %v518 = vadd.f32 %v482, %v516
    %520 = vrot.lane.b32.xlu0 %v518, 64
    %v521 = vpop.permute.xlu0 %520
    %v523 = vmul.f32 %v495, %v521
    %525 = vrot.lane.b32.xlu0 %v523, 64
    %v526 = vpop.permute.xlu0 %525
    %v528 = vadd.f32 %v486, %v526
    %v529 = vtanh.pop %v528
    %v531 = vadd.f32 %v484, %v514
    %533 = vrot.lane.b32.xlu0 %v531, 64
    %v534 = vpop.permute.xlu0 %533
    %v536 = vmul.f32 %v507, %v534
    %538 = vrot.lane.b32.xlu0 %v536, 64
    %v539 = vpop.permute.xlu0 %538
    %v541 = vadd.f32 %v488, %v539
    %v542 = vtanh.pop %v541
    %v543 = vsub.f32 1.0, %v495
    %545 = vrot.lane.b32.xlu0 %v529, 96
    %v546 = vpop.permute.xlu0 %545
    %v548 = vmul.f32 %v543, %v546
    %550 = vrot.lane.b32.xlu0 %v403, 32
    %v551 = vpop.permute.xlu0 %550
    %v553 = vmul.f32 %v495, %v551
    %v554 = vadd.f32 %v548, %v553
    %v555 = vsub.f32 1.0, %v509
    %557 = vrot.lane.b32.xlu0 %v542, 96
    %v558 = vpop.permute.xlu0 %557
    %v560 = vmul.f32 %v555, %v558
    %v561 = vmul.f32 %v509, %v405
    %v562 = vadd.f32 %v560, %v561
    %564 = vrot.lane.b32.xlu0 %v554, 96
    %v565 = vpop.permute.xlu0 %564
    %567 = vst.msk [vmem:[#allocation4] sm:$0xff] %vm410, %v565
    %568 = vst.msk [vmem:[#allocation5 + $0x38] sm:$0xff] %vm410, %v562
    %570 = vrot.lane.b32.xlu0 %v562, 32
    %v571 = vpop.permute.xlu0 %570
    %v573 = vsel %vm410, %v565, %v571
    %v575 = vsel %vm370, %v573, 0
    %577 = vmatprep.subr.mxu0 %v388
    %578 = vmatpush1.msra.mxu0 %v387
    %579 = vmatprep.subr.mxu0 %v390
    %580 = vmatpush1.msra.mxu0 %v389
    %581 = vmatprep.subr.mxu0 %v392
    %582 = vmatpush1.msra.mxu0 %v391
    %583 = vmatprep.subr.mxu0 %v394
    %584 = vmatpush1.msra.mxu0 %v393
    %585 = vmatprep.subr.mxu0 %v396
    %586 = vmatpush1.msra.mxu0 %v395
    %587 = vmatprep.subr.mxu0 %v398
    %588 = vmatpush1.msra.mxu0 %v397
    %589 = vmatprep.subr.mxu0 %v400
    %590 = vmatpush1.msra.mxu0 %v399
    %591 = vmatprep.subr.mxu0 %v402
    %592 = vmatpush1.msra.mxu0 %v401
    %593 = vmatprep.subr.mxu0 0.0
    %594 = vmatpush1.msra.mxu0 0.0
    %595 = vmatprep.subr.mxu0 0.0
    %596 = vmatpush1.msra.mxu0 0.0
    %597 = vmatprep.subr.mxu0 0.0
    %598 = vmatpush1.msra.mxu0 0.0
    %599 = vmatprep.subr.mxu0 0.0
    %600 = vmatpush1.msra.mxu0 0.0
    %601 = vmatprep.subr.mxu0 0.0
    %602 = vmatpush1.msra.mxu0 0.0
    %603 = vmatprep.subr.mxu0 0.0
    %604 = vmatpush1.msra.mxu0 0.0
    %605 = vmatprep.subr.mxu0 0.0
    %606 = vmatpush1.msra.mxu0 0.0
    %607 = vmatprep.subr.mxu0 0.0
    %608 = vmatpush1.msra.mxu0 0.0
    %609 = vmatprep.subr.mxu0 0.0
    %610 = vmatpush1.msra.mxu0 0.0
    %611 = vmatprep.subr.mxu0 0.0
    %612 = vmatpush1.msra.mxu0 0.0
    %613 = vmatprep.subr.mxu0 0.0
    %614 = vmatpush1.msra.mxu0 0.0
    %615 = vmatprep.subr.mxu0 0.0
    %616 = vmatpush1.msra.mxu0 0.0
    %617 = vmatprep.subr.mxu0 0.0
    %618 = vmatpush1.msra.mxu0 0.0
    %619 = vmatprep.subr.mxu0 0.0
    %620 = vmatpush1.msra.mxu0 0.0
    %621 = vmatprep.subr.mxu0 0.0
    %622 = vmatpush1.msra.mxu0 0.0
    %623 = vmatprep.subr.mxu0 0.0
    %624 = vmatpush1.msra.mxu0 0.0
    %625 = vmatprep.subr.mxu0 0.0
    %626 = vmatpush1.msra.mxu0 0.0
    %627 = vmatprep.subr.mxu0 0.0
    %628 = vmatpush1.msra.mxu0 0.0
    %629 = vmatprep.subr.mxu0 0.0
    %630 = vmatpush1.msra.mxu0 0.0
    %631 = vmatprep.subr.mxu0 0.0
    %632 = vmatpush1.msra.mxu0 0.0
    %633 = vmatprep.subr.mxu0 0.0
    %634 = vmatpush1.msra.mxu0 0.0
    %635 = vmatprep.subr.mxu0 0.0
    %636 = vmatpush1.msra.mxu0 0.0
    %637 = vmatprep.subr.mxu0 0.0
    %638 = vmatpush1.msra.mxu0 0.0
    %639 = vmatprep.subr.mxu0 0.0
    %640 = vmatpush1.msra.mxu0 0.0
    %641 = vmatprep.mubr.f32.mxu0 0.0
    %642 = vmatmul.mubr.f32.gmra.mrb[0].mxu0 %v575
    %v643 = vpop.f32.mrb[0].mxu0
    %v644 = vadd.f32 0.0, %v643
    %v645 = vpop.f32.mrb[0].mxu0
    %v646 = vadd.f32 0.0, %v645
    %647 = vdwg.mxu0
    %v648 = vld [vmem:[#allocation3 + $0x10] sm:$0xff]
    %v649 = vld [vmem:[#allocation3 + $0x60] sm:$0xff]
    %v650 = vld [vmem:[#allocation3 + $0x68] sm:$0xff]
    %v651 = vadd.f32 %v648, %v644
    %v652 = vxor.u32 %v651, 2147483648
    %v653 = vmul.f32 %v652, 1.442695
    %v654 = vpow.pop %v653
    %v655 = vadd.f32 %v654, 1.0
    %v656 = vrcp.pop %v655
    %v657 = vmul.f32 1.0, %v656
    %v658 = vadd.f32 %v649, %v644
    %v659 = vadd.f32 %v650, %v646
    %v660 = vxor.u32 %v658, 2147483648
    %v661 = vxor.u32 %v659, 2147483648
    %v662 = vmul.f32 %v660, 1.442695
    %v663 = vpow.pop %v662
    %v664 = vmul.f32 %v661, 1.442695
    %v665 = vpow.pop %v664
    %v666 = vadd.f32 %v663, 1.0
    %v667 = vadd.f32 %v665, 1.0
    %v668 = vrcp.pop %v666
    %v669 = vmul.f32 1.0, %v668
    %v670 = vrcp.pop %v667
    %v671 = vmul.f32 1.0, %v670
    %v672 = vadd.f32 %v644, %v516
    %674 = vrot.lane.b32.xlu0 %v672, 64
    %v675 = vpop.permute.xlu0 %674
    %v677 = vmul.f32 %v657, %v675
    %679 = vrot.lane.b32.xlu0 %v677, 64
    %v680 = vpop.permute.xlu0 %679
    %v682 = vadd.f32 %v648, %v680
    %v683 = vtanh.pop %v682
    %v684 = vadd.f32 %v646, %v514
    %686 = vrot.lane.b32.xlu0 %v684, 64
    %v687 = vpop.permute.xlu0 %686
    %v689 = vmul.f32 %v669, %v687
    %691 = vrot.lane.b32.xlu0 %v689, 64
    %v692 = vpop.permute.xlu0 %691
    %v694 = vadd.f32 %v650, %v692
    %v695 = vtanh.pop %v694
    %v696 = vsub.f32 1.0, %v657
    %698 = vrot.lane.b32.xlu0 %v683, 96
    %v699 = vpop.permute.xlu0 %698
    %v701 = vmul.f32 %v696, %v699
    %v702 = vmul.f32 %v657, %v554
    %v703 = vadd.f32 %v701, %v702
    %v704 = vsub.f32 1.0, %v671
    %706 = vrot.lane.b32.xlu0 %v695, 96
    %v707 = vpop.permute.xlu0 %706
    %v709 = vmul.f32 %v704, %v707
    %v710 = vmul.f32 %v671, %v562
    %v711 = vadd.f32 %v709, %v710
    %713 = vrot.lane.b32.xlu0 %v703, 96
    %v714 = vpop.permute.xlu0 %713
    %716 = vst.msk [vmem:[#allocation4 + $0x8] sm:$0xff] %vm410, %v714
    %717 = vst.msk [vmem:[#allocation5 + $0x30] sm:$0xff] %vm410, %v711
    %719 = vrot.lane.b32.xlu0 %v711, 32
    %v720 = vpop.permute.xlu0 %719
    %v722 = vsel %vm410, %v714, %v720
    %v724 = vsel %vm370, %v722, 0
    %726 = vmatprep.subr.mxu0 %v388
    %727 = vmatpush1.msra.mxu0 %v387
    %728 = vmatprep.subr.mxu0 %v390
    %729 = vmatpush1.msra.mxu0 %v389
    %730 = vmatprep.subr.mxu0 %v392
    %731 = vmatpush1.msra.mxu0 %v391
    %732 = vmatprep.subr.mxu0 %v394
    %733 = vmatpush1.msra.mxu0 %v393
    %734 = vmatprep.subr.mxu0 %v396
    %735 = vmatpush1.msra.mxu0 %v395
    %736 = vmatprep.subr.mxu0 %v398
    %737 = vmatpush1.msra.mxu0 %v397
    %738 = vmatprep.subr.mxu0 %v400
    %739 = vmatpush1.msra.mxu0 %v399
    %740 = vmatprep.subr.mxu0 %v402
    %741 = vmatpush1.msra.mxu0 %v401
    %742 = vmatprep.subr.mxu0 0.0
    %743 = vmatpush1.msra.mxu0 0.0
    %744 = vmatprep.subr.mxu0 0.0
    %745 = vmatpush1.msra.mxu0 0.0
    %746 = vmatprep.subr.mxu0 0.0
    %747 = vmatpush1.msra.mxu0 0.0
    %748 = vmatprep.subr.mxu0 0.0
    %749 = vmatpush1.msra.mxu0 0.0
    %750 = vmatprep.subr.mxu0 0.0
    %751 = vmatpush1.msra.mxu0 0.0
    %752 = vmatprep.subr.mxu0 0.0
    %753 = vmatpush1.msra.mxu0 0.0
    %754 = vmatprep.subr.mxu0 0.0
    %755 = vmatpush1.msra.mxu0 0.0
    %756 = vmatprep.subr.mxu0 0.0
    %757 = vmatpush1.msra.mxu0 0.0
    %758 = vmatprep.subr.mxu0 0.0
    %759 = vmatpush1.msra.mxu0 0.0
    %760 = vmatprep.subr.mxu0 0.0
    %761 = vmatpush1.msra.mxu0 0.0
    %762 = vmatprep.subr.mxu0 0.0
    %763 = vmatpush1.msra.mxu0 0.0
    %764 = vmatprep.subr.mxu0 0.0
    %765 = vmatpush1.msra.mxu0 0.0
    %766 = vmatprep.subr.mxu0 0.0
    %767 = vmatpush1.msra.mxu0 0.0
    %768 = vmatprep.subr.mxu0 0.0
    %769 = vmatpush1.msra.mxu0 0.0
    %770 = vmatprep.subr.mxu0 0.0
    %771 = vmatpush1.msra.mxu0 0.0
    %772 = vmatprep.subr.mxu0 0.0
    %773 = vmatpush1.msra.mxu0 0.0
    %774 = vmatprep.subr.mxu0 0.0
    %775 = vmatpush1.msra.mxu0 0.0
    %776 = vmatprep.subr.mxu0 0.0
    %777 = vmatpush1.msra.mxu0 0.0
    %778 = vmatprep.subr.mxu0 0.0
    %779 = vmatpush1.msra.mxu0 0.0
    %780 = vmatprep.subr.mxu0 0.0
    %781 = vmatpush1.msra.mxu0 0.0
    %782 = vmatprep.subr.mxu0 0.0
    %783 = vmatpush1.msra.mxu0 0.0
    %784 = vmatprep.subr.mxu0 0.0
    %785 = vmatpush1.msra.mxu0 0.0
    %786 = vmatprep.subr.mxu0 0.0
    %787 = vmatpush1.msra.mxu0 0.0
    %788 = vmatprep.subr.mxu0 0.0
    %789 = vmatpush1.msra.mxu0 0.0
    %790 = vmatprep.mubr.f32.mxu0 0.0
    %791 = vmatmul.mubr.f32.gmra.mrb[0].mxu0 %v724
    %v792 = vpop.f32.mrb[0].mxu0
    %v793 = vadd.f32 0.0, %v792
    %v794 = vpop.f32.mrb[0].mxu0
    %v795 = vadd.f32 0.0, %v794
    %796 = vdwg.mxu0
    %v797 = vld [vmem:[#allocation3 + $0x20] sm:$0xff]
    %v798 = vld [vmem:[#allocation3 + $0x50] sm:$0xff]
    %v799 = vld [vmem:[#allocation3 + $0x58] sm:$0xff]
    %v800 = vadd.f32 %v797, %v793
    %v801 = vxor.u32 %v800, 2147483648
    %v802 = vmul.f32 %v801, 1.442695
    %v803 = vpow.pop %v802
    %v804 = vadd.f32 %v803, 1.0
    %v805 = vrcp.pop %v804
    %v806 = vmul.f32 1.0, %v805
    %v807 = vadd.f32 %v798, %v793
    %v808 = vadd.f32 %v799, %v795
    %v809 = vxor.u32 %v807, 2147483648
    %v810 = vxor.u32 %v808, 2147483648
    %v811 = vmul.f32 %v809, 1.442695
    %v812 = vpow.pop %v811
    %v813 = vmul.f32 %v810, 1.442695
    %v814 = vpow.pop %v813
    %v815 = vadd.f32 %v812, 1.0
    %v816 = vadd.f32 %v814, 1.0
    %v817 = vrcp.pop %v815
    %v818 = vmul.f32 1.0, %v817
    %v819 = vrcp.pop %v816
    %v820 = vmul.f32 1.0, %v819
    %v821 = vadd.f32 %v793, %v516
    %823 = vrot.lane.b32.xlu0 %v821, 64
    %v824 = vpop.permute.xlu0 %823
    %v826 = vmul.f32 %v806, %v824
    %828 = vrot.lane.b32.xlu0 %v826, 64
    %v829 = vpop.permute.xlu0 %828
    %v831 = vadd.f32 %v797, %v829
    %v832 = vtanh.pop %v831
    %v833 = vadd.f32 %v795, %v514
    %835 = vrot.lane.b32.xlu0 %v833, 64
    %v836 = vpop.permute.xlu0 %835
    %v838 = vmul.f32 %v818, %v836
    %840 = vrot.lane.b32.xlu0 %v838, 64
    %v841 = vpop.permute.xlu0 %840
    %v843 = vadd.f32 %v799, %v841
    %v844 = vtanh.pop %v843
    %v845 = vsub.f32 1.0, %v806
    %847 = vrot.lane.b32.xlu0 %v832, 96
    %v848 = vpop.permute.xlu0 %847
    %v850 = vmul.f32 %v845, %v848
    %v851 = vmul.f32 %v806, %v703
    %v852 = vadd.f32 %v850, %v851
    %v853 = vsub.f32 1.0, %v820
    %855 = vrot.lane.b32.xlu0 %v844, 96
    %v856 = vpop.permute.xlu0 %855
    %v858 = vmul.f32 %v853, %v856
    %v859 = vmul.f32 %v820, %v711
    %v860 = vadd.f32 %v858, %v859
    %862 = vrot.lane.b32.xlu0 %v852, 96
    %v863 = vpop.permute.xlu0 %862
    %865 = vst.msk [vmem:[#allocation4 + $0x10] sm:$0xff] %vm410, %v863
    %866 = vst.msk [vmem:[#allocation5 + $0x28] sm:$0xff] %vm410, %v860
    %868 = vrot.lane.b32.xlu0 %v860, 32
    %v869 = vpop.permute.xlu0 %868
    %v871 = vsel %vm410, %v863, %v869
    %v873 = vsel %vm370, %v871, 0
    %875 = vmatprep.subr.mxu0 %v388
    %876 = vmatpush1.msra.mxu0 %v387
    %877 = vmatprep.subr.mxu0 %v390
    %878 = vmatpush1.msra.mxu0 %v389
    %879 = vmatprep.subr.mxu0 %v392
    %880 = vmatpush1.msra.mxu0 %v391
    %881 = vmatprep.subr.mxu0 %v394
    %882 = vmatpush1.msra.mxu0 %v393
    %883 = vmatprep.subr.mxu0 %v396
    %884 = vmatpush1.msra.mxu0 %v395
    %885 = vmatprep.subr.mxu0 %v398
    %886 = vmatpush1.msra.mxu0 %v397
    %887 = vmatprep.subr.mxu0 %v400
    %888 = vmatpush1.msra.mxu0 %v399
    %889 = vmatprep.subr.mxu0 %v402
    %890 = vmatpush1.msra.mxu0 %v401
    %891 = vmatprep.subr.mxu0 0.0
    %892 = vmatpush1.msra.mxu0 0.0
    %893 = vmatprep.subr.mxu0 0.0
    %894 = vmatpush1.msra.mxu0 0.0
    %895 = vmatprep.subr.mxu0 0.0
    %896 = vmatpush1.msra.mxu0 0.0
    %897 = vmatprep.subr.mxu0 0.0
    %898 = vmatpush1.msra.mxu0 0.0
    %899 = vmatprep.subr.mxu0 0.0
    %900 = vmatpush1.msra.mxu0 0.0
    %901 = vmatprep.subr.mxu0 0.0
    %902 = vmatpush1.msra.mxu0 0.0
    %903 = vmatprep.subr.mxu0 0.0
    %904 = vmatpush1.msra.mxu0 0.0
    %905 = vmatprep.subr.mxu0 0.0
    %906 = vmatpush1.msra.mxu0 0.0
    %907 = vmatprep.subr.mxu0 0.0
    %908 = vmatpush1.msra.mxu0 0.0
    %909 = vmatprep.subr.mxu0 0.0
    %910 = vmatpush1.msra.mxu0 0.0
    %911 = vmatprep.subr.mxu0 0.0
    %912 = vmatpush1.msra.mxu0 0.0
    %913 = vmatprep.subr.mxu0 0.0
    %914 = vmatpush1.msra.mxu0 0.0
    %915 = vmatprep.subr.mxu0 0.0
    %916 = vmatpush1.msra.mxu0 0.0
    %917 = vmatprep.subr.mxu0 0.0
    %918 = vmatpush1.msra.mxu0 0.0
    %919 = vmatprep.subr.mxu0 0.0
    %920 = vmatpush1.msra.mxu0 0.0
    %921 = vmatprep.subr.mxu0 0.0
    %922 = vmatpush1.msra.mxu0 0.0
    %923 = vmatprep.subr.mxu0 0.0
    %924 = vmatpush1.msra.mxu0 0.0
    %925 = vmatprep.subr.mxu0 0.0
    %926 = vmatpush1.msra.mxu0 0.0
    %927 = vmatprep.subr.mxu0 0.0
    %928 = vmatpush1.msra.mxu0 0.0
    %929 = vmatprep.subr.mxu0 0.0
    %930 = vmatpush1.msra.mxu0 0.0
    %931 = vmatprep.subr.mxu0 0.0
    %932 = vmatpush1.msra.mxu0 0.0
    %933 = vmatprep.subr.mxu0 0.0
    %934 = vmatpush1.msra.mxu0 0.0
    %935 = vmatprep.subr.mxu0 0.0
    %936 = vmatpush1.msra.mxu0 0.0
    %937 = vmatprep.subr.mxu0 0.0
    %938 = vmatpush1.msra.mxu0 0.0
    %939 = vmatprep.mubr.f32.mxu0 0.0
    %940 = vmatmul.mubr.f32.gmra.mrb[0].mxu0 %v873
    %v941 = vpop.f32.mrb[0].mxu0
    %v942 = vadd.f32 0.0, %v941
    %v943 = vpop.f32.mrb[0].mxu0
    %v944 = vadd.f32 0.0, %v943
    %945 = vdwg.mxu0
    %v946 = vld [vmem:[#allocation3 + $0x30] sm:$0xff]
    %v947 = vld [vmem:[#allocation3 + $0x40] sm:$0xff]
    %v948 = vld [vmem:[#allocation3 + $0x48] sm:$0xff]
    %v949 = vadd.f32 %v946, %v942
    %v950 = vxor.u32 %v949, 2147483648
    %v951 = vmul.f32 %v950, 1.442695
    %v952 = vpow.pop %v951
    %v953 = vadd.f32 %v952, 1.0
    %v954 = vrcp.pop %v953
    %v955 = vmul.f32 1.0, %v954
    %v956 = vadd.f32 %v947, %v942
    %v957 = vadd.f32 %v948, %v944
    %v958 = vxor.u32 %v956, 2147483648
    %v959 = vxor.u32 %v957, 2147483648
    %v960 = vmul.f32 %v958, 1.442695
    %v961 = vpow.pop %v960
    %v962 = vmul.f32 %v959, 1.442695
    %v963 = vpow.pop %v962
    %v964 = vadd.f32 %v961, 1.0
    %v965 = vadd.f32 %v963, 1.0
    %v966 = vrcp.pop %v964
    %v967 = vmul.f32 1.0, %v966
    %v968 = vrcp.pop %v965
    %v969 = vmul.f32 1.0, %v968
    %v970 = vadd.f32 %v942, %v516
    %972 = vrot.lane.b32.xlu0 %v970, 64
    %v973 = vpop.permute.xlu0 %972
    %v975 = vmul.f32 %v955, %v973
    %977 = vrot.lane.b32.xlu0 %v975, 64
    %v978 = vpop.permute.xlu0 %977
    %v980 = vadd.f32 %v946, %v978
    %v981 = vtanh.pop %v980
    %v982 = vadd.f32 %v944, %v514
    %984 = vrot.lane.b32.xlu0 %v982, 64
    %v985 = vpop.permute.xlu0 %984
    %v987 = vmul.f32 %v967, %v985
    %989 = vrot.lane.b32.xlu0 %v987, 64
    %v990 = vpop.permute.xlu0 %989
    %v992 = vadd.f32 %v948, %v990
    %v993 = vtanh.pop %v992
    %v994 = vsub.f32 1.0, %v955
    %996 = vrot.lane.b32.xlu0 %v981, 96
    %v997 = vpop.permute.xlu0 %996
    %v999 = vmul.f32 %v994, %v997
    %v1000 = vmul.f32 %v955, %v852
    %v1001 = vadd.f32 %v999, %v1000
    %v1002 = vsub.f32 1.0, %v969
    %1004 = vrot.lane.b32.xlu0 %v993, 96
    %v1005 = vpop.permute.xlu0 %1004
    %v1007 = vmul.f32 %v1002, %v1005
    %v1008 = vmul.f32 %v969, %v860
    %v1009 = vadd.f32 %v1007, %v1008
    %1011 = vrot.lane.b32.xlu0 %v1001, 96
    %v1012 = vpop.permute.xlu0 %1011
    %1014 = vst.msk [vmem:[#allocation4 + $0x18] sm:$0xff] %vm410, %v1012
    %1015 = vst.msk [vmem:[#allocation5 + $0x20] sm:$0xff] %vm410, %v1009
    %1017 = vrot.lane.b32.xlu0 %v1009, 32
    %v1018 = vpop.permute.xlu0 %1017
    %v1020 = vsel %vm410, %v1012, %v1018
    %v1022 = vsel %vm370, %v1020, 0
    %1024 = vmatprep.subr.mxu0 %v388
    %1025 = vmatpush1.msra.mxu0 %v387
    %1026 = vmatprep.subr.mxu0 %v390
    %1027 = vmatpush1.msra.mxu0 %v389
    %1028 = vmatprep.subr.mxu0 %v392
    %1029 = vmatpush1.msra.mxu0 %v391
    %1030 = vmatprep.subr.mxu0 %v394
    %1031 = vmatpush1.msra.mxu0 %v393
    %1032 = vmatprep.subr.mxu0 %v396
    %1033 = vmatpush1.msra.mxu0 %v395
    %1034 = vmatprep.subr.mxu0 %v398
    %1035 = vmatpush1.msra.mxu0 %v397
    %1036 = vmatprep.subr.mxu0 %v400
    %1037 = vmatpush1.msra.mxu0 %v399
    %1038 = vmatprep.subr.mxu0 %v402
    %1039 = vmatpush1.msra.mxu0 %v401
    %1040 = vmatprep.subr.mxu0 0.0
    %1041 = vmatpush1.msra.mxu0 0.0
    %1042 = vmatprep.subr.mxu0 0.0
    %1043 = vmatpush1.msra.mxu0 0.0
    %1044 = vmatprep.subr.mxu0 0.0
    %1045 = vmatpush1.msra.mxu0 0.0
    %1046 = vmatprep.subr.mxu0 0.0
    %1047 = vmatpush1.msra.mxu0 0.0
    %1048 = vmatprep.subr.mxu0 0.0
    %1049 = vmatpush1.msra.mxu0 0.0
    %1050 = vmatprep.subr.mxu0 0.0
    %1051 = vmatpush1.msra.mxu0 0.0
    %1052 = vmatprep.subr.mxu0 0.0
    %1053 = vmatpush1.msra.mxu0 0.0
    %1054 = vmatprep.subr.mxu0 0.0
    %1055 = vmatpush1.msra.mxu0 0.0
    %1056 = vmatprep.subr.mxu0 0.0
    %1057 = vmatpush1.msra.mxu0 0.0
    %1058 = vmatprep.subr.mxu0 0.0
    %1059 = vmatpush1.msra.mxu0 0.0
    %1060 = vmatprep.subr.mxu0 0.0
    %1061 = vmatpush1.msra.mxu0 0.0
    %1062 = vmatprep.subr.mxu0 0.0
    %1063 = vmatpush1.msra.mxu0 0.0
    %1064 = vmatprep.subr.mxu0 0.0
    %1065 = vmatpush1.msra.mxu0 0.0
    %1066 = vmatprep.subr.mxu0 0.0
    %1067 = vmatpush1.msra.mxu0 0.0
    %1068 = vmatprep.subr.mxu0 0.0
    %1069 = vmatpush1.msra.mxu0 0.0
    %1070 = vmatprep.subr.mxu0 0.0
    %1071 = vmatpush1.msra.mxu0 0.0
    %1072 = vmatprep.subr.mxu0 0.0
    %1073 = vmatpush1.msra.mxu0 0.0
    %1074 = vmatprep.subr.mxu0 0.0
    %1075 = vmatpush1.msra.mxu0 0.0
    %1076 = vmatprep.subr.mxu0 0.0
    %1077 = vmatpush1.msra.mxu0 0.0
    %1078 = vmatprep.subr.mxu0 0.0
    %1079 = vmatpush1.msra.mxu0 0.0
    %1080 = vmatprep.subr.mxu0 0.0
    %1081 = vmatpush1.msra.mxu0 0.0
    %1082 = vmatprep.subr.mxu0 0.0
    %1083 = vmatpush1.msra.mxu0 0.0
    %1084 = vmatprep.subr.mxu0 0.0
    %1085 = vmatpush1.msra.mxu0 0.0
    %1086 = vmatprep.subr.mxu0 0.0
    %1087 = vmatpush1.msra.mxu0 0.0
    %1088 = vmatprep.mubr.f32.mxu0 0.0
    %1089 = vmatmul.mubr.f32.gmra.mrb[0].mxu0 %v1022
    %v1090 = vpop.f32.mrb[0].mxu0
    %v1091 = vadd.f32 0.0, %v1090
    %v1092 = vpop.f32.mrb[0].mxu0
    %v1093 = vadd.f32 0.0, %v1092
    %1094 = vdwg.mxu0
    %v1095 = vld [vmem:[#allocation3 + $0x40] sm:$0xff]
    %v1096 = vld [vmem:[#allocation3 + $0x30] sm:$0xff]
    %v1097 = vld [vmem:[#allocation3 + $0x38] sm:$0xff]
    %v1098 = vadd.f32 %v1095, %v1091
    %v1099 = vxor.u32 %v1098, 2147483648
    %v1100 = vmul.f32 %v1099, 1.442695
    %v1101 = vpow.pop %v1100
    %v1102 = vadd.f32 %v1101, 1.0
    %v1103 = vrcp.pop %v1102
    %v1104 = vmul.f32 1.0, %v1103
    %v1105 = vadd.f32 %v1096, %v1091
    %v1106 = vadd.f32 %v1097, %v1093
    %v1107 = vxor.u32 %v1105, 2147483648
    %v1108 = vxor.u32 %v1106, 2147483648
    %v1109 = vmul.f32 %v1107, 1.442695
    %v1110 = vpow.pop %v1109
    %v1111 = vmul.f32 %v1108, 1.442695
    %v1112 = vpow.pop %v1111
    %v1113 = vadd.f32 %v1110, 1.0
    %v1114 = vadd.f32 %v1112, 1.0
    %v1115 = vrcp.pop %v1113
    %v1116 = vmul.f32 1.0, %v1115
    %v1117 = vrcp.pop %v1114
    %v1118 = vmul.f32 1.0, %v1117
    %v1119 = vadd.f32 %v1091, %v516
    %1121 = vrot.lane.b32.xlu0 %v1119, 64
    %v1122 = vpop.permute.xlu0 %1121
    %v1124 = vmul.f32 %v1104, %v1122
    %1126 = vrot.lane.b32.xlu0 %v1124, 64
    %v1127 = vpop.permute.xlu0 %1126
    %v1129 = vadd.f32 %v1095, %v1127
    %v1130 = vtanh.pop %v1129
    %v1131 = vadd.f32 %v1093, %v514
    %1133 = vrot.lane.b32.xlu0 %v1131, 64
    %v1134 = vpop.permute.xlu0 %1133
    %v1136 = vmul.f32 %v1116, %v1134
    %1138 = vrot.lane.b32.xlu0 %v1136, 64
    %v1139 = vpop.permute.xlu0 %1138
    %v1141 = vadd.f32 %v1097, %v1139
    %v1142 = vtanh.pop %v1141
    %v1143 = vsub.f32 1.0, %v1104
    %1145 = vrot.lane.b32.xlu0 %v1130, 96
    %v1146 = vpop.permute.xlu0 %1145
    %v1148 = vmul.f32 %v1143, %v1146
    %v1149 = vmul.f32 %v1104, %v1001
    %v1150 = vadd.f32 %v1148, %v1149
    %v1151 = vsub.f32 1.0, %v1118
    %1153 = vrot.lane.b32.xlu0 %v1142, 96
    %v1154 = vpop.permute.xlu0 %1153
    %v1156 = vmul.f32 %v1151, %v1154
    %v1157 = vmul.f32 %v1118, %v1009
    %v1158 = vadd.f32 %v1156, %v1157
    %1160 = vrot.lane.b32.xlu0 %v1150, 96
    %v1161 = vpop.permute.xlu0 %1160
    %1163 = vst.msk [vmem:[#allocation4 + $0x20] sm:$0xff] %vm410, %v1161
    %1164 = vst.msk [vmem:[#allocation5 + $0x18] sm:$0xff] %vm410, %v1158
    %1166 = vrot.lane.b32.xlu0 %v1158, 32
    %v1167 = vpop.permute.xlu0 %1166
    %v1169 = vsel %vm410, %v1161, %v1167
    %v1171 = vsel %vm370, %v1169, 0
    %1173 = vmatprep.subr.mxu0 %v388
    %1174 = vmatpush1.msra.mxu0 %v387
    %1175 = vmatprep.subr.mxu0 %v390
    %1176 = vmatpush1.msra.mxu0 %v389
    %1177 = vmatprep.subr.mxu0 %v392
    %1178 = vmatpush1.msra.mxu0 %v391
    %1179 = vmatprep.subr.mxu0 %v394
    %1180 = vmatpush1.msra.mxu0 %v393
    %1181 = vmatprep.subr.mxu0 %v396
    %1182 = vmatpush1.msra.mxu0 %v395
    %1183 = vmatprep.subr.mxu0 %v398
    %1184 = vmatpush1.msra.mxu0 %v397
    %1185 = vmatprep.subr.mxu0 %v400
    %1186 = vmatpush1.msra.mxu0 %v399
    %1187 = vmatprep.subr.mxu0 %v402
    %1188 = vmatpush1.msra.mxu0 %v401
    %1189 = vmatprep.subr.mxu0 0.0
    %1190 = vmatpush1.msra.mxu0 0.0
    %1191 = vmatprep.subr.mxu0 0.0
    %1192 = vmatpush1.msra.mxu0 0.0
    %1193 = vmatprep.subr.mxu0 0.0
    %1194 = vmatpush1.msra.mxu0 0.0
    %1195 = vmatprep.subr.mxu0 0.0
    %1196 = vmatpush1.msra.mxu0 0.0
    %1197 = vmatprep.subr.mxu0 0.0
    %1198 = vmatpush1.msra.mxu0 0.0
    %1199 = vmatprep.subr.mxu0 0.0
    %1200 = vmatpush1.msra.mxu0 0.0
    %1201 = vmatprep.subr.mxu0 0.0
    %1202 = vmatpush1.msra.mxu0 0.0
    %1203 = vmatprep.subr.mxu0 0.0
    %1204 = vmatpush1.msra.mxu0 0.0
    %1205 = vmatprep.subr.mxu0 0.0
    %1206 = vmatpush1.msra.mxu0 0.0
    %1207 = vmatprep.subr.mxu0 0.0
    %1208 = vmatpush1.msra.mxu0 0.0
    %1209 = vmatprep.subr.mxu0 0.0
    %1210 = vmatpush1.msra.mxu0 0.0
    %1211 = vmatprep.subr.mxu0 0.0
    %1212 = vmatpush1.msra.mxu0 0.0
    %1213 = vmatprep.subr.mxu0 0.0
    %1214 = vmatpush1.msra.mxu0 0.0
    %1215 = vmatprep.subr.mxu0 0.0
    %1216 = vmatpush1.msra.mxu0 0.0
    %1217 = vmatprep.subr.mxu0 0.0
    %1218 = vmatpush1.msra.mxu0 0.0
    %1219 = vmatprep.subr.mxu0 0.0
    %1220 = vmatpush1.msra.mxu0 0.0
    %1221 = vmatprep.subr.mxu0 0.0
    %1222 = vmatpush1.msra.mxu0 0.0
    %1223 = vmatprep.subr.mxu0 0.0
    %1224 = vmatpush1.msra.mxu0 0.0
    %1225 = vmatprep.subr.mxu0 0.0
    %1226 = vmatpush1.msra.mxu0 0.0
    %1227 = vmatprep.subr.mxu0 0.0
    %1228 = vmatpush1.msra.mxu0 0.0
    %1229 = vmatprep.subr.mxu0 0.0
    %1230 = vmatpush1.msra.mxu0 0.0
    %1231 = vmatprep.subr.mxu0 0.0
    %1232 = vmatpush1.msra.mxu0 0.0
    %1233 = vmatprep.subr.mxu0 0.0
    %1234 = vmatpush1.msra.mxu0 0.0
    %1235 = vmatprep.subr.mxu0 0.0
    %1236 = vmatpush1.msra.mxu0 0.0
    %1237 = vmatprep.mubr.f32.mxu0 0.0
    %1238 = vmatmul.mubr.f32.gmra.mrb[0].mxu0 %v1171
    %v1239 = vpop.f32.mrb[0].mxu0
    %v1240 = vadd.f32 0.0, %v1239
    %v1241 = vpop.f32.mrb[0].mxu0
    %v1242 = vadd.f32 0.0, %v1241
    %1243 = vdwg.mxu0
    %v1244 = vld [vmem:[#allocation3 + $0x50] sm:$0xff]
    %v1245 = vld [vmem:[#allocation3 + $0x20] sm:$0xff]
    %v1246 = vld [vmem:[#allocation3 + $0x28] sm:$0xff]
    %v1247 = vadd.f32 %v1244, %v1240
    %v1248 = vxor.u32 %v1247, 2147483648
    %v1249 = vmul.f32 %v1248, 1.442695
    %v1250 = vpow.pop %v1249
    %v1251 = vadd.f32 %v1250, 1.0
    %v1252 = vrcp.pop %v1251
    %v1253 = vmul.f32 1.0, %v1252
    %v1254 = vadd.f32 %v1245, %v1240
    %v1255 = vadd.f32 %v1246, %v1242
    %v1256 = vxor.u32 %v1254, 2147483648
    %v1257 = vxor.u32 %v1255, 2147483648
    %v1258 = vmul.f32 %v1256, 1.442695
    %v1259 = vpow.pop %v1258
    %v1260 = vmul.f32 %v1257, 1.442695
    %v1261 = vpow.pop %v1260
    %v1262 = vadd.f32 %v1259, 1.0
    %v1263 = vadd.f32 %v1261, 1.0
    %v1264 = vrcp.pop %v1262
    %v1265 = vmul.f32 1.0, %v1264
    %v1266 = vrcp.pop %v1263
    %v1267 = vmul.f32 1.0, %v1266
    %v1268 = vadd.f32 %v1240, %v516
    %1270 = vrot.lane.b32.xlu0 %v1268, 64
    %v1271 = vpop.permute.xlu0 %1270
    %v1273 = vmul.f32 %v1253, %v1271
    %1275 = vrot.lane.b32.xlu0 %v1273, 64
    %v1276 = vpop.permute.xlu0 %1275
    %v1278 = vadd.f32 %v1244, %v1276
    %v1279 = vtanh.pop %v1278
    %v1280 = vadd.f32 %v1242, %v514
    %1282 = vrot.lane.b32.xlu0 %v1280, 64
    %v1283 = vpop.permute.xlu0 %1282
    %v1285 = vmul.f32 %v1265, %v1283
    %1287 = vrot.lane.b32.xlu0 %v1285, 64
    %v1288 = vpop.permute.xlu0 %1287
    %v1290 = vadd.f32 %v1246, %v1288
    %v1291 = vtanh.pop %v1290
    %v1292 = vsub.f32 1.0, %v1253
    %1294 = vrot.lane.b32.xlu0 %v1279, 96
    %v1295 = vpop.permute.xlu0 %1294
    %v1297 = vmul.f32 %v1292, %v1295
    %v1298 = vmul.f32 %v1253, %v1150
    %v1299 = vadd.f32 %v1297, %v1298
    %v1300 = vsub.f32 1.0, %v1267
    %1302 = vrot.lane.b32.xlu0 %v1291, 96
    %v1303 = vpop.permute.xlu0 %1302
    %v1305 = vmul.f32 %v1300, %v1303
    %v1306 = vmul.f32 %v1267, %v1158
    %v1307 = vadd.f32 %v1305, %v1306
    %1309 = vrot.lane.b32.xlu0 %v1299, 96
    %v1310 = vpop.permute.xlu0 %1309
    %1312 = vst.msk [vmem:[#allocation4 + $0x28] sm:$0xff] %vm410, %v1310
    %1313 = vst.msk [vmem:[#allocation5 + $0x10] sm:$0xff] %vm410, %v1307
    %1315 = vrot.lane.b32.xlu0 %v1307, 32
    %v1316 = vpop.permute.xlu0 %1315
    %v1318 = vsel %vm410, %v1310, %v1316
    %v1320 = vsel %vm370, %v1318, 0
    %1322 = vmatprep.subr.mxu0 %v388
    %1323 = vmatpush1.msra.mxu0 %v387
    %1324 = vmatprep.subr.mxu0 %v390
    %1325 = vmatpush1.msra.mxu0 %v389
    %1326 = vmatprep.subr.mxu0 %v392
    %1327 = vmatpush1.msra.mxu0 %v391
    %1328 = vmatprep.subr.mxu0 %v394
    %1329 = vmatpush1.msra.mxu0 %v393
    %1330 = vmatprep.subr.mxu0 %v396
    %1331 = vmatpush1.msra.mxu0 %v395
    %1332 = vmatprep.subr.mxu0 %v398
    %1333 = vmatpush1.msra.mxu0 %v397
    %1334 = vmatprep.subr.mxu0 %v400
    %1335 = vmatpush1.msra.mxu0 %v399
    %1336 = vmatprep.subr.mxu0 %v402
    %1337 = vmatpush1.msra.mxu0 %v401
    %1338 = vmatprep.subr.mxu0 0.0
    %1339 = vmatpush1.msra.mxu0 0.0
    %1340 = vmatprep.subr.mxu0 0.0
    %1341 = vmatpush1.msra.mxu0 0.0
    %1342 = vmatprep.subr.mxu0 0.0
    %1343 = vmatpush1.msra.mxu0 0.0
    %1344 = vmatprep.subr.mxu0 0.0
    %1345 = vmatpush1.msra.mxu0 0.0
    %1346 = vmatprep.subr.mxu0 0.0
    %1347 = vmatpush1.msra.mxu0 0.0
    %1348 = vmatprep.subr.mxu0 0.0
    %1349 = vmatpush1.msra.mxu0 0.0
    %1350 = vmatprep.subr.mxu0 0.0
    %1351 = vmatpush1.msra.mxu0 0.0
    %1352 = vmatprep.subr.mxu0 0.0
    %1353 = vmatpush1.msra.mxu0 0.0
    %1354 = vmatprep.subr.mxu0 0.0
    %1355 = vmatpush1.msra.mxu0 0.0
    %1356 = vmatprep.subr.mxu0 0.0
    %1357 = vmatpush1.msra.mxu0 0.0
    %1358 = vmatprep.subr.mxu0 0.0
    %1359 = vmatpush1.msra.mxu0 0.0
    %1360 = vmatprep.subr.mxu0 0.0
    %1361 = vmatpush1.msra.mxu0 0.0
    %1362 = vmatprep.subr.mxu0 0.0
    %1363 = vmatpush1.msra.mxu0 0.0
    %1364 = vmatprep.subr.mxu0 0.0
    %1365 = vmatpush1.msra.mxu0 0.0
    %1366 = vmatprep.subr.mxu0 0.0
    %1367 = vmatpush1.msra.mxu0 0.0
    %1368 = vmatprep.subr.mxu0 0.0
    %1369 = vmatpush1.msra.mxu0 0.0
    %1370 = vmatprep.subr.mxu0 0.0
    %1371 = vmatpush1.msra.mxu0 0.0
    %1372 = vmatprep.subr.mxu0 0.0
    %1373 = vmatpush1.msra.mxu0 0.0
    %1374 = vmatprep.subr.mxu0 0.0
    %1375 = vmatpush1.msra.mxu0 0.0
    %1376 = vmatprep.subr.mxu0 0.0
    %1377 = vmatpush1.msra.mxu0 0.0
    %1378 = vmatprep.subr.mxu0 0.0
    %1379 = vmatpush1.msra.mxu0 0.0
    %1380 = vmatprep.subr.mxu0 0.0
    %1381 = vmatpush1.msra.mxu0 0.0
    %1382 = vmatprep.subr.mxu0 0.0
    %1383 = vmatpush1.msra.mxu0 0.0
    %1384 = vmatprep.subr.mxu0 0.0
    %1385 = vmatpush1.msra.mxu0 0.0
    %1386 = vmatprep.mubr.f32.mxu0 0.0
    %1387 = vmatmul.mubr.f32.gmra.mrb[0].mxu0 %v1320
    %v1388 = vpop.f32.mrb[0].mxu0
    %v1389 = vadd.f32 0.0, %v1388
    %v1390 = vpop.f32.mrb[0].mxu0
    %v1391 = vadd.f32 0.0, %v1390
    %1392 = vdwg.mxu0
    %v1393 = vld [vmem:[#allocation3 + $0x60] sm:$0xff]
    %v1394 = vld [vmem:[#allocation3 + $0x10] sm:$0xff]
    %v1395 = vld [vmem:[#allocation3 + $0x18] sm:$0xff]
    %v1396 = vadd.f32 %v1393, %v1389
    %v1397 = vxor.u32 %v1396, 2147483648
    %v1398 = vmul.f32 %v1397, 1.442695
    %v1399 = vpow.pop %v1398
    %v1400 = vadd.f32 %v1399, 1.0
    %v1401 = vrcp.pop %v1400
    %v1402 = vmul.f32 1.0, %v1401
    %v1403 = vadd.f32 %v1394, %v1389
    %v1404 = vadd.f32 %v1395, %v1391
    %v1405 = vxor.u32 %v1403, 2147483648
    %v1406 = vxor.u32 %v1404, 2147483648
    %v1407 = vmul.f32 %v1405, 1.442695
    %v1408 = vpow.pop %v1407
    %v1409 = vmul.f32 %v1406, 1.442695
    %v1410 = vpow.pop %v1409
    %v1411 = vadd.f32 %v1408, 1.0
    %v1412 = vadd.f32 %v1410, 1.0
    %v1413 = vrcp.pop %v1411
    %v1414 = vmul.f32 1.0, %v1413
    %v1415 = vrcp.pop %v1412
    %v1416 = vmul.f32 1.0, %v1415
    %v1417 = vadd.f32 %v1389, %v516
    %1419 = vrot.lane.b32.xlu0 %v1417, 64
    %v1420 = vpop.permute.xlu0 %1419
    %v1422 = vmul.f32 %v1402, %v1420
    %1424 = vrot.lane.b32.xlu0 %v1422, 64
    %v1425 = vpop.permute.xlu0 %1424
    %v1427 = vadd.f32 %v1393, %v1425
    %v1428 = vtanh.pop %v1427
    %v1429 = vadd.f32 %v1391, %v514
    %1431 = vrot.lane.b32.xlu0 %v1429, 64
    %v1432 = vpop.permute.xlu0 %1431
    %v1434 = vmul.f32 %v1414, %v1432
    %1436 = vrot.lane.b32.xlu0 %v1434, 64
    %v1437 = vpop.permute.xlu0 %1436
    %v1439 = vadd.f32 %v1395, %v1437
    %v1440 = vtanh.pop %v1439
    %v1441 = vsub.f32 1.0, %v1402
    %1443 = vrot.lane.b32.xlu0 %v1428, 96
    %v1444 = vpop.permute.xlu0 %1443
    %v1446 = vmul.f32 %v1441, %v1444
    %v1447 = vmul.f32 %v1402, %v1299
    %v1448 = vadd.f32 %v1446, %v1447
    %v1449 = vsub.f32 1.0, %v1416
    %1451 = vrot.lane.b32.xlu0 %v1440, 96
    %v1452 = vpop.permute.xlu0 %1451
    %v1454 = vmul.f32 %v1449, %v1452
    %v1455 = vmul.f32 %v1416, %v1307
    %v1456 = vadd.f32 %v1454, %v1455
    %1458 = vrot.lane.b32.xlu0 %v1448, 96
    %v1459 = vpop.permute.xlu0 %1458
    %1461 = vst.msk [vmem:[#allocation4 + $0x30] sm:$0xff] %vm410, %v1459
    %1462 = vst.msk [vmem:[#allocation5 + $0x8] sm:$0xff] %vm410, %v1456
    %1464 = vrot.lane.b32.xlu0 %v1456, 32
    %v1465 = vpop.permute.xlu0 %1464
    %v1467 = vsel %vm410, %v1459, %v1465
    %v1469 = vsel %vm370, %v1467, 0
    %1471 = vmatprep.subr.mxu0 %v388
    %1472 = vmatpush1.msra.mxu0 %v387
    %1473 = vmatprep.subr.mxu0 %v390
    %1474 = vmatpush1.msra.mxu0 %v389
    %1475 = vmatprep.subr.mxu0 %v392
    %1476 = vmatpush1.msra.mxu0 %v391
    %1477 = vmatprep.subr.mxu0 %v394
    %1478 = vmatpush1.msra.mxu0 %v393
    %1479 = vmatprep.subr.mxu0 %v396
    %1480 = vmatpush1.msra.mxu0 %v395
    %1481 = vmatprep.subr.mxu0 %v398
    %1482 = vmatpush1.msra.mxu0 %v397
    %1483 = vmatprep.subr.mxu0 %v400
    %1484 = vmatpush1.msra.mxu0 %v399
    %1485 = vmatprep.subr.mxu0 %v402
    %1486 = vmatpush1.msra.mxu0 %v401
    %1487 = vmatprep.subr.mxu0 0.0
    %1488 = vmatpush1.msra.mxu0 0.0
    %1489 = vmatprep.subr.mxu0 0.0
    %1490 = vmatpush1.msra.mxu0 0.0
    %1491 = vmatprep.subr.mxu0 0.0
    %1492 = vmatpush1.msra.mxu0 0.0
    %1493 = vmatprep.subr.mxu0 0.0
    %1494 = vmatpush1.msra.mxu0 0.0
    %1495 = vmatprep.subr.mxu0 0.0
    %1496 = vmatpush1.msra.mxu0 0.0
    %1497 = vmatprep.subr.mxu0 0.0
    %1498 = vmatpush1.msra.mxu0 0.0
    %1499 = vmatprep.subr.mxu0 0.0
    %1500 = vmatpush1.msra.mxu0 0.0
    %1501 = vmatprep.subr.mxu0 0.0
    %1502 = vmatpush1.msra.mxu0 0.0
    %1503 = vmatprep.subr.mxu0 0.0
    %1504 = vmatpush1.msra.mxu0 0.0
    %1505 = vmatprep.subr.mxu0 0.0
    %1506 = vmatpush1.msra.mxu0 0.0
    %1507 = vmatprep.subr.mxu0 0.0
    %1508 = vmatpush1.msra.mxu0 0.0
    %1509 = vmatprep.subr.mxu0 0.0
    %1510 = vmatpush1.msra.mxu0 0.0
    %1511 = vmatprep.subr.mxu0 0.0
    %1512 = vmatpush1.msra.mxu0 0.0
    %1513 = vmatprep.subr.mxu0 0.0
    %1514 = vmatpush1.msra.mxu0 0.0
    %1515 = vmatprep.subr.mxu0 0.0
    %1516 = vmatpush1.msra.mxu0 0.0
    %1517 = vmatprep.subr.mxu0 0.0
    %1518 = vmatpush1.msra.mxu0 0.0
    %1519 = vmatprep.subr.mxu0 0.0
    %1520 = vmatpush1.msra.mxu0 0.0
    %1521 = vmatprep.subr.mxu0 0.0
    %1522 = vmatpush1.msra.mxu0 0.0
    %1523 = vmatprep.subr.mxu0 0.0
    %1524 = vmatpush1.msra.mxu0 0.0
    %1525 = vmatprep.subr.mxu0 0.0
    %1526 = vmatpush1.msra.mxu0 0.0
    %1527 = vmatprep.subr.mxu0 0.0
    %1528 = vmatpush1.msra.mxu0 0.0
    %1529 = vmatprep.subr.mxu0 0.0
    %1530 = vmatpush1.msra.mxu0 0.0
    %1531 = vmatprep.subr.mxu0 0.0
    %1532 = vmatpush1.msra.mxu0 0.0
    %1533 = vmatprep.subr.mxu0 0.0
    %1534 = vmatpush1.msra.mxu0 0.0
    %1535 = vmatprep.mubr.f32.mxu0 0.0
    %1536 = vmatmul.mubr.f32.gmra.mrb[0].mxu0 %v1469
    %v1537 = vpop.f32.mrb[0].mxu0
    %v1538 = vadd.f32 0.0, %v1537
    %v1539 = vpop.f32.mrb[0].mxu0
    %v1540 = vadd.f32 0.0, %v1539
    %1541 = vdwg.mxu0
    %v1542 = vld [vmem:[#allocation3 + $0x70] sm:$0xff]
    %v1543 = vld [vmem:[#allocation3] sm:$0xff]
    %v1544 = vld [vmem:[#allocation3 + $0x8] sm:$0xff]
    %v1545 = vadd.f32 %v1542, %v1538
    %v1546 = vxor.u32 %v1545, 2147483648
    %v1547 = vmul.f32 %v1546, 1.442695
    %v1548 = vpow.pop %v1547
    %v1549 = vadd.f32 %v1548, 1.0
    %v1550 = vrcp.pop %v1549
    %v1551 = vmul.f32 1.0, %v1550
    %v1552 = vadd.f32 %v1543, %v1538
    %v1553 = vadd.f32 %v1544, %v1540
    %v1554 = vxor.u32 %v1552, 2147483648
    %v1555 = vxor.u32 %v1553, 2147483648
    %v1556 = vmul.f32 %v1554, 1.442695
    %v1557 = vpow.pop %v1556
    %v1558 = vmul.f32 %v1555, 1.442695
    %v1559 = vpow.pop %v1558
    %v1560 = vadd.f32 %v1557, 1.0
    %v1561 = vadd.f32 %v1559, 1.0
    %v1562 = vrcp.pop %v1560
    %v1563 = vmul.f32 1.0, %v1562
    %v1564 = vrcp.pop %v1561
    %v1565 = vmul.f32 1.0, %v1564
    %v1566 = vadd.f32 %v1538, %v516
    %1568 = vrot.lane.b32.xlu0 %v1566, 64
    %v1569 = vpop.permute.xlu0 %1568
    %v1571 = vmul.f32 %v1551, %v1569
    %1573 = vrot.lane.b32.xlu0 %v1571, 64
    %v1574 = vpop.permute.xlu0 %1573
    %v1576 = vadd.f32 %v1542, %v1574
    %v1577 = vtanh.pop %v1576
    %v1578 = vadd.f32 %v1540, %v514
    %1580 = vrot.lane.b32.xlu0 %v1578, 64
    %v1581 = vpop.permute.xlu0 %1580
    %v1583 = vmul.f32 %v1563, %v1581
    %1585 = vrot.lane.b32.xlu0 %v1583, 64
    %v1586 = vpop.permute.xlu0 %1585
    %v1588 = vadd.f32 %v1544, %v1586
    %v1589 = vtanh.pop %v1588
    %v1590 = vsub.f32 1.0, %v1551
    %1592 = vrot.lane.b32.xlu0 %v1577, 96
    %v1593 = vpop.permute.xlu0 %1592
    %v1595 = vmul.f32 %v1590, %v1593
    %v1596 = vmul.f32 %v1551, %v1448
    %v1597 = vadd.f32 %v1595, %v1596
    %v1598 = vsub.f32 1.0, %v1565
    %1600 = vrot.lane.b32.xlu0 %v1589, 96
    %v1601 = vpop.permute.xlu0 %1600
    %v1603 = vmul.f32 %v1598, %v1601
    %v1604 = vmul.f32 %v1565, %v1456
    %v1605 = vadd.f32 %v1603, %v1604
    %1607 = vrot.lane.b32.xlu0 %v1597, 96
    %v1608 = vpop.permute.xlu0 %1607
    %1610 = vst.msk [vmem:[#allocation4 + $0x38] sm:$0xff] %vm410, %v1608
    %1611 = vst.msk [vmem:[#allocation5] sm:$0xff] %vm410, %v1605
    %1612 = vst.msk [vmem:[#allocation18] sm:$0xff] %vm410, %v1608
    %s1613 = scalar_lea.vmem [#allocation18], 8
    %1614 = vst.msk [vmem:[%s1613] sm:$0xff] %vm410, %v1605
    %v1615 = vld [vmem:[%s6] sm:$0xff]
    %v1616 = vld [vmem:[%s6 + $0x8] sm:$0xff]
    %v1617 = vld [vmem:[%s6 + $0x10] sm:$0xff]
    %v1618 = vld [vmem:[%s6 + $0x18] sm:$0xff]
    %v1619 = vld [vmem:[%s6 + $0x20] sm:$0xff]
    %v1620 = vld [vmem:[%s6 + $0x28] sm:$0xff]
    %v1621 = vld [vmem:[%s6 + $0x30] sm:$0xff]
    %v1622 = vld [vmem:[%s6 + $0x38] sm:$0xff]
    %v1623 = vld [vmem:[%s6 + $0x40] sm:$0xff]
    %v1624 = vld [vmem:[%s6 + $0x48] sm:$0xff]
    %v1625 = vld [vmem:[%s6 + $0x50] sm:$0xff]
    %v1626 = vld [vmem:[%s6 + $0x58] sm:$0xff]
    %v1627 = vld [vmem:[%s6 + $0x60] sm:$0xff]
    %v1628 = vld [vmem:[%s6 + $0x68] sm:$0xff]
    %v1629 = vld [vmem:[%s6 + $0x70] sm:$0xff]
    %v1630 = vld [vmem:[%s6 + $0x78] sm:$0xff]
    %v1631 = vld [vmem:[#allocation4] sm:$0xff]
    %v1632 = vld [vmem:[#allocation4 + $0x8] sm:$0xff]
    %v1633 = vld [vmem:[#allocation4 + $0x10] sm:$0xff]
    %v1634 = vld [vmem:[#allocation4 + $0x18] sm:$0xff]
    %v1635 = vld [vmem:[#allocation4 + $0x20] sm:$0xff]
    %v1636 = vld [vmem:[#allocation4 + $0x28] sm:$0xff]
    %v1637 = vld [vmem:[#allocation4 + $0x30] sm:$0xff]
    %v1638 = vld [vmem:[#allocation4 + $0x38] sm:$0xff]
    %v1639 = vld [vmem:[#allocation5] sm:$0xff]
    %v1640 = vld [vmem:[#allocation5 + $0x8] sm:$0xff]
    %v1641 = vld [vmem:[#allocation5 + $0x10] sm:$0xff]
    %v1642 = vld [vmem:[#allocation5 + $0x18] sm:$0xff]
    %v1643 = vld [vmem:[#allocation5 + $0x20] sm:$0xff]
    %v1644 = vld [vmem:[#allocation5 + $0x28] sm:$0xff]
    %v1645 = vld [vmem:[#allocation5 + $0x30] sm:$0xff]
    %v1646 = vld [vmem:[#allocation5 + $0x38] sm:$0xff]
    %v1648 = vsel %vm410, %v1639, 0
    %v1651 = vsel %vm410, %v1640, 0
    %v1654 = vsel %vm410, %v1641, 0
    %v1657 = vsel %vm410, %v1642, 0
    %v1660 = vsel %vm410, %v1643, 0
    %v1663 = vsel %vm410, %v1644, 0
    %v1666 = vsel %vm410, %v1645, 0
    %v1669 = vsel %vm410, %v1646, 0
    %1671 = vmatprep.subr.mxu0 %v1624
    %1672 = vmatpush1.msra.mxu0 %v1623
    %1673 = vmatprep.subr.mxu0 %v1626
    %1674 = vmatpush1.msra.mxu0 %v1625
    %1675 = vmatprep.subr.mxu0 %v1628
    %1676 = vmatpush1.msra.mxu0 %v1627
    %1677 = vmatprep.subr.mxu0 %v1630
    %1678 = vmatpush1.msra.mxu0 %v1629
    %1679 = vmatprep.subr.mxu0 0.0
    %1680 = vmatpush1.msra.mxu0 0.0
    %1681 = vmatprep.subr.mxu0 0.0
    %1682 = vmatpush1.msra.mxu0 0.0
    %1683 = vmatprep.subr.mxu0 0.0
    %1684 = vmatpush1.msra.mxu0 0.0
    %1685 = vmatprep.subr.mxu0 0.0
    %1686 = vmatpush1.msra.mxu0 0.0
    %1687 = vmatprep.subr.mxu0 0.0
    %1688 = vmatpush1.msra.mxu0 0.0
    %1689 = vmatprep.subr.mxu0 0.0
    %1690 = vmatpush1.msra.mxu0 0.0
    %1691 = vmatprep.subr.mxu0 0.0
    %1692 = vmatpush1.msra.mxu0 0.0
    %1693 = vmatprep.subr.mxu0 0.0
    %1694 = vmatpush1.msra.mxu0 0.0
    %1695 = vmatprep.subr.mxu0 0.0
    %1696 = vmatpush1.msra.mxu0 0.0
    %1697 = vmatprep.subr.mxu0 0.0
    %1698 = vmatpush1.msra.mxu0 0.0
    %1699 = vmatprep.subr.mxu0 0.0
    %1700 = vmatpush1.msra.mxu0 0.0
    %1701 = vmatprep.subr.mxu0 0.0
    %1702 = vmatpush1.msra.mxu0 0.0
    %1703 = vmatprep.subr.mxu0 0.0
    %1704 = vmatpush1.msra.mxu0 0.0
    %1705 = vmatprep.subr.mxu0 0.0
    %1706 = vmatpush1.msra.mxu0 0.0
    %1707 = vmatprep.subr.mxu0 0.0
    %1708 = vmatpush1.msra.mxu0 0.0
    %1709 = vmatprep.subr.mxu0 0.0
    %1710 = vmatpush1.msra.mxu0 0.0
    %1711 = vmatprep.subr.mxu0 0.0
    %1712 = vmatpush1.msra.mxu0 0.0
    %1713 = vmatprep.subr.mxu0 0.0
    %1714 = vmatpush1.msra.mxu0 0.0
    %1715 = vmatprep.subr.mxu0 0.0
    %1716 = vmatpush1.msra.mxu0 0.0
    %1717 = vmatprep.subr.mxu0 0.0
    %1718 = vmatpush1.msra.mxu0 0.0
    %1719 = vmatprep.subr.mxu0 0.0
    %1720 = vmatpush1.msra.mxu0 0.0
    %1721 = vmatprep.subr.mxu0 0.0
    %1722 = vmatpush1.msra.mxu0 0.0
    %1723 = vmatprep.subr.mxu0 0.0
    %1724 = vmatpush1.msra.mxu0 0.0
    %1725 = vmatprep.subr.mxu0 0.0
    %1726 = vmatpush1.msra.mxu0 0.0
    %1727 = vmatprep.subr.mxu0 0.0
    %1728 = vmatpush1.msra.mxu0 0.0
    %1729 = vmatprep.subr.mxu0 0.0
    %1730 = vmatpush1.msra.mxu0 0.0
    %1731 = vmatprep.subr.mxu0 0.0
    %1732 = vmatpush1.msra.mxu0 0.0
    %1733 = vmatprep.subr.mxu0 0.0
    %1734 = vmatpush1.msra.mxu0 0.0
    %1735 = vmatprep.mubr.f32.mxu0 0.0
    %1736 = vmatmul.mubr.f32.gmra.mrb[0].mxu0 %v1648
    %v1737 = vpop.f32.mrb[0].mxu0
    %v1738 = vadd.f32 0.0, %v1737
    %v1739 = vpop.f32.mrb[0].mxu0
    %v1740 = vadd.f32 0.0, %v1739
    %1741 = vmatprep.mubr.f32.mxu0 0.0
    %1742 = vmatmul.mubr.f32.gmra.mrb[0].mxu0 %v1651
    %v1743 = vpop.f32.mrb[0].mxu0
    %v1744 = vadd.f32 0.0, %v1743
    %v1745 = vpop.f32.mrb[0].mxu0
    %v1746 = vadd.f32 0.0, %v1745
    %1747 = vmatprep.mubr.f32.mxu0 0.0
    %1748 = vmatmul.mubr.f32.gmra.mrb[0].mxu0 %v1654
    %v1749 = vpop.f32.mrb[0].mxu0
    %v1750 = vadd.f32 0.0, %v1749
    %v1751 = vpop.f32.mrb[0].mxu0
    %v1752 = vadd.f32 0.0, %v1751
    %1753 = vmatprep.mubr.f32.mxu0 0.0
    %1754 = vmatmul.mubr.f32.gmra.mrb[0].mxu0 %v1657
    %v1755 = vpop.f32.mrb[0].mxu0
    %v1756 = vadd.f32 0.0, %v1755
    %v1757 = vpop.f32.mrb[0].mxu0
    %v1758 = vadd.f32 0.0, %v1757
    %1759 = vmatprep.mubr.f32.mxu0 0.0
    %1760 = vmatmul.mubr.f32.gmra.mrb[0].mxu0 %v1660
    %v1761 = vpop.f32.mrb[0].mxu0
    %v1762 = vadd.f32 0.0, %v1761
    %v1763 = vpop.f32.mrb[0].mxu0
    %v1764 = vadd.f32 0.0, %v1763
    %1765 = vmatprep.mubr.f32.mxu0 0.0
    %1766 = vmatmul.mubr.f32.gmra.mrb[0].mxu0 %v1663
    %v1767 = vpop.f32.mrb[0].mxu0
    %v1768 = vadd.f32 0.0, %v1767
    %v1769 = vpop.f32.mrb[0].mxu0
    %v1770 = vadd.f32 0.0, %v1769
    %1771 = vmatprep.mubr.f32.mxu0 0.0
    %1772 = vmatmul.mubr.f32.gmra.mrb[0].mxu0 %v1666
    %v1773 = vpop.f32.mrb[0].mxu0
    %v1774 = vadd.f32 0.0, %v1773
    %v1775 = vpop.f32.mrb[0].mxu0
    %v1776 = vadd.f32 0.0, %v1775
    %1777 = vmatprep.mubr.f32.mxu0 0.0
    %1778 = vmatmul.mubr.f32.gmra.mrb[0].mxu0 %v1669
    %v1779 = vpop.f32.mrb[0].mxu0
    %v1780 = vadd.f32 0.0, %v1779
    %v1781 = vpop.f32.mrb[0].mxu0
    %v1782 = vadd.f32 0.0, %v1781
    %1783 = vdwg.mxu0
    %v1785 = vsel %vm410, %v1631, 0
    %v1788 = vsel %vm410, %v1632, 0
    %v1791 = vsel %vm410, %v1633, 0
    %v1794 = vsel %vm410, %v1634, 0
    %v1797 = vsel %vm410, %v1635, 0
    %v1800 = vsel %vm410, %v1636, 0
    %v1803 = vsel %vm410, %v1637, 0
    %v1806 = vsel %vm410, %v1638, 0
    %1808 = vmatprep.subr.mxu0 %v1616
    %1809 = vmatpush1.msra.mxu0 %v1615
    %1810 = vmatprep.subr.mxu0 %v1618
    %1811 = vmatpush1.msra.mxu0 %v1617
    %1812 = vmatprep.subr.mxu0 %v1620
    %1813 = vmatpush1.msra.mxu0 %v1619
    %1814 = vmatprep.subr.mxu0 %v1622
    %1815 = vmatpush1.msra.mxu0 %v1621
    %1816 = vmatprep.subr.mxu0 0.0
    %1817 = vmatpush1.msra.mxu0 0.0
    %1818 = vmatprep.subr.mxu0 0.0
    %1819 = vmatpush1.msra.mxu0 0.0
    %1820 = vmatprep.subr.mxu0 0.0
    %1821 = vmatpush1.msra.mxu0 0.0
    %1822 = vmatprep.subr.mxu0 0.0
    %1823 = vmatpush1.msra.mxu0 0.0
    %1824 = vmatprep.subr.mxu0 0.0
    %1825 = vmatpush1.msra.mxu0 0.0
    %1826 = vmatprep.subr.mxu0 0.0
    %1827 = vmatpush1.msra.mxu0 0.0
    %1828 = vmatprep.subr.mxu0 0.0
    %1829 = vmatpush1.msra.mxu0 0.0
    %1830 = vmatprep.subr.mxu0 0.0
    %1831 = vmatpush1.msra.mxu0 0.0
    %1832 = vmatprep.subr.mxu0 0.0
    %1833 = vmatpush1.msra.mxu0 0.0
    %1834 = vmatprep.subr.mxu0 0.0
    %1835 = vmatpush1.msra.mxu0 0.0
    %1836 = vmatprep.subr.mxu0 0.0
    %1837 = vmatpush1.msra.mxu0 0.0
    %1838 = vmatprep.subr.mxu0 0.0
    %1839 = vmatpush1.msra.mxu0 0.0
    %1840 = vmatprep.subr.mxu0 0.0
    %1841 = vmatpush1.msra.mxu0 0.0
    %1842 = vmatprep.subr.mxu0 0.0
    %1843 = vmatpush1.msra.mxu0 0.0
    %1844 = vmatprep.subr.mxu0 0.0
    %1845 = vmatpush1.msra.mxu0 0.0
    %1846 = vmatprep.subr.mxu0 0.0
    %1847 = vmatpush1.msra.mxu0 0.0
    %1848 = vmatprep.subr.mxu0 0.0
    %1849 = vmatpush1.msra.mxu0 0.0
    %1850 = vmatprep.subr.mxu0 0.0
    %1851 = vmatpush1.msra.mxu0 0.0
    %1852 = vmatprep.subr.mxu0 0.0
    %1853 = vmatpush1.msra.mxu0 0.0
    %1854 = vmatprep.subr.mxu0 0.0
    %1855 = vmatpush1.msra.mxu0 0.0
    %1856 = vmatprep.subr.mxu0 0.0
    %1857 = vmatpush1.msra.mxu0 0.0
    %1858 = vmatprep.subr.mxu0 0.0
    %1859 = vmatpush1.msra.mxu0 0.0
    %1860 = vmatprep.subr.mxu0 0.0
    %1861 = vmatpush1.msra.mxu0 0.0
    %1862 = vmatprep.subr.mxu0 0.0
    %1863 = vmatpush1.msra.mxu0 0.0
    %1864 = vmatprep.subr.mxu0 0.0
    %1865 = vmatpush1.msra.mxu0 0.0
    %1866 = vmatprep.subr.mxu0 0.0
    %1867 = vmatpush1.msra.mxu0 0.0
    %1868 = vmatprep.subr.mxu0 0.0
    %1869 = vmatpush1.msra.mxu0 0.0
    %1870 = vmatprep.subr.mxu0 0.0
    %1871 = vmatpush1.msra.mxu0 0.0
    %1872 = vmatprep.mubr.f32.mxu0 0.0
    %1873 = vmatmul.mubr.f32.gmra.mrb[0].mxu0 %v1785
    %v1874 = vpop.f32.mrb[0].mxu0
    %v1875 = vadd.f32 %v1738, %v1874
    %v1876 = vpop.f32.mrb[0].mxu0
    %v1877 = vadd.f32 %v1740, %v1876
    %1878 = vmatprep.mubr.f32.mxu0 0.0
    %1879 = vmatmul.mubr.f32.gmra.mrb[0].mxu0 %v1788
    %v1880 = vpop.f32.mrb[0].mxu0
    %v1881 = vadd.f32 %v1744, %v1880
    %v1882 = vpop.f32.mrb[0].mxu0
    %v1883 = vadd.f32 %v1746, %v1882
    %1884 = vmatprep.mubr.f32.mxu0 0.0
    %1885 = vmatmul.mubr.f32.gmra.mrb[0].mxu0 %v1791
    %v1886 = vpop.f32.mrb[0].mxu0
    %v1887 = vadd.f32 %v1750, %v1886
    %v1888 = vpop.f32.mrb[0].mxu0
    %v1889 = vadd.f32 %v1752, %v1888
    %1890 = vmatprep.mubr.f32.mxu0 0.0
    %1891 = vmatmul.mubr.f32.gmra.mrb[0].mxu0 %v1794
    %v1892 = vpop.f32.mrb[0].mxu0
    %v1893 = vadd.f32 %v1756, %v1892
    %v1894 = vpop.f32.mrb[0].mxu0
    %v1895 = vadd.f32 %v1758, %v1894
    %1896 = vmatprep.mubr.f32.mxu0 0.0
    %1897 = vmatmul.mubr.f32.gmra.mrb[0].mxu0 %v1797
    %v1898 = vpop.f32.mrb[0].mxu0
    %v1899 = vadd.f32 %v1762, %v1898
    %v1900 = vpop.f32.mrb[0].mxu0
    %v1901 = vadd.f32 %v1764, %v1900
    %1902 = vmatprep.mubr.f32.mxu0 0.0
    %1903 = vmatmul.mubr.f32.gmra.mrb[0].mxu0 %v1800
    %v1904 = vpop.f32.mrb[0].mxu0
    %v1905 = vadd.f32 %v1768, %v1904
    %v1906 = vpop.f32.mrb[0].mxu0
    %v1907 = vadd.f32 %v1770, %v1906
    %1908 = vmatprep.mubr.f32.mxu0 0.0
    %1909 = vmatmul.mubr.f32.gmra.mrb[0].mxu0 %v1803
    %v1910 = vpop.f32.mrb[0].mxu0
    %v1911 = vadd.f32 %v1774, %v1910
    %v1912 = vpop.f32.mrb[0].mxu0
    %v1913 = vadd.f32 %v1776, %v1912
    %1914 = vmatprep.mubr.f32.mxu0 0.0
    %1915 = vmatmul.mubr.f32.gmra.mrb[0].mxu0 %v1806
    %v1916 = vpop.f32.mrb[0].mxu0
    %v1917 = vadd.f32 %v1780, %v1916
    %v1918 = vpop.f32.mrb[0].mxu0
    %v1919 = vadd.f32 %v1782, %v1918
    %1920 = vdwg.mxu0
    %v1921 = vld [vmem:[%s8] sm:$0x3]
    %v1923 = vlaneseq
    %v1924 = vshrl.u32 %v1923, 7
    %v1925 = vsub.s32 0, %v1924
    %v1926 = vrot.slane %v1921, %v1925
    %v1927 = vlaneseq
    %v1928 = vshrl.u32 %v1927, 7
    %v1929 = vsub.s32 1, %v1928
    %v1930 = vrot.slane %v1921, %v1929
    %v1933 = vadd.f32 %v1875, %v1926
    %v1934 = vadd.f32 %v1877, %v1930
    %v1935 = vadd.f32 %v1881, %v1926
    %v1936 = vadd.f32 %v1883, %v1930
    %v1937 = vadd.f32 %v1887, %v1926
    %v1938 = vadd.f32 %v1889, %v1930
    %v1939 = vadd.f32 %v1893, %v1926
    %v1940 = vadd.f32 %v1895, %v1930
    %v1941 = vadd.f32 %v1899, %v1926
    %v1942 = vadd.f32 %v1901, %v1930
    %v1943 = vadd.f32 %v1905, %v1926
    %v1944 = vadd.f32 %v1907, %v1930
    %v1945 = vadd.f32 %v1911, %v1926
    %v1946 = vadd.f32 %v1913, %v1930
    %v1947 = vadd.f32 %v1917, %v1926
    %v1948 = vadd.f32 %v1919, %v1930
    %1949 = vst [vmem:[#allocation3] sm:$0xff] %v1933
    %1950 = vst.msk [vmem:[#allocation3 + $0x8] sm:$0xff] %vm370, %v1934
    %1951 = vst [vmem:[#allocation3 + $0x10] sm:$0xff] %v1935
    %1952 = vst.msk [vmem:[#allocation3 + $0x18] sm:$0xff] %vm370, %v1936
    %1953 = vst [vmem:[#allocation3 + $0x20] sm:$0xff] %v1937
    %1954 = vst.msk [vmem:[#allocation3 + $0x28] sm:$0xff] %vm370, %v1938
    %1955 = vst [vmem:[#allocation3 + $0x30] sm:$0xff] %v1939
    %1956 = vst.msk [vmem:[#allocation3 + $0x38] sm:$0xff] %vm370, %v1940
    %1957 = vst [vmem:[#allocation3 + $0x40] sm:$0xff] %v1941
    %1958 = vst.msk [vmem:[#allocation3 + $0x48] sm:$0xff] %vm370, %v1942
    %1959 = vst [vmem:[#allocation3 + $0x50] sm:$0xff] %v1943
    %1960 = vst.msk [vmem:[#allocation3 + $0x58] sm:$0xff] %vm370, %v1944
    %1961 = vst [vmem:[#allocation3 + $0x60] sm:$0xff] %v1945
    %1962 = vst.msk [vmem:[#allocation3 + $0x68] sm:$0xff] %vm370, %v1946
    %1963 = vst [vmem:[#allocation3 + $0x70] sm:$0xff] %v1947
    %1964 = vst.msk [vmem:[#allocation3 + $0x78] sm:$0xff] %vm370, %v1948
    %v1965 = vld [vmem:[%s9] sm:$0x1]
    %v1966 = vld [vmem:[#allocation15] sm:$0xff]
    %v1967 = vld [vmem:[#allocation15 + $0x8] sm:$0xff]
    %v1968 = vld [vmem:[#allocation15 + $0x10] sm:$0xff]
    %v1969 = vld [vmem:[#allocation15 + $0x18] sm:$0xff]
    %v1970 = vld [vmem:[#allocation15 + $0x20] sm:$0xff]
    %v1971 = vld [vmem:[#allocation15 + $0x28] sm:$0xff]
    %v1972 = vld [vmem:[#allocation15 + $0x30] sm:$0xff]
    %v1973 = vld [vmem:[#allocation15 + $0x38] sm:$0xff]
    %v1974 = vld [vmem:[#allocation15 + $0x40] sm:$0xff]
    %v1975 = vld [vmem:[#allocation15 + $0x48] sm:$0xff]
    %v1976 = vld [vmem:[#allocation15 + $0x50] sm:$0xff]
    %v1977 = vld [vmem:[#allocation15 + $0x58] sm:$0xff]
    %v1978 = vld [vmem:[#allocation15 + $0x60] sm:$0xff]
    %v1979 = vld [vmem:[#allocation15 + $0x68] sm:$0xff]
    %v1980 = vld [vmem:[#allocation15 + $0x70] sm:$0xff]
    %v1981 = vld [vmem:[#allocation15 + $0x78] sm:$0xff]
    %s1982 = scalar_lea.vmem [#allocation17], 16
    %v1983 = vld [vmem:[%s1982] sm:$0xff]
    %s1984 = scalar_lea.vmem [#allocation17], 24
    %v1985 = vld [vmem:[%s1984] sm:$0xff]
    %1987 = vrot.lane.b32.xlu0 %v1985, 32
    %v1988 = vpop.permute.xlu0 %1987
    %v1990 = vsel %vm410, %v1983, %v1988
    %v1992 = vsel %vm370, %v1990, 0
    %1994 = vmatprep.subr.mxu0 %v1967
    %1995 = vmatpush1.msra.mxu0 %v1966
    %1996 = vmatprep.subr.mxu0 %v1969
    %1997 = vmatpush1.msra.mxu0 %v1968
    %1998 = vmatprep.subr.mxu0 %v1971
    %1999 = vmatpush1.msra.mxu0 %v1970
    %2000 = vmatprep.subr.mxu0 %v1973
    %2001 = vmatpush1.msra.mxu0 %v1972
    %2002 = vmatprep.subr.mxu0 %v1975
    %2003 = vmatpush1.msra.mxu0 %v1974
    %2004 = vmatprep.subr.mxu0 %v1977
    %2005 = vmatpush1.msra.mxu0 %v1976
    %2006 = vmatprep.subr.mxu0 %v1979
    %2007 = vmatpush1.msra.mxu0 %v1978
    %2008 = vmatprep.subr.mxu0 %v1981
    %2009 = vmatpush1.msra.mxu0 %v1980
    %2010 = vmatprep.subr.mxu0 0.0
    %2011 = vmatpush1.msra.mxu0 0.0
    %2012 = vmatprep.subr.mxu0 0.0
    %2013 = vmatpush1.msra.mxu0 0.0
    %2014 = vmatprep.subr.mxu0 0.0
    %2015 = vmatpush1.msra.mxu0 0.0
    %2016 = vmatprep.subr.mxu0 0.0
    %2017 = vmatpush1.msra.mxu0 0.0
    %2018 = vmatprep.subr.mxu0 0.0
    %2019 = vmatpush1.msra.mxu0 0.0
    %2020 = vmatprep.subr.mxu0 0.0
    %2021 = vmatpush1.msra.mxu0 0.0
    %2022 = vmatprep.subr.mxu0 0.0
    %2023 = vmatpush1.msra.mxu0 0.0
    %2024 = vmatprep.subr.mxu0 0.0
    %2025 = vmatpush1.msra.mxu0 0.0
    %2026 = vmatprep.subr.mxu0 0.0
    %2027 = vmatpush1.msra.mxu0 0.0
    %2028 = vmatprep.subr.mxu0 0.0
    %2029 = vmatpush1.msra.mxu0 0.0
    %2030 = vmatprep.subr.mxu0 0.0
    %2031 = vmatpush1.msra.mxu0 0.0
    %2032 = vmatprep.subr.mxu0 0.0
    %2033 = vmatpush1.msra.mxu0 0.0
    %2034 = vmatprep.subr.mxu0 0.0
    %2035 = vmatpush1.msra.mxu0 0.0
    %2036 = vmatprep.subr.mxu0 0.0
    %2037 = vmatpush1.msra.mxu0 0.0
    %2038 = vmatprep.subr.mxu0 0.0
    %2039 = vmatpush1.msra.mxu0 0.0
    %2040 = vmatprep.subr.mxu0 0.0
    %2041 = vmatpush1.msra.mxu0 0.0
    %2042 = vmatprep.subr.mxu0 0.0
    %2043 = vmatpush1.msra.mxu0 0.0
    %2044 = vmatprep.subr.mxu0 0.0
    %2045 = vmatpush1.msra.mxu0 0.0
    %2046 = vmatprep.subr.mxu0 0.0
    %2047 = vmatpush1.msra.mxu0 0.0
    %2048 = vmatprep.subr.mxu0 0.0
    %2049 = vmatpush1.msra.mxu0 0.0
    %2050 = vmatprep.subr.mxu0 0.0
    %2051 = vmatpush1.msra.mxu0 0.0
    %2052 = vmatprep.subr.mxu0 0.0
    %2053 = vmatpush1.msra.mxu0 0.0
    %2054 = vmatprep.subr.mxu0 0.0
    %2055 = vmatpush1.msra.mxu0 0.0
    %2056 = vmatprep.subr.mxu0 0.0
    %2057 = vmatpush1.msra.mxu0 0.0
    %2058 = vmatprep.mubr.f32.mxu0 0.0
    %2059 = vmatmul.mubr.f32.gmra.mrb[0].mxu0 %v1992
    %v2060 = vpop.f32.mrb[0].mxu0
    %v2061 = vadd.f32 0.0, %v2060
    %v2062 = vpop.f32.mrb[0].mxu0
    %v2063 = vadd.f32 0.0, %v2062
    %2064 = vdwg.mxu0
    %v2065 = vld [vmem:[#allocation3] sm:$0xff]
    %v2066 = vld [vmem:[#allocation3 + $0x8] sm:$0xff]
    %v2067 = vld [vmem:[#allocation3 + $0x70] sm:$0xff]
    %v2068 = vld [vmem:[#allocation3 + $0x78] sm:$0xff]
    %v2069 = vadd.f32 %v2065, %v2061
    %v2070 = vxor.u32 %v2069, 2147483648
    %v2071 = vmul.f32 %v2070, 1.442695
    %v2072 = vpow.pop %v2071
    %v2073 = vadd.f32 %v2072, 1.0
    %v2074 = vrcp.pop %v2073
    %v2075 = vmul.f32 1.0, %v2074
    %v2076 = vadd.f32 %v2067, %v2061
    %v2077 = vadd.f32 %v2068, %v2063
    %v2078 = vxor.u32 %v2076, 2147483648
    %v2079 = vxor.u32 %v2077, 2147483648
    %v2080 = vmul.f32 %v2078, 1.442695
    %v2081 = vpow.pop %v2080
    %v2082 = vmul.f32 %v2079, 1.442695
    %v2083 = vpow.pop %v2082
    %v2084 = vadd.f32 %v2081, 1.0
    %v2085 = vadd.f32 %v2083, 1.0
    %v2086 = vrcp.pop %v2084
    %v2087 = vmul.f32 1.0, %v2086
    %v2088 = vrcp.pop %v2085
    %v2089 = vmul.f32 1.0, %v2088
    %v2091 = vlaneseq
    %v2092 = vshrl.u32 %v2091, 7
    %v2093 = vsub.s32 0, %v2092
    %v2094 = vrot.slane %v1965, %v2093
    %2095 = vrot.lane.b32.xlu0 %v2094, 64
    %v2096 = vpop.permute.xlu0 %2095
    %v2098 = vadd.f32 %v2061, %v2096
    %2100 = vrot.lane.b32.xlu0 %v2098, 64
    %v2101 = vpop.permute.xlu0 %2100
    %v2103 = vmul.f32 %v2075, %v2101
    %2105 = vrot.lane.b32.xlu0 %v2103, 64
    %v2106 = vpop.permute.xlu0 %2105
    %v2108 = vadd.f32 %v2065, %v2106
    %v2109 = vtanh.pop %v2108
    %v2111 = vadd.f32 %v2063, %v2094
    %2113 = vrot.lane.b32.xlu0 %v2111, 64
    %v2114 = vpop.permute.xlu0 %2113
    %v2116 = vmul.f32 %v2087, %v2114
    %2118 = vrot.lane.b32.xlu0 %v2116, 64
    %v2119 = vpop.permute.xlu0 %2118
    %v2121 = vadd.f32 %v2068, %v2119
    %v2122 = vtanh.pop %v2121
    %v2123 = vsub.f32 1.0, %v2075
    %2125 = vrot.lane.b32.xlu0 %v2109, 96
    %v2126 = vpop.permute.xlu0 %2125
    %v2128 = vmul.f32 %v2123, %v2126
    %2130 = vrot.lane.b32.xlu0 %v1983, 32
    %v2131 = vpop.permute.xlu0 %2130
    %v2133 = vmul.f32 %v2075, %v2131
    %v2134 = vadd.f32 %v2128, %v2133
    %v2135 = vsub.f32 1.0, %v2089
    %2137 = vrot.lane.b32.xlu0 %v2122, 96
    %v2138 = vpop.permute.xlu0 %2137
    %v2140 = vmul.f32 %v2135, %v2138
    %v2141 = vmul.f32 %v2089, %v1985
    %v2142 = vadd.f32 %v2140, %v2141
    %2144 = vrot.lane.b32.xlu0 %v2134, 96
    %v2145 = vpop.permute.xlu0 %2144
    %2148 = vrot.lane.b32.xlu0 %v2142, 32
    %v2149 = vpop.permute.xlu0 %2148
    %v2151 = vsel %vm410, %v2145, %v2149
    %v2153 = vsel %vm370, %v2151, 0
    %2155 = vmatprep.subr.mxu0 %v1967
    %2156 = vmatpush1.msra.mxu0 %v1966
    %2157 = vmatprep.subr.mxu0 %v1969
    %2158 = vmatpush1.msra.mxu0 %v1968
    %2159 = vmatprep.subr.mxu0 %v1971
    %2160 = vmatpush1.msra.mxu0 %v1970
    %2161 = vmatprep.subr.mxu0 %v1973
    %2162 = vmatpush1.msra.mxu0 %v1972
    %2163 = vmatprep.subr.mxu0 %v1975
    %2164 = vmatpush1.msra.mxu0 %v1974
    %2165 = vmatprep.subr.mxu0 %v1977
    %2166 = vmatpush1.msra.mxu0 %v1976
    %2167 = vmatprep.subr.mxu0 %v1979
    %2168 = vmatpush1.msra.mxu0 %v1978
    %2169 = vmatprep.subr.mxu0 %v1981
    %2170 = vmatpush1.msra.mxu0 %v1980
    %2171 = vmatprep.subr.mxu0 0.0
    %2172 = vmatpush1.msra.mxu0 0.0
    %2173 = vmatprep.subr.mxu0 0.0
    %2174 = vmatpush1.msra.mxu0 0.0
    %2175 = vmatprep.subr.mxu0 0.0
    %2176 = vmatpush1.msra.mxu0 0.0
    %2177 = vmatprep.subr.mxu0 0.0
    %2178 = vmatpush1.msra.mxu0 0.0
    %2179 = vmatprep.subr.mxu0 0.0
    %2180 = vmatpush1.msra.mxu0 0.0
    %2181 = vmatprep.subr.mxu0 0.0
    %2182 = vmatpush1.msra.mxu0 0.0
    %2183 = vmatprep.subr.mxu0 0.0
    %2184 = vmatpush1.msra.mxu0 0.0
    %2185 = vmatprep.subr.mxu0 0.0
    %2186 = vmatpush1.msra.mxu0 0.0
    %2187 = vmatprep.subr.mxu0 0.0
    %2188 = vmatpush1.msra.mxu0 0.0
    %2189 = vmatprep.subr.mxu0 0.0
    %2190 = vmatpush1.msra.mxu0 0.0
    %2191 = vmatprep.subr.mxu0 0.0
    %2192 = vmatpush1.msra.mxu0 0.0
    %2193 = vmatprep.subr.mxu0 0.0
    %2194 = vmatpush1.msra.mxu0 0.0
    %2195 = vmatprep.subr.mxu0 0.0
    %2196 = vmatpush1.msra.mxu0 0.0
    %2197 = vmatprep.subr.mxu0 0.0
    %2198 = vmatpush1.msra.mxu0 0.0
    %2199 = vmatprep.subr.mxu0 0.0
    %2200 = vmatpush1.msra.mxu0 0.0
    %2201 = vmatprep.subr.mxu0 0.0
    %2202 = vmatpush1.msra.mxu0 0.0
    %2203 = vmatprep.subr.mxu0 0.0
    %2204 = vmatpush1.msra.mxu0 0.0
    %2205 = vmatprep.subr.mxu0 0.0
    %2206 = vmatpush1.msra.mxu0 0.0
    %2207 = vmatprep.subr.mxu0 0.0
    %2208 = vmatpush1.msra.mxu0 0.0
    %2209 = vmatprep.subr.mxu0 0.0
    %2210 = vmatpush1.msra.mxu0 0.0
    %2211 = vmatprep.subr.mxu0 0.0
    %2212 = vmatpush1.msra.mxu0 0.0
    %2213 = vmatprep.subr.mxu0 0.0
    %2214 = vmatpush1.msra.mxu0 0.0
    %2215 = vmatprep.subr.mxu0 0.0
    %2216 = vmatpush1.msra.mxu0 0.0
    %2217 = vmatprep.subr.mxu0 0.0
    %2218 = vmatpush1.msra.mxu0 0.0
    %2219 = vmatprep.mubr.f32.mxu0 0.0
    %2220 = vmatmul.mubr.f32.gmra.mrb[0].mxu0 %v2153
    %v2221 = vpop.f32.mrb[0].mxu0
    %v2222 = vadd.f32 0.0, %v2221
    %v2223 = vpop.f32.mrb[0].mxu0
    %v2224 = vadd.f32 0.0, %v2223
    %2225 = vdwg.mxu0
    %v2226 = vld [vmem:[#allocation3 + $0x10] sm:$0xff]
    %v2227 = vld [vmem:[#allocation3 + $0x18] sm:$0xff]
    %v2228 = vld [vmem:[#allocation3 + $0x60] sm:$0xff]
    %v2229 = vld [vmem:[#allocation3 + $0x68] sm:$0xff]
    %v2230 = vadd.f32 %v2226, %v2222
    %v2231 = vxor.u32 %v2230, 2147483648
    %v2232 = vmul.f32 %v2231, 1.442695
    %v2233 = vpow.pop %v2232
    %v2234 = vadd.f32 %v2233, 1.0
    %v2235 = vrcp.pop %v2234
    %v2236 = vmul.f32 1.0, %v2235
    %v2237 = vadd.f32 %v2228, %v2222
    %v2238 = vadd.f32 %v2229, %v2224
    %v2239 = vxor.u32 %v2237, 2147483648
    %v2240 = vxor.u32 %v2238, 2147483648
    %v2241 = vmul.f32 %v2239, 1.442695
    %v2242 = vpow.pop %v2241
    %v2243 = vmul.f32 %v2240, 1.442695
    %v2244 = vpow.pop %v2243
    %v2245 = vadd.f32 %v2242, 1.0
    %v2246 = vadd.f32 %v2244, 1.0
    %v2247 = vrcp.pop %v2245
    %v2248 = vmul.f32 1.0, %v2247
    %v2249 = vrcp.pop %v2246
    %v2250 = vmul.f32 1.0, %v2249
    %v2251 = vadd.f32 %v2222, %v2096
    %2253 = vrot.lane.b32.xlu0 %v2251, 64
    %v2254 = vpop.permute.xlu0 %2253
    %v2256 = vmul.f32 %v2236, %v2254
    %2258 = vrot.lane.b32.xlu0 %v2256, 64
    %v2259 = vpop.permute.xlu0 %2258
    %v2261 = vadd.f32 %v2226, %v2259
    %v2262 = vtanh.pop %v2261
    %v2263 = vadd.f32 %v2224, %v2094
    %2265 = vrot.lane.b32.xlu0 %v2263, 64
    %v2266 = vpop.permute.xlu0 %2265
    %v2268 = vmul.f32 %v2248, %v2266
    %2270 = vrot.lane.b32.xlu0 %v2268, 64
    %v2271 = vpop.permute.xlu0 %2270
    %v2273 = vadd.f32 %v2229, %v2271
    %v2274 = vtanh.pop %v2273
    %v2275 = vsub.f32 1.0, %v2236
    %2277 = vrot.lane.b32.xlu0 %v2262, 96
    %v2278 = vpop.permute.xlu0 %2277
    %v2280 = vmul.f32 %v2275, %v2278
    %v2281 = vmul.f32 %v2236, %v2134
    %v2282 = vadd.f32 %v2280, %v2281
    %v2283 = vsub.f32 1.0, %v2250
    %2285 = vrot.lane.b32.xlu0 %v2274, 96
    %v2286 = vpop.permute.xlu0 %2285
    %v2288 = vmul.f32 %v2283, %v2286
    %v2289 = vmul.f32 %v2250, %v2142
    %v2290 = vadd.f32 %v2288, %v2289
    %2292 = vrot.lane.b32.xlu0 %v2282, 96
    %v2293 = vpop.permute.xlu0 %2292
    %2296 = vrot.lane.b32.xlu0 %v2290, 32
    %v2297 = vpop.permute.xlu0 %2296
    %v2299 = vsel %vm410, %v2293, %v2297
    %v2301 = vsel %vm370, %v2299, 0
    %2303 = vmatprep.subr.mxu0 %v1967
    %2304 = vmatpush1.msra.mxu0 %v1966
    %2305 = vmatprep.subr.mxu0 %v1969
    %2306 = vmatpush1.msra.mxu0 %v1968
    %2307 = vmatprep.subr.mxu0 %v1971
    %2308 = vmatpush1.msra.mxu0 %v1970
    %2309 = vmatprep.subr.mxu0 %v1973
    %2310 = vmatpush1.msra.mxu0 %v1972
    %2311 = vmatprep.subr.mxu0 %v1975
    %2312 = vmatpush1.msra.mxu0 %v1974
    %2313 = vmatprep.subr.mxu0 %v1977
    %2314 = vmatpush1.msra.mxu0 %v1976
    %2315 = vmatprep.subr.mxu0 %v1979
    %2316 = vmatpush1.msra.mxu0 %v1978
    %2317 = vmatprep.subr.mxu0 %v1981
    %2318 = vmatpush1.msra.mxu0 %v1980
    %2319 = vmatprep.subr.mxu0 0.0
    %2320 = vmatpush1.msra.mxu0 0.0
    %2321 = vmatprep.subr.mxu0 0.0
    %2322 = vmatpush1.msra.mxu0 0.0
    %2323 = vmatprep.subr.mxu0 0.0
    %2324 = vmatpush1.msra.mxu0 0.0
    %2325 = vmatprep.subr.mxu0 0.0
    %2326 = vmatpush1.msra.mxu0 0.0
    %2327 = vmatprep.subr.mxu0 0.0
    %2328 = vmatpush1.msra.mxu0 0.0
    %2329 = vmatprep.subr.mxu0 0.0
    %2330 = vmatpush1.msra.mxu0 0.0
    %2331 = vmatprep.subr.mxu0 0.0
    %2332 = vmatpush1.msra.mxu0 0.0
    %2333 = vmatprep.subr.mxu0 0.0
    %2334 = vmatpush1.msra.mxu0 0.0
    %2335 = vmatprep.subr.mxu0 0.0
    %2336 = vmatpush1.msra.mxu0 0.0
    %2337 = vmatprep.subr.mxu0 0.0
    %2338 = vmatpush1.msra.mxu0 0.0
    %2339 = vmatprep.subr.mxu0 0.0
    %2340 = vmatpush1.msra.mxu0 0.0
    %2341 = vmatprep.subr.mxu0 0.0
    %2342 = vmatpush1.msra.mxu0 0.0
    %2343 = vmatprep.subr.mxu0 0.0
    %2344 = vmatpush1.msra.mxu0 0.0
    %2345 = vmatprep.subr.mxu0 0.0
    %2346 = vmatpush1.msra.mxu0 0.0
    %2347 = vmatprep.subr.mxu0 0.0
    %2348 = vmatpush1.msra.mxu0 0.0
    %2349 = vmatprep.subr.mxu0 0.0
    %2350 = vmatpush1.msra.mxu0 0.0
    %2351 = vmatprep.subr.mxu0 0.0
    %2352 = vmatpush1.msra.mxu0 0.0
    %2353 = vmatprep.subr.mxu0 0.0
    %2354 = vmatpush1.msra.mxu0 0.0
    %2355 = vmatprep.subr.mxu0 0.0
    %2356 = vmatpush1.msra.mxu0 0.0
    %2357 = vmatprep.subr.mxu0 0.0
    %2358 = vmatpush1.msra.mxu0 0.0
    %2359 = vmatprep.subr.mxu0 0.0
    %2360 = vmatpush1.msra.mxu0 0.0
    %2361 = vmatprep.subr.mxu0 0.0
    %2362 = vmatpush1.msra.mxu0 0.0
    %2363 = vmatprep.subr.mxu0 0.0
    %2364 = vmatpush1.msra.mxu0 0.0
    %2365 = vmatprep.subr.mxu0 0.0
    %2366 = vmatpush1.msra.mxu0 0.0
    %2367 = vmatprep.mubr.f32.mxu0 0.0
    %2368 = vmatmul.mubr.f32.gmra.mrb[0].mxu0 %v2301
    %v2369 = vpop.f32.mrb[0].mxu0
    %v2370 = vadd.f32 0.0, %v2369
    %v2371 = vpop.f32.mrb[0].mxu0
    %v2372 = vadd.f32 0.0, %v2371
    %2373 = vdwg.mxu0
    %v2374 = vld [vmem:[#allocation3 + $0x20] sm:$0xff]
    %v2375 = vld [vmem:[#allocation3 + $0x28] sm:$0xff]
    %v2376 = vld [vmem:[#allocation3 + $0x50] sm:$0xff]
    %v2377 = vld [vmem:[#allocation3 + $0x58] sm:$0xff]
    %v2378 = vadd.f32 %v2374, %v2370
    %v2379 = vxor.u32 %v2378, 2147483648
    %v2380 = vmul.f32 %v2379, 1.442695
    %v2381 = vpow.pop %v2380
    %v2382 = vadd.f32 %v2381, 1.0
    %v2383 = vrcp.pop %v2382
    %v2384 = vmul.f32 1.0, %v2383
    %v2385 = vadd.f32 %v2376, %v2370
    %v2386 = vadd.f32 %v2377, %v2372
    %v2387 = vxor.u32 %v2385, 2147483648
    %v2388 = vxor.u32 %v2386, 2147483648
    %v2389 = vmul.f32 %v2387, 1.442695
    %v2390 = vpow.pop %v2389
    %v2391 = vmul.f32 %v2388, 1.442695
    %v2392 = vpow.pop %v2391
    %v2393 = vadd.f32 %v2390, 1.0
    %v2394 = vadd.f32 %v2392, 1.0
    %v2395 = vrcp.pop %v2393
    %v2396 = vmul.f32 1.0, %v2395
    %v2397 = vrcp.pop %v2394
    %v2398 = vmul.f32 1.0, %v2397
    %v2399 = vadd.f32 %v2370, %v2096
    %2401 = vrot.lane.b32.xlu0 %v2399, 64
    %v2402 = vpop.permute.xlu0 %2401
    %v2404 = vmul.f32 %v2384, %v2402
    %2406 = vrot.lane.b32.xlu0 %v2404, 64
    %v2407 = vpop.permute.xlu0 %2406
    %v2409 = vadd.f32 %v2374, %v2407
    %v2410 = vtanh.pop %v2409
    %v2411 = vadd.f32 %v2372, %v2094
    %2413 = vrot.lane.b32.xlu0 %v2411, 64
    %v2414 = vpop.permute.xlu0 %2413
    %v2416 = vmul.f32 %v2396, %v2414
    %2418 = vrot.lane.b32.xlu0 %v2416, 64
    %v2419 = vpop.permute.xlu0 %2418
    %v2421 = vadd.f32 %v2377, %v2419
    %v2422 = vtanh.pop %v2421
    %v2423 = vsub.f32 1.0, %v2384
    %2425 = vrot.lane.b32.xlu0 %v2410, 96
    %v2426 = vpop.permute.xlu0 %2425
    %v2428 = vmul.f32 %v2423, %v2426
    %v2429 = vmul.f32 %v2384, %v2282
    %v2430 = vadd.f32 %v2428, %v2429
    %v2431 = vsub.f32 1.0, %v2398
    %2433 = vrot.lane.b32.xlu0 %v2422, 96
    %v2434 = vpop.permute.xlu0 %2433
    %v2436 = vmul.f32 %v2431, %v2434
    %v2437 = vmul.f32 %v2398, %v2290
    %v2438 = vadd.f32 %v2436, %v2437
    %2440 = vrot.lane.b32.xlu0 %v2430, 96
    %v2441 = vpop.permute.xlu0 %2440
    %2444 = vrot.lane.b32.xlu0 %v2438, 32
    %v2445 = vpop.permute.xlu0 %2444
    %v2447 = vsel %vm410, %v2441, %v2445
    %v2449 = vsel %vm370, %v2447, 0
    %2451 = vmatprep.subr.mxu0 %v1967
    %2452 = vmatpush1.msra.mxu0 %v1966
    %2453 = vmatprep.subr.mxu0 %v1969
    %2454 = vmatpush1.msra.mxu0 %v1968
    %2455 = vmatprep.subr.mxu0 %v1971
    %2456 = vmatpush1.msra.mxu0 %v1970
    %2457 = vmatprep.subr.mxu0 %v1973
    %2458 = vmatpush1.msra.mxu0 %v1972
    %2459 = vmatprep.subr.mxu0 %v1975
    %2460 = vmatpush1.msra.mxu0 %v1974
    %2461 = vmatprep.subr.mxu0 %v1977
    %2462 = vmatpush1.msra.mxu0 %v1976
    %2463 = vmatprep.subr.mxu0 %v1979
    %2464 = vmatpush1.msra.mxu0 %v1978
    %2465 = vmatprep.subr.mxu0 %v1981
    %2466 = vmatpush1.msra.mxu0 %v1980
    %2467 = vmatprep.subr.mxu0 0.0
    %2468 = vmatpush1.msra.mxu0 0.0
    %2469 = vmatprep.subr.mxu0 0.0
    %2470 = vmatpush1.msra.mxu0 0.0
    %2471 = vmatprep.subr.mxu0 0.0
    %2472 = vmatpush1.msra.mxu0 0.0
    %2473 = vmatprep.subr.mxu0 0.0
    %2474 = vmatpush1.msra.mxu0 0.0
    %2475 = vmatprep.subr.mxu0 0.0
    %2476 = vmatpush1.msra.mxu0 0.0
    %2477 = vmatprep.subr.mxu0 0.0
    %2478 = vmatpush1.msra.mxu0 0.0
    %2479 = vmatprep.subr.mxu0 0.0
    %2480 = vmatpush1.msra.mxu0 0.0
    %2481 = vmatprep.subr.mxu0 0.0
    %2482 = vmatpush1.msra.mxu0 0.0
    %2483 = vmatprep.subr.mxu0 0.0
    %2484 = vmatpush1.msra.mxu0 0.0
    %2485 = vmatprep.subr.mxu0 0.0
    %2486 = vmatpush1.msra.mxu0 0.0
    %2487 = vmatprep.subr.mxu0 0.0
    %2488 = vmatpush1.msra.mxu0 0.0
    %2489 = vmatprep.subr.mxu0 0.0
    %2490 = vmatpush1.msra.mxu0 0.0
    %2491 = vmatprep.subr.mxu0 0.0
    %2492 = vmatpush1.msra.mxu0 0.0
    %2493 = vmatprep.subr.mxu0 0.0
    %2494 = vmatpush1.msra.mxu0 0.0
    %2495 = vmatprep.subr.mxu0 0.0
    %2496 = vmatpush1.msra.mxu0 0.0
    %2497 = vmatprep.subr.mxu0 0.0
    %2498 = vmatpush1.msra.mxu0 0.0
    %2499 = vmatprep.subr.mxu0 0.0
    %2500 = vmatpush1.msra.mxu0 0.0
    %2501 = vmatprep.subr.mxu0 0.0
    %2502 = vmatpush1.msra.mxu0 0.0
    %2503 = vmatprep.subr.mxu0 0.0
    %2504 = vmatpush1.msra.mxu0 0.0
    %2505 = vmatprep.subr.mxu0 0.0
    %2506 = vmatpush1.msra.mxu0 0.0
    %2507 = vmatprep.subr.mxu0 0.0
    %2508 = vmatpush1.msra.mxu0 0.0
    %2509 = vmatprep.subr.mxu0 0.0
    %2510 = vmatpush1.msra.mxu0 0.0
    %2511 = vmatprep.subr.mxu0 0.0
    %2512 = vmatpush1.msra.mxu0 0.0
    %2513 = vmatprep.subr.mxu0 0.0
    %2514 = vmatpush1.msra.mxu0 0.0
    %2515 = vmatprep.mubr.f32.mxu0 0.0
    %2516 = vmatmul.mubr.f32.gmra.mrb[0].mxu0 %v2449
    %v2517 = vpop.f32.mrb[0].mxu0
    %v2518 = vadd.f32 0.0, %v2517
    %v2519 = vpop.f32.mrb[0].mxu0
    %v2520 = vadd.f32 0.0, %v2519
    %2521 = vdwg.mxu0
    %v2522 = vld [vmem:[#allocation3 + $0x30] sm:$0xff]
    %v2523 = vld [vmem:[#allocation3 + $0x38] sm:$0xff]
    %v2524 = vld [vmem:[#allocation3 + $0x40] sm:$0xff]
    %v2525 = vld [vmem:[#allocation3 + $0x48] sm:$0xff]
    %v2526 = vadd.f32 %v2522, %v2518
    %v2527 = vxor.u32 %v2526, 2147483648
    %v2528 = vmul.f32 %v2527, 1.442695
    %v2529 = vpow.pop %v2528
    %v2530 = vadd.f32 %v2529, 1.0
    %v2531 = vrcp.pop %v2530
    %v2532 = vmul.f32 1.0, %v2531
    %v2533 = vadd.f32 %v2524, %v2518
    %v2534 = vadd.f32 %v2525, %v2520
    %v2535 = vxor.u32 %v2533, 2147483648
    %v2536 = vxor.u32 %v2534, 2147483648
    %v2537 = vmul.f32 %v2535, 1.442695
    %v2538 = vpow.pop %v2537
    %v2539 = vmul.f32 %v2536, 1.442695
    %v2540 = vpow.pop %v2539
    %v2541 = vadd.f32 %v2538, 1.0
    %v2542 = vadd.f32 %v2540, 1.0
    %v2543 = vrcp.pop %v2541
    %v2544 = vmul.f32 1.0, %v2543
    %v2545 = vrcp.pop %v2542
    %v2546 = vmul.f32 1.0, %v2545
    %v2547 = vadd.f32 %v2518, %v2096
    %2549 = vrot.lane.b32.xlu0 %v2547, 64
    %v2550 = vpop.permute.xlu0 %2549
    %v2552 = vmul.f32 %v2532, %v2550
    %2554 = vrot.lane.b32.xlu0 %v2552, 64
    %v2555 = vpop.permute.xlu0 %2554
    %v2557 = vadd.f32 %v2522, %v2555
    %v2558 = vtanh.pop %v2557
    %v2559 = vadd.f32 %v2520, %v2094
    %2561 = vrot.lane.b32.xlu0 %v2559, 64
    %v2562 = vpop.permute.xlu0 %2561
    %v2564 = vmul.f32 %v2544, %v2562
    %2566 = vrot.lane.b32.xlu0 %v2564, 64
    %v2567 = vpop.permute.xlu0 %2566
    %v2569 = vadd.f32 %v2525, %v2567
    %v2570 = vtanh.pop %v2569
    %v2571 = vsub.f32 1.0, %v2532
    %2573 = vrot.lane.b32.xlu0 %v2558, 96
    %v2574 = vpop.permute.xlu0 %2573
    %v2576 = vmul.f32 %v2571, %v2574
    %v2577 = vmul.f32 %v2532, %v2430
    %v2578 = vadd.f32 %v2576, %v2577
    %v2579 = vsub.f32 1.0, %v2546
    %2581 = vrot.lane.b32.xlu0 %v2570, 96
    %v2582 = vpop.permute.xlu0 %2581
    %v2584 = vmul.f32 %v2579, %v2582
    %v2585 = vmul.f32 %v2546, %v2438
    %v2586 = vadd.f32 %v2584, %v2585
    %2588 = vrot.lane.b32.xlu0 %v2578, 96
    %v2589 = vpop.permute.xlu0 %2588
    %2592 = vrot.lane.b32.xlu0 %v2586, 32
    %v2593 = vpop.permute.xlu0 %2592
    %v2595 = vsel %vm410, %v2589, %v2593
    %v2597 = vsel %vm370, %v2595, 0
    %2599 = vmatprep.subr.mxu0 %v1967
    %2600 = vmatpush1.msra.mxu0 %v1966
    %2601 = vmatprep.subr.mxu0 %v1969
    %2602 = vmatpush1.msra.mxu0 %v1968
    %2603 = vmatprep.subr.mxu0 %v1971
    %2604 = vmatpush1.msra.mxu0 %v1970
    %2605 = vmatprep.subr.mxu0 %v1973
    %2606 = vmatpush1.msra.mxu0 %v1972
    %2607 = vmatprep.subr.mxu0 %v1975
    %2608 = vmatpush1.msra.mxu0 %v1974
    %2609 = vmatprep.subr.mxu0 %v1977
    %2610 = vmatpush1.msra.mxu0 %v1976
    %2611 = vmatprep.subr.mxu0 %v1979
    %2612 = vmatpush1.msra.mxu0 %v1978
    %2613 = vmatprep.subr.mxu0 %v1981
    %2614 = vmatpush1.msra.mxu0 %v1980
    %2615 = vmatprep.subr.mxu0 0.0
    %2616 = vmatpush1.msra.mxu0 0.0
    %2617 = vmatprep.subr.mxu0 0.0
    %2618 = vmatpush1.msra.mxu0 0.0
    %2619 = vmatprep.subr.mxu0 0.0
    %2620 = vmatpush1.msra.mxu0 0.0
    %2621 = vmatprep.subr.mxu0 0.0
    %2622 = vmatpush1.msra.mxu0 0.0
    %2623 = vmatprep.subr.mxu0 0.0
    %2624 = vmatpush1.msra.mxu0 0.0
    %2625 = vmatprep.subr.mxu0 0.0
    %2626 = vmatpush1.msra.mxu0 0.0
    %2627 = vmatprep.subr.mxu0 0.0
    %2628 = vmatpush1.msra.mxu0 0.0
    %2629 = vmatprep.subr.mxu0 0.0
    %2630 = vmatpush1.msra.mxu0 0.0
    %2631 = vmatprep.subr.mxu0 0.0
    %2632 = vmatpush1.msra.mxu0 0.0
    %2633 = vmatprep.subr.mxu0 0.0
    %2634 = vmatpush1.msra.mxu0 0.0
    %2635 = vmatprep.subr.mxu0 0.0
    %2636 = vmatpush1.msra.mxu0 0.0
    %2637 = vmatprep.subr.mxu0 0.0
    %2638 = vmatpush1.msra.mxu0 0.0
    %2639 = vmatprep.subr.mxu0 0.0
    %2640 = vmatpush1.msra.mxu0 0.0
    %2641 = vmatprep.subr.mxu0 0.0
    %2642 = vmatpush1.msra.mxu0 0.0
    %2643 = vmatprep.subr.mxu0 0.0
    %2644 = vmatpush1.msra.mxu0 0.0
    %2645 = vmatprep.subr.mxu0 0.0
    %2646 = vmatpush1.msra.mxu0 0.0
    %2647 = vmatprep.subr.mxu0 0.0
    %2648 = vmatpush1.msra.mxu0 0.0
    %2649 = vmatprep.subr.mxu0 0.0
    %2650 = vmatpush1.msra.mxu0 0.0
    %2651 = vmatprep.subr.mxu0 0.0
    %2652 = vmatpush1.msra.mxu0 0.0
    %2653 = vmatprep.subr.mxu0 0.0
    %2654 = vmatpush1.msra.mxu0 0.0
    %2655 = vmatprep.subr.mxu0 0.0
    %2656 = vmatpush1.msra.mxu0 0.0
    %2657 = vmatprep.subr.mxu0 0.0
    %2658 = vmatpush1.msra.mxu0 0.0
    %2659 = vmatprep.subr.mxu0 0.0
    %2660 = vmatpush1.msra.mxu0 0.0
    %2661 = vmatprep.subr.mxu0 0.0
    %2662 = vmatpush1.msra.mxu0 0.0
    %2663 = vmatprep.mubr.f32.mxu0 0.0
    %2664 = vmatmul.mubr.f32.gmra.mrb[0].mxu0 %v2597
    %v2665 = vpop.f32.mrb[0].mxu0
    %v2666 = vadd.f32 0.0, %v2665
    %v2667 = vpop.f32.mrb[0].mxu0
    %v2668 = vadd.f32 0.0, %v2667
    %2669 = vdwg.mxu0
    %v2670 = vadd.f32 %v2524, %v2666
    %v2671 = vxor.u32 %v2670, 2147483648
    %v2672 = vmul.f32 %v2671, 1.442695
    %v2673 = vpow.pop %v2672
    %v2674 = vadd.f32 %v2673, 1.0
    %v2675 = vrcp.pop %v2674
    %v2676 = vmul.f32 1.0, %v2675
    %v2677 = vadd.f32 %v2522, %v2666
    %v2678 = vadd.f32 %v2523, %v2668
    %v2679 = vxor.u32 %v2677, 2147483648
    %v2680 = vxor.u32 %v2678, 2147483648
    %v2681 = vmul.f32 %v2679, 1.442695
    %v2682 = vpow.pop %v2681
    %v2683 = vmul.f32 %v2680, 1.442695
    %v2684 = vpow.pop %v2683
    %v2685 = vadd.f32 %v2682, 1.0
    %v2686 = vadd.f32 %v2684, 1.0
    %v2687 = vrcp.pop %v2685
    %v2688 = vmul.f32 1.0, %v2687
    %v2689 = vrcp.pop %v2686
    %v2690 = vmul.f32 1.0, %v2689
    %v2691 = vadd.f32 %v2666, %v2096
    %2693 = vrot.lane.b32.xlu0 %v2691, 64
    %v2694 = vpop.permute.xlu0 %2693
    %v2696 = vmul.f32 %v2676, %v2694
    %2698 = vrot.lane.b32.xlu0 %v2696, 64
    %v2699 = vpop.permute.xlu0 %2698
    %v2701 = vadd.f32 %v2524, %v2699
    %v2702 = vtanh.pop %v2701
    %v2703 = vadd.f32 %v2668, %v2094
    %2705 = vrot.lane.b32.xlu0 %v2703, 64
    %v2706 = vpop.permute.xlu0 %2705
    %v2708 = vmul.f32 %v2688, %v2706
    %2710 = vrot.lane.b32.xlu0 %v2708, 64
    %v2711 = vpop.permute.xlu0 %2710
    %v2713 = vadd.f32 %v2523, %v2711
    %v2714 = vtanh.pop %v2713
    %v2715 = vsub.f32 1.0, %v2676
    %2717 = vrot.lane.b32.xlu0 %v2702, 96
    %v2718 = vpop.permute.xlu0 %2717
    %v2720 = vmul.f32 %v2715, %v2718
    %v2721 = vmul.f32 %v2676, %v2578
    %v2722 = vadd.f32 %v2720, %v2721
    %v2723 = vsub.f32 1.0, %v2690
    %2725 = vrot.lane.b32.xlu0 %v2714, 96
    %v2726 = vpop.permute.xlu0 %2725
    %v2728 = vmul.f32 %v2723, %v2726
    %v2729 = vmul.f32 %v2690, %v2586
    %v2730 = vadd.f32 %v2728, %v2729
    %2732 = vrot.lane.b32.xlu0 %v2722, 96
    %v2733 = vpop.permute.xlu0 %2732
    %2736 = vrot.lane.b32.xlu0 %v2730, 32
    %v2737 = vpop.permute.xlu0 %2736
    %v2739 = vsel %vm410, %v2733, %v2737
    %v2741 = vsel %vm370, %v2739, 0
    %2743 = vmatprep.subr.mxu0 %v1967
    %2744 = vmatpush1.msra.mxu0 %v1966
    %2745 = vmatprep.subr.mxu0 %v1969
    %2746 = vmatpush1.msra.mxu0 %v1968
    %2747 = vmatprep.subr.mxu0 %v1971
    %2748 = vmatpush1.msra.mxu0 %v1970
    %2749 = vmatprep.subr.mxu0 %v1973
    %2750 = vmatpush1.msra.mxu0 %v1972
    %2751 = vmatprep.subr.mxu0 %v1975
    %2752 = vmatpush1.msra.mxu0 %v1974
    %2753 = vmatprep.subr.mxu0 %v1977
    %2754 = vmatpush1.msra.mxu0 %v1976
    %2755 = vmatprep.subr.mxu0 %v1979
    %2756 = vmatpush1.msra.mxu0 %v1978
    %2757 = vmatprep.subr.mxu0 %v1981
    %2758 = vmatpush1.msra.mxu0 %v1980
    %2759 = vmatprep.subr.mxu0 0.0
    %2760 = vmatpush1.msra.mxu0 0.0
    %2761 = vmatprep.subr.mxu0 0.0
    %2762 = vmatpush1.msra.mxu0 0.0
    %2763 = vmatprep.subr.mxu0 0.0
    %2764 = vmatpush1.msra.mxu0 0.0
    %2765 = vmatprep.subr.mxu0 0.0
    %2766 = vmatpush1.msra.mxu0 0.0
    %2767 = vmatprep.subr.mxu0 0.0
    %2768 = vmatpush1.msra.mxu0 0.0
    %2769 = vmatprep.subr.mxu0 0.0
    %2770 = vmatpush1.msra.mxu0 0.0
    %2771 = vmatprep.subr.mxu0 0.0
    %2772 = vmatpush1.msra.mxu0 0.0
    %2773 = vmatprep.subr.mxu0 0.0
    %2774 = vmatpush1.msra.mxu0 0.0
    %2775 = vmatprep.subr.mxu0 0.0
    %2776 = vmatpush1.msra.mxu0 0.0
    %2777 = vmatprep.subr.mxu0 0.0
    %2778 = vmatpush1.msra.mxu0 0.0
    %2779 = vmatprep.subr.mxu0 0.0
    %2780 = vmatpush1.msra.mxu0 0.0
    %2781 = vmatprep.subr.mxu0 0.0
    %2782 = vmatpush1.msra.mxu0 0.0
    %2783 = vmatprep.subr.mxu0 0.0
    %2784 = vmatpush1.msra.mxu0 0.0
    %2785 = vmatprep.subr.mxu0 0.0
    %2786 = vmatpush1.msra.mxu0 0.0
    %2787 = vmatprep.subr.mxu0 0.0
    %2788 = vmatpush1.msra.mxu0 0.0
    %2789 = vmatprep.subr.mxu0 0.0
    %2790 = vmatpush1.msra.mxu0 0.0
    %2791 = vmatprep.subr.mxu0 0.0
    %2792 = vmatpush1.msra.mxu0 0.0
    %2793 = vmatprep.subr.mxu0 0.0
    %2794 = vmatpush1.msra.mxu0 0.0
    %2795 = vmatprep.subr.mxu0 0.0
    %2796 = vmatpush1.msra.mxu0 0.0
    %2797 = vmatprep.subr.mxu0 0.0
    %2798 = vmatpush1.msra.mxu0 0.0
    %2799 = vmatprep.subr.mxu0 0.0
    %2800 = vmatpush1.msra.mxu0 0.0
    %2801 = vmatprep.subr.mxu0 0.0
    %2802 = vmatpush1.msra.mxu0 0.0
    %2803 = vmatprep.subr.mxu0 0.0
    %2804 = vmatpush1.msra.mxu0 0.0
    %2805 = vmatprep.subr.mxu0 0.0
    %2806 = vmatpush1.msra.mxu0 0.0
    %2807 = vmatprep.mubr.f32.mxu0 0.0
    %2808 = vmatmul.mubr.f32.gmra.mrb[0].mxu0 %v2741
    %v2809 = vpop.f32.mrb[0].mxu0
    %v2810 = vadd.f32 0.0, %v2809
    %v2811 = vpop.f32.mrb[0].mxu0
    %v2812 = vadd.f32 0.0, %v2811
    %2813 = vdwg.mxu0
    %v2814 = vadd.f32 %v2376, %v2810
    %v2815 = vxor.u32 %v2814, 2147483648
    %v2816 = vmul.f32 %v2815, 1.442695
    %v2817 = vpow.pop %v2816
    %v2818 = vadd.f32 %v2817, 1.0
    %v2819 = vrcp.pop %v2818
    %v2820 = vmul.f32 1.0, %v2819
    %v2821 = vadd.f32 %v2374, %v2810
    %v2822 = vadd.f32 %v2375, %v2812
    %v2823 = vxor.u32 %v2821, 2147483648
    %v2824 = vxor.u32 %v2822, 2147483648
    %v2825 = vmul.f32 %v2823, 1.442695
    %v2826 = vpow.pop %v2825
    %v2827 = vmul.f32 %v2824, 1.442695
    %v2828 = vpow.pop %v2827
    %v2829 = vadd.f32 %v2826, 1.0
    %v2830 = vadd.f32 %v2828, 1.0
    %v2831 = vrcp.pop %v2829
    %v2832 = vmul.f32 1.0, %v2831
    %v2833 = vrcp.pop %v2830
    %v2834 = vmul.f32 1.0, %v2833
    %v2835 = vadd.f32 %v2810, %v2096
    %2837 = vrot.lane.b32.xlu0 %v2835, 64
    %v2838 = vpop.permute.xlu0 %2837
    %v2840 = vmul.f32 %v2820, %v2838
    %2842 = vrot.lane.b32.xlu0 %v2840, 64
    %v2843 = vpop.permute.xlu0 %2842
    %v2845 = vadd.f32 %v2376, %v2843
    %v2846 = vtanh.pop %v2845
    %v2847 = vadd.f32 %v2812, %v2094
    %2849 = vrot.lane.b32.xlu0 %v2847, 64
    %v2850 = vpop.permute.xlu0 %2849
    %v2852 = vmul.f32 %v2832, %v2850
    %2854 = vrot.lane.b32.xlu0 %v2852, 64
    %v2855 = vpop.permute.xlu0 %2854
    %v2857 = vadd.f32 %v2375, %v2855
    %v2858 = vtanh.pop %v2857
    %v2859 = vsub.f32 1.0, %v2820
    %2861 = vrot.lane.b32.xlu0 %v2846, 96
    %v2862 = vpop.permute.xlu0 %2861
    %v2864 = vmul.f32 %v2859, %v2862
    %v2865 = vmul.f32 %v2820, %v2722
    %v2866 = vadd.f32 %v2864, %v2865
    %v2867 = vsub.f32 1.0, %v2834
    %2869 = vrot.lane.b32.xlu0 %v2858, 96
    %v2870 = vpop.permute.xlu0 %2869
    %v2872 = vmul.f32 %v2867, %v2870
    %v2873 = vmul.f32 %v2834, %v2730
    %v2874 = vadd.f32 %v2872, %v2873
    %2876 = vrot.lane.b32.xlu0 %v2866, 96
    %v2877 = vpop.permute.xlu0 %2876
    %2880 = vrot.lane.b32.xlu0 %v2874, 32
    %v2881 = vpop.permute.xlu0 %2880
    %v2883 = vsel %vm410, %v2877, %v2881
    %v2885 = vsel %vm370, %v2883, 0
    %2887 = vmatprep.subr.mxu0 %v1967
    %2888 = vmatpush1.msra.mxu0 %v1966
    %2889 = vmatprep.subr.mxu0 %v1969
    %2890 = vmatpush1.msra.mxu0 %v1968
    %2891 = vmatprep.subr.mxu0 %v1971
    %2892 = vmatpush1.msra.mxu0 %v1970
    %2893 = vmatprep.subr.mxu0 %v1973
    %2894 = vmatpush1.msra.mxu0 %v1972
    %2895 = vmatprep.subr.mxu0 %v1975
    %2896 = vmatpush1.msra.mxu0 %v1974
    %2897 = vmatprep.subr.mxu0 %v1977
    %2898 = vmatpush1.msra.mxu0 %v1976
    %2899 = vmatprep.subr.mxu0 %v1979
    %2900 = vmatpush1.msra.mxu0 %v1978
    %2901 = vmatprep.subr.mxu0 %v1981
    %2902 = vmatpush1.msra.mxu0 %v1980
    %2903 = vmatprep.subr.mxu0 0.0
    %2904 = vmatpush1.msra.mxu0 0.0
    %2905 = vmatprep.subr.mxu0 0.0
    %2906 = vmatpush1.msra.mxu0 0.0
    %2907 = vmatprep.subr.mxu0 0.0
    %2908 = vmatpush1.msra.mxu0 0.0
    %2909 = vmatprep.subr.mxu0 0.0
    %2910 = vmatpush1.msra.mxu0 0.0
    %2911 = vmatprep.subr.mxu0 0.0
    %2912 = vmatpush1.msra.mxu0 0.0
    %2913 = vmatprep.subr.mxu0 0.0
    %2914 = vmatpush1.msra.mxu0 0.0
    %2915 = vmatprep.subr.mxu0 0.0
    %2916 = vmatpush1.msra.mxu0 0.0
    %2917 = vmatprep.subr.mxu0 0.0
    %2918 = vmatpush1.msra.mxu0 0.0
    %2919 = vmatprep.subr.mxu0 0.0
    %2920 = vmatpush1.msra.mxu0 0.0
    %2921 = vmatprep.subr.mxu0 0.0
    %2922 = vmatpush1.msra.mxu0 0.0
    %2923 = vmatprep.subr.mxu0 0.0
    %2924 = vmatpush1.msra.mxu0 0.0
    %2925 = vmatprep.subr.mxu0 0.0
    %2926 = vmatpush1.msra.mxu0 0.0
    %2927 = vmatprep.subr.mxu0 0.0
    %2928 = vmatpush1.msra.mxu0 0.0
    %2929 = vmatprep.subr.mxu0 0.0
    %2930 = vmatpush1.msra.mxu0 0.0
    %2931 = vmatprep.subr.mxu0 0.0
    %2932 = vmatpush1.msra.mxu0 0.0
    %2933 = vmatprep.subr.mxu0 0.0
    %2934 = vmatpush1.msra.mxu0 0.0
    %2935 = vmatprep.subr.mxu0 0.0
    %2936 = vmatpush1.msra.mxu0 0.0
    %2937 = vmatprep.subr.mxu0 0.0
    %2938 = vmatpush1.msra.mxu0 0.0
    %2939 = vmatprep.subr.mxu0 0.0
    %2940 = vmatpush1.msra.mxu0 0.0
    %2941 = vmatprep.subr.mxu0 0.0
    %2942 = vmatpush1.msra.mxu0 0.0
    %2943 = vmatprep.subr.mxu0 0.0
    %2944 = vmatpush1.msra.mxu0 0.0
    %2945 = vmatprep.subr.mxu0 0.0
    %2946 = vmatpush1.msra.mxu0 0.0
    %2947 = vmatprep.subr.mxu0 0.0
    %2948 = vmatpush1.msra.mxu0 0.0
    %2949 = vmatprep.subr.mxu0 0.0
    %2950 = vmatpush1.msra.mxu0 0.0
    %2951 = vmatprep.mubr.f32.mxu0 0.0
    %2952 = vmatmul.mubr.f32.gmra.mrb[0].mxu0 %v2885
    %v2953 = vpop.f32.mrb[0].mxu0
    %v2954 = vadd.f32 0.0, %v2953
    %v2955 = vpop.f32.mrb[0].mxu0
    %v2956 = vadd.f32 0.0, %v2955
    %2957 = vdwg.mxu0
    %v2958 = vadd.f32 %v2228, %v2954
    %v2959 = vxor.u32 %v2958, 2147483648
    %v2960 = vmul.f32 %v2959, 1.442695
    %v2961 = vpow.pop %v2960
    %v2962 = vadd.f32 %v2961, 1.0
    %v2963 = vrcp.pop %v2962
    %v2964 = vmul.f32 1.0, %v2963
    %v2965 = vadd.f32 %v2226, %v2954
    %v2966 = vadd.f32 %v2227, %v2956
    %v2967 = vxor.u32 %v2965, 2147483648
    %v2968 = vxor.u32 %v2966, 2147483648
    %v2969 = vmul.f32 %v2967, 1.442695
    %v2970 = vpow.pop %v2969
    %v2971 = vmul.f32 %v2968, 1.442695
    %v2972 = vpow.pop %v2971
    %v2973 = vadd.f32 %v2970, 1.0
    %v2974 = vadd.f32 %v2972, 1.0
    %v2975 = vrcp.pop %v2973
    %v2976 = vmul.f32 1.0, %v2975
    %v2977 = vrcp.pop %v2974
    %v2978 = vmul.f32 1.0, %v2977
    %v2979 = vadd.f32 %v2954, %v2096
    %2981 = vrot.lane.b32.xlu0 %v2979, 64
    %v2982 = vpop.permute.xlu0 %2981
    %v2984 = vmul.f32 %v2964, %v2982
    %2986 = vrot.lane.b32.xlu0 %v2984, 64
    %v2987 = vpop.permute.xlu0 %2986
    %v2989 = vadd.f32 %v2228, %v2987
    %v2990 = vtanh.pop %v2989
    %v2991 = vadd.f32 %v2956, %v2094
    %2993 = vrot.lane.b32.xlu0 %v2991, 64
    %v2994 = vpop.permute.xlu0 %2993
    %v2996 = vmul.f32 %v2976, %v2994
    %2998 = vrot.lane.b32.xlu0 %v2996, 64
    %v2999 = vpop.permute.xlu0 %2998
    %v3001 = vadd.f32 %v2227, %v2999
    %v3002 = vtanh.pop %v3001
    %v3003 = vsub.f32 1.0, %v2964
    %3005 = vrot.lane.b32.xlu0 %v2990, 96
    %v3006 = vpop.permute.xlu0 %3005
    %v3008 = vmul.f32 %v3003, %v3006
    %v3009 = vmul.f32 %v2964, %v2866
    %v3010 = vadd.f32 %v3008, %v3009
    %v3011 = vsub.f32 1.0, %v2978
    %3013 = vrot.lane.b32.xlu0 %v3002, 96
    %v3014 = vpop.permute.xlu0 %3013
    %v3016 = vmul.f32 %v3011, %v3014
    %v3017 = vmul.f32 %v2978, %v2874
    %v3018 = vadd.f32 %v3016, %v3017
    %3020 = vrot.lane.b32.xlu0 %v3010, 96
    %v3021 = vpop.permute.xlu0 %3020
    %3024 = vrot.lane.b32.xlu0 %v3018, 32
    %v3025 = vpop.permute.xlu0 %3024
    %v3027 = vsel %vm410, %v3021, %v3025
    %v3029 = vsel %vm370, %v3027, 0
    %3031 = vmatprep.subr.mxu0 %v1967
    %3032 = vmatpush1.msra.mxu0 %v1966
    %3033 = vmatprep.subr.mxu0 %v1969
    %3034 = vmatpush1.msra.mxu0 %v1968
    %3035 = vmatprep.subr.mxu0 %v1971
    %3036 = vmatpush1.msra.mxu0 %v1970
    %3037 = vmatprep.subr.mxu0 %v1973
    %3038 = vmatpush1.msra.mxu0 %v1972
    %3039 = vmatprep.subr.mxu0 %v1975
    %3040 = vmatpush1.msra.mxu0 %v1974
    %3041 = vmatprep.subr.mxu0 %v1977
    %3042 = vmatpush1.msra.mxu0 %v1976
    %3043 = vmatprep.subr.mxu0 %v1979
    %3044 = vmatpush1.msra.mxu0 %v1978
    %3045 = vmatprep.subr.mxu0 %v1981
    %3046 = vmatpush1.msra.mxu0 %v1980
    %3047 = vmatprep.subr.mxu0 0.0
    %3048 = vmatpush1.msra.mxu0 0.0
    %3049 = vmatprep.subr.mxu0 0.0
    %3050 = vmatpush1.msra.mxu0 0.0
    %3051 = vmatprep.subr.mxu0 0.0
    %3052 = vmatpush1.msra.mxu0 0.0
    %3053 = vmatprep.subr.mxu0 0.0
    %3054 = vmatpush1.msra.mxu0 0.0
    %3055 = vmatprep.subr.mxu0 0.0
    %3056 = vmatpush1.msra.mxu0 0.0
    %3057 = vmatprep.subr.mxu0 0.0
    %3058 = vmatpush1.msra.mxu0 0.0
    %3059 = vmatprep.subr.mxu0 0.0
    %3060 = vmatpush1.msra.mxu0 0.0
    %3061 = vmatprep.subr.mxu0 0.0
    %3062 = vmatpush1.msra.mxu0 0.0
    %3063 = vmatprep.subr.mxu0 0.0
    %3064 = vmatpush1.msra.mxu0 0.0
    %3065 = vmatprep.subr.mxu0 0.0
    %3066 = vmatpush1.msra.mxu0 0.0
    %3067 = vmatprep.subr.mxu0 0.0
    %3068 = vmatpush1.msra.mxu0 0.0
    %3069 = vmatprep.subr.mxu0 0.0
    %3070 = vmatpush1.msra.mxu0 0.0
    %3071 = vmatprep.subr.mxu0 0.0
    %3072 = vmatpush1.msra.mxu0 0.0
    %3073 = vmatprep.subr.mxu0 0.0
    %3074 = vmatpush1.msra.mxu0 0.0
    %3075 = vmatprep.subr.mxu0 0.0
    %3076 = vmatpush1.msra.mxu0 0.0
    %3077 = vmatprep.subr.mxu0 0.0
    %3078 = vmatpush1.msra.mxu0 0.0
    %3079 = vmatprep.subr.mxu0 0.0
    %3080 = vmatpush1.msra.mxu0 0.0
    %3081 = vmatprep.subr.mxu0 0.0
    %3082 = vmatpush1.msra.mxu0 0.0
    %3083 = vmatprep.subr.mxu0 0.0
    %3084 = vmatpush1.msra.mxu0 0.0
    %3085 = vmatprep.subr.mxu0 0.0
    %3086 = vmatpush1.msra.mxu0 0.0
    %3087 = vmatprep.subr.mxu0 0.0
    %3088 = vmatpush1.msra.mxu0 0.0
    %3089 = vmatprep.subr.mxu0 0.0
    %3090 = vmatpush1.msra.mxu0 0.0
    %3091 = vmatprep.subr.mxu0 0.0
    %3092 = vmatpush1.msra.mxu0 0.0
    %3093 = vmatprep.subr.mxu0 0.0
    %3094 = vmatpush1.msra.mxu0 0.0
    %3095 = vmatprep.mubr.f32.mxu0 0.0
    %3096 = vmatmul.mubr.f32.gmra.mrb[0].mxu0 %v3029
    %v3097 = vpop.f32.mrb[0].mxu0
    %v3098 = vadd.f32 0.0, %v3097
    %v3099 = vpop.f32.mrb[0].mxu0
    %v3100 = vadd.f32 0.0, %v3099
    %3101 = vdwg.mxu0
    %v3102 = vadd.f32 %v2067, %v3098
    %v3103 = vxor.u32 %v3102, 2147483648
    %v3104 = vmul.f32 %v3103, 1.442695
    %v3105 = vpow.pop %v3104
    %v3106 = vadd.f32 %v3105, 1.0
    %v3107 = vrcp.pop %v3106
    %v3108 = vmul.f32 1.0, %v3107
    %v3109 = vadd.f32 %v2065, %v3098
    %v3110 = vadd.f32 %v2066, %v3100
    %v3111 = vxor.u32 %v3109, 2147483648
    %v3112 = vxor.u32 %v3110, 2147483648
    %v3113 = vmul.f32 %v3111, 1.442695
    %v3114 = vpow.pop %v3113
    %v3115 = vmul.f32 %v3112, 1.442695
    %v3116 = vpow.pop %v3115
    %v3117 = vadd.f32 %v3114, 1.0
    %v3118 = vadd.f32 %v3116, 1.0
    %v3119 = vrcp.pop %v3117
    %v3120 = vmul.f32 1.0, %v3119
    %v3121 = vrcp.pop %v3118
    %v3122 = vmul.f32 1.0, %v3121
    %v3123 = vadd.f32 %v3098, %v2096
    %3125 = vrot.lane.b32.xlu0 %v3123, 64
    %v3126 = vpop.permute.xlu0 %3125
    %v3128 = vmul.f32 %v3108, %v3126
    %3130 = vrot.lane.b32.xlu0 %v3128, 64
    %v3131 = vpop.permute.xlu0 %3130
    %v3133 = vadd.f32 %v2067, %v3131
    %v3134 = vtanh.pop %v3133
    %v3135 = vadd.f32 %v3100, %v2094
    %3137 = vrot.lane.b32.xlu0 %v3135, 64
    %v3138 = vpop.permute.xlu0 %3137
    %v3140 = vmul.f32 %v3120, %v3138
    %3142 = vrot.lane.b32.xlu0 %v3140, 64
    %v3143 = vpop.permute.xlu0 %3142
    %v3145 = vadd.f32 %v2066, %v3143
    %v3146 = vtanh.pop %v3145
    %v3147 = vsub.f32 1.0, %v3108
    %3149 = vrot.lane.b32.xlu0 %v3134, 96
    %v3150 = vpop.permute.xlu0 %3149
    %v3152 = vmul.f32 %v3147, %v3150
    %v3153 = vmul.f32 %v3108, %v3010
    %v3154 = vadd.f32 %v3152, %v3153
    %v3155 = vsub.f32 1.0, %v3122
    %3157 = vrot.lane.b32.xlu0 %v3146, 96
    %v3158 = vpop.permute.xlu0 %3157
    %v3160 = vmul.f32 %v3155, %v3158
    %v3161 = vmul.f32 %v3122, %v3018
    %v3162 = vadd.f32 %v3160, %v3161
    %3164 = vrot.lane.b32.xlu0 %v3154, 96
    %v3165 = vpop.permute.xlu0 %3164
    %s3167 = scalar_lea.vmem [#allocation18], 16
    %3168 = vst.msk [vmem:[%s3167] sm:$0xff] %vm410, %v3165
    %s3169 = scalar_lea.vmem [#allocation18], 24
    %3170 = vst.msk [vmem:[%s3169] sm:$0xff] %vm410, %v3162
    %v3171 = vld [vmem:[%s11] sm:$0x1]
    %v3173 = vlaneseq
    %v3174 = vshrl.u32 %v3173, 7
    %v3175 = vsub.s32 0, %v3174
    %v3176 = vrot.slane %v3171, %v3175
    %3177 = vrot.lane.b32.xlu0 %v3176, 32
    %v3178 = vpop.permute.xlu0 %3177
    %v3180 = vmul.f32 %v3154, %v3178
    %3181 = vrot.lane.b32.xlu0 %v3176, 96
    %v3182 = vpop.permute.xlu0 %3181
    %v3184 = vmul.f32 %v2142, %v3182
    %3186 = vrot.lane.b32.xlu0 %v3184, 32
    %v3187 = vpop.permute.xlu0 %3186
    %v3189 = vadd.f32 %v3180, %v3187
    %3191 = vrot.lane.b32.xlu0 %v3189, 96
    %v3192 = vpop.permute.xlu0 %3191
    %v3194 = vsel %vm410, %v3192, 0.0
    %3195 = vadd.xlane.f32.xlu0 %v3194
    %v3196 = vpop.xlane.xlu0 %3195
    %v3197 = vld [vmem:[#allocation6] sm:$0x1]
    %v3199 = vlaneseq
    %v3200 = vshrl.u32 %v3199, 7
    %v3201 = vsub.s32 0, %v3200
    %v3202 = vrot.slane %v3197, %v3201
    %v3204 = vadd.f32 %v3196, %v3202
    %v3205 = vxor.u32 %v3204, 2147483648
    %v3206 = vmul.f32 %v3205, 1.442695
    %v3207 = vpow.pop %v3206
    %v3208 = vadd.f32 %v3207, 1.0
    %v3209 = vrcp.pop %v3208
    %v3210 = vmul.f32 1.0, %v3209
    %vm3211 = vcmask 7168
    %3212 = vst.msk [vmem:[%s13] sm:$0xff] %vm3211, %v3210
    // Predicated region
    $region78: #{tpu_custom_call.1} parent=1 // pred_check
      _
    $region79: #{tpu_custom_call.1} parent=1 // pred_check_branch
      %3214 = sbr.rel (0) target = $region81
    $region80: #{tpu_custom_call.1} parent=1 // pred_region
      _
    $region81: #{tpu_custom_call.1} parent=1 // pred_fallthru
      _
    // Predicated region
    $region82: #{tpu_custom_call.1} parent=1 // pred_check
      _
    $region83: #{tpu_custom_call.1} parent=1 // pred_check_branch
      %3216 = sbr.rel (0) target = $region85
    $region84: #{tpu_custom_call.1} parent=1 // pred_region
      %s3218 = ssub.s32 512, 512
      %3219 = vsyncadd [#allocation9], %s3218
      %s3220 = sshll.u32 [#allocation18], 4
      %s3221 = int_to_ptr.vmem [resolvable:$true] %s3220
      %3226 = dma.vmem_to_hbm [thread:$0]  %s3221, 512, %s14, [#allocation9], 128, 128, 8
    $region85: #{tpu_custom_call.1} parent=1 // pred_fallthru
      _
    // Predicated region
    $region86: #{tpu_custom_call.1} parent=1 // pred_check
      _
    $region87: #{tpu_custom_call.1} parent=1 // pred_check_branch
      %3228 = sbr.rel (0) target = $region89
    $region88: #{tpu_custom_call.1} parent=1 // pred_region
      _
    $region89: #{tpu_custom_call.1} parent=1 // pred_fallthru
      _
    // Predicated region
    $region90: #{tpu_custom_call.1} parent=1 // pred_check
      _
    $region91: #{tpu_custom_call.1} parent=1 // pred_check_branch
      %3230 = sbr.rel (0) target = $region93
    $region92: #{tpu_custom_call.1} parent=1 // pred_region
      %3231 = dma.done [#allocation9], 512
    $region93: #{tpu_custom_call.1} parent=1 // pred_fallthru
      _
    %3232 = vsyncpa [#allocation8], 1
    %3233 = vsyncpa [#allocation13], 1
    %3234 = vsyncpa [#allocation16], 1
    %3235 = vsyncpa [#allocation9], 1
    %3236 = vsyncpa [#allocation10], 1

</llo_original>
